<compile_context>
chip_gen: v5e
topology: v5e:2x2
jax: 0.10.0
libtpu: 0.0.40
codegen_flags: <defaults>
</compile_context>

<pallas_src>
import functools

import jax
import jax.numpy as jnp
from jax import lax
from jax.experimental import pallas as pl
from jax.experimental.pallas import tpu as pltpu

EPS = 1e-5


def _banded_weights(w_oihw, W, pad_out):
    """One 3x3 conv (W axis) as 3 block-banded matrices, one per kernel row kh.

    Returns (3, (W+2)*Cin, Lout) with Lout = (W+2)*Cout (zero border output
    columns -> exact zero ring along W) if pad_out else W*Cout."""
    Cout, Cin = w_oihw.shape[0], w_oihw.shape[1]
    Wp = W + 2
    w_hwio = jnp.transpose(w_oihw, (2, 3, 1, 0)).astype(jnp.float32)  # (3,3,Ci,Co)
    kw = jnp.arange(3)[:, None, None]
    v = jnp.arange(Wp)[None, None, :]
    if pad_out:
        u = jnp.arange(Wp)[None, :, None]
        sel = ((u >= 1) & (u <= W) & (v == u - 1 + kw)).astype(jnp.float32)
        band = jnp.einsum('hkio,kuv->hviuo', w_hwio, sel)
        return band.reshape(3, Wp * Cin, Wp * Cout)
    u = jnp.arange(W)[None, :, None]
    sel = (v == u + kw).astype(jnp.float32)
    band = jnp.einsum('hkio,kuv->hviuo', w_hwio, sel)
    return band.reshape(3, Wp * Cin, W * Cout)


def _basic_block_kernel(xw_ref, xr_ref, band_ref, g1_ref, b1_ref, g2_ref,
                        b2_ref, o_ref, y_ref, *, N, H, W, C):
    """Grid step 0: conv1 + bn1 + relu -> y scratch.
       Grid step 1: conv2 + bn2 + residual + relu -> output."""
    M = N * H                      # rows (sublanes): (n, h)
    Lp = (W + 2) * C               # lanes: (padded width, channel)
    L = W * C
    cnt = float(N * H * W)         # elements per channel for batch statistics
    step = pl.program_id(0)

    # 0/1 H-shift selectors built from iotas (no DMA'd masks); applied as tiny
    # exact MXU matmuls -- replaces the padded-H scratch + unaligned slices.
    row = lax.broadcasted_iota(jnp.int32, (M, M), 0)
    col = lax.broadcasted_iota(jnp.int32, (M, M), 1)
    hmod = row % H
    s_up = ((col == row - 1) & (hmod != 0)).astype(jnp.float32)
    s_dn = ((col == row + 1) & (hmod != H - 1)).astype(jnp.float32)

    def conv3(src):
        # 3x3 conv: W taps folded into this step's banded weights (bf16 MXU),
        # H taps via the shift matmuls.  Accumulator starts from the centre tap
        # (no zeros init + add).
        acc = jnp.dot(src, band_ref[0, 1], preferred_element_type=jnp.float32)
        acc = acc + jnp.dot(
            s_up,
            jnp.dot(src, band_ref[0, 0], preferred_element_type=jnp.float32),
            preferred_element_type=jnp.float32)
        acc = acc + jnp.dot(
            s_dn,
            jnp.dot(src, band_ref[0, 2], preferred_element_type=jnp.float32),
            preferred_element_type=jnp.float32)
        return acc                                               # (M, lanes) f32

    def bn_scale_shift(acc, lanes, g, b, lo, hi):
        # Training-mode batch stats.  Per-channel sums: one row-reduce matmul
        # (ones(1,M) @ acc) + one tiny modular-selector matmul per moment.
        lane_r = lax.broadcasted_iota(jnp.int32, (lanes, C), 0)
        ch_r = lax.broadcasted_iota(jnp.int32, (lanes, C), 1)
        red = ((lane_r % C) == ch_r).astype(jnp.float32)             # (lanes, C)
        ones_m = jnp.ones((1, M), jnp.float32)
        colsum = jnp.dot(ones_m, acc, preferred_element_type=jnp.float32)
        colsq = jnp.dot(ones_m, acc * acc, preferred_element_type=jnp.float32)
        s = jnp.dot(colsum, red, preferred_element_type=jnp.float32)  # (1, C)
        q = jnp.dot(colsq, red, preferred_element_type=jnp.float32)   # (1, C)
        mean = s / cnt
        # TODO(synk): E[x^2]-E[x]^2 in f32; switch to a centered two-pass
        # variance if reused where conv outputs have mean >> std.
        var = q / cnt - mean * mean
        scale = g * lax.rsqrt(var + EPS)                              # (1, C)
        shift = b - mean * scale                                      # (1, C)
        # Fused lane expansion of (scale, shift); exp is zero outside [lo, hi)
        # so the W zero-padding ring is preserved through bn1 + relu.
        ch_e = lax.broadcasted_iota(jnp.int32, (C, lanes), 0)
        lane_e = lax.broadcasted_iota(jnp.int32, (C, lanes), 1)
        exp = (((lane_e % C) == ch_e) & (lane_e >= lo) & (lane_e < hi)
               ).astype(jnp.float32)                                  # (C, lanes)
        ss = jnp.dot(jnp.concatenate([scale, shift], axis=0), exp,
                     preferred_element_type=jnp.float32)              # (2, lanes)
        return ss[0:1, :], ss[1:2, :]

    @pl.when(step == 0)
    def _():
        # conv1 on the W-padded input slab; band1 keeps an exact zero ring
        # along W (== conv2's zero padding).
        acc1 = conv3(xw_ref[...])                                     # (M, Lp)
        sc, sh = bn_scale_shift(acc1, Lp, g1_ref[...], b1_ref[...],
                                C, (W + 1) * C)
        y_ref[...] = jnp.maximum(acc1 * sc + sh, 0.0).astype(y_ref.dtype)

    @pl.when(step == 1)
    def _():
        # conv2 reads y (zero W-ring already in place); band2's padded columns
        # beyond L are zero, so [:, :L] is the exact conv output (aligned slice).
        acc2 = conv3(y_ref[...])[:, :L]                               # (M, L)
        sc, sh = bn_scale_shift(acc2, L, g2_ref[...], b2_ref[...], 0, L)
        o_ref[...] = jnp.maximum(acc2 * sc + sh + xr_ref[...], 0.0)


def prepare_params(w1_oihw, w2_oihw, g1, b1, g2, b2, *, W,
                   matmul_dtype=jnp.bfloat16):
    """Build call-invariant kernel operands ONCE (not per forward): the banded
    conv weights (bf16 by default) and reshaped BN affine parameters."""
    Cout, Cin = w1_oihw.shape[0], w1_oihw.shape[1]
    if Cin != Cout or tuple(w2_oihw.shape[:2]) != (Cout, Cout):
        raise NotImplementedError(
            "identity shortcut requires input_channels == output_channels")
    C = Cout
    Lp = (W + 2) * C
    band1 = _banded_weights(w1_oihw, W, pad_out=True)       # (3, Lp, Lp)
    band2 = _banded_weights(w2_oihw, W, pad_out=False)      # (3, Lp, W*C)
    band2 = jnp.pad(band2, ((0, 0), (0, 0), (0, Lp - W * C)))
    bands = jnp.stack([band1, band2]).astype(matmul_dtype)  # (2, 3, Lp, Lp)
    return dict(
        bands=bands, W=W, C=C,
        g1=g1.reshape(1, C).astype(jnp.float32),
        b1=b1.reshape(1, C).astype(jnp.float32),
        g2=g2.reshape(1, C).astype(jnp.float32),
        b2=b2.reshape(1, C).astype(jnp.float32),
    )


def basic_block_apply(params, x_nchw):
    """Fused BasicBlock forward (stride=1, projection=None, train-mode BN)."""
    # TODO(synk): stride>1 and the `projection` shortcut branch are not
    # implemented (module defaults are stride=1, projection=None).
    N, Cin, H, W = x_nchw.shape
    C, bands = params["C"], params["bands"]
    assert Cin == C and W == params["W"], "params were prepared for other dims"
    M, L, Lp = N * H, W * C, (W + 2) * C

    # Boundary glue (NCHW -> lane-dense 2-D views).  TODO(synk): carry NHWC /
    # (N*H, W*C) layout between blocks in the surrounding model to drop these
    # relayout kernels entirely.
    x_nhwc = jnp.transpose(x_nchw, (0, 2, 3, 1)).astype(jnp.float32)  # (N,H,W,C)
    xw = jnp.pad(x_nhwc, ((0, 0), (0, 0), (1, 1), (0, 0)))
    xw = xw.reshape(M, Lp).astype(bands.dtype)     # conv1 LHS (bf16 by default)
    xr = x_nhwc.reshape(M, L)                      # residual stays f32

    kernel = functools.partial(_basic_block_kernel, N=N, H=H, W=W, C=C)

    out2d = pl.pallas_call(
        kernel,
        out_shape=jax.ShapeDtypeStruct((M, L), jnp.float32),
        # 2-step grid: conv2's band block is prefetched during step-0 compute.
        grid=(2,),
        in_specs=[
            pl.BlockSpec((M, Lp), lambda i: (0, 0)),            # xw (conv1 LHS)
            pl.BlockSpec((M, L), lambda i: (0, 0)),             # residual
            pl.BlockSpec((1, 3, Lp, Lp), lambda i: (i, 0, 0, 0)),  # per-step band
            pl.BlockSpec((1, C), lambda i: (0, 0)),             # bn1 gamma
            pl.BlockSpec((1, C), lambda i: (0, 0)),             # bn1 beta
            pl.BlockSpec((1, C), lambda i: (0, 0)),             # bn2 gamma
            pl.BlockSpec((1, C), lambda i: (0, 0)),             # bn2 beta
        ],
        out_specs=pl.BlockSpec((M, L), lambda i: (0, 0)),
        scratch_shapes=[pltpu.VMEM((M, Lp), bands.dtype)],      # y1 carry
        compiler_params=pltpu.CompilerParams(
            dimension_semantics=("arbitrary",)),  # step 1 depends on step 0
    )(xw, xr, bands, params["g1"], params["b1"], params["g2"], params["b2"])

    return jnp.transpose(out2d.reshape(N, H, W, C), (0, 3, 1, 2))     # NCHW


def basic_block_forward(x_nchw, w1_oihw, w2_oihw, g1, b1, g2, b2,
                        matmul_dtype=jnp.bfloat16):
    """Convenience one-shot wrapper.  For repeated calls, use prepare_params()
    once + basic_block_apply() per call (avoids rebuilding the banded weights)."""
    params = prepare_params(w1_oihw, w2_oihw, g1, b1, g2, b2,
                            W=x_nchw.shape[3], matmul_dtype=matmul_dtype)
    return basic_block_apply(params, x_nchw)


def _reference(x, w1, w2, g1, b1, g2, b2):
    """Pure-JAX reference mirroring the PyTorch forward (train-mode BN)."""
    def conv(t, w):
        return lax.conv_general_dilated(
            t, w, (1, 1), ((1, 1), (1, 1)),
            dimension_numbers=("NCHW", "OIHW", "NCHW"),
            precision=lax.Precision.HIGHEST)

    def bn(t, g, b):
        m = t.mean(axis=(0, 2, 3), keepdims=True)
        v = ((t - m) ** 2).mean(axis=(0, 2, 3), keepdims=True)
        return (g.reshape(1, -1, 1, 1) * (t - m) / jnp.sqrt(v + EPS)
                + b.reshape(1, -1, 1, 1))

    y = jnp.maximum(bn(conv(x, w1), g1, b1), 0.0)
    z = bn(conv(y, w2), g2, b2)
    return jnp.maximum(z + x, 0.0)


if __name__ == "__main__":
    key = jax.random.PRNGKey(0)
    k1, k2, k3, k4, k5, k6, k7 = jax.random.split(key, 7)

    # CIFAR-10 ResNet stage-1 BasicBlock width (Cin == Cout = 16, stride=1).
    N, C, H, W = 2, 16, 16, 16
    x = jax.random.normal(k1, (N, C, H, W), jnp.float32)
    w1 = 0.2 * jax.random.normal(k2, (C, C, 3, 3), jnp.float32)       # conv1 (OIHW)
    w2 = 0.2 * jax.random.normal(k3, (C, C, 3, 3), jnp.float32)       # conv2 (OIHW)
    g1 = 1.0 + 0.1 * jax.random.normal(k4, (C,), jnp.float32)         # bn1.weight
    b1 = 0.1 * jax.random.normal(k5, (C,), jnp.float32)               # bn1.bias
    g2 = 1.0 + 0.1 * jax.random.normal(k6, (C,), jnp.float32)         # bn2.weight
    b2 = 0.1 * jax.random.normal(k7, (C,), jnp.float32)               # bn2.bias

    ref = _reference(x, w1, w2, g1, b1, g2, b2)

    # Default path: bf16 MXU inputs, f32 accumulation; params prepared once.
    params = prepare_params(w1, w2, g1, b1, g2, b2, W=W)
    out = jax.block_until_ready(basic_block_apply(params, x))
    assert out.shape == ref.shape == (N, C, H, W)
    err_bf16 = float(jnp.max(jnp.abs(out - ref)))
    assert jnp.allclose(out, ref, rtol=1e-2, atol=2e-2), err_bf16

    # Strict check on the f32 MXU path (same tolerance as the original test).
    params32 = prepare_params(w1, w2, g1, b1, g2, b2, W=W,
                              matmul_dtype=jnp.float32)
    out32 = jax.block_until_ready(basic_block_apply(params32, x))
    err_f32 = float(jnp.max(jnp.abs(out32 - ref)))
    assert jnp.allclose(out32, ref, rtol=1e-2, atol=1e-2), err_f32

    print("KERNEL_OK")
</pallas_src>

<mosaic_0001>
module attributes {stable_mosaic.version = 11 : i64} {
  func.func @_basic_block_kernel(%arg0: i32, %arg1: memref<32x288xbf16, #tpu.memory_space<vmem>>, %arg2: memref<32x256xf32, #tpu.memory_space<vmem>>, %arg3: memref<1x3x288x288xbf16, #tpu.memory_space<vmem>>, %arg4: memref<1x16xf32, #tpu.memory_space<vmem>>, %arg5: memref<1x16xf32, #tpu.memory_space<vmem>>, %arg6: memref<1x16xf32, #tpu.memory_space<vmem>>, %arg7: memref<1x16xf32, #tpu.memory_space<vmem>>, %arg8: memref<32x256xf32, #tpu.memory_space<vmem>>, %arg9: memref<32x288xbf16, #tpu.memory_space<vmem>>) attributes {dimension_semantics = [#tpu.dimension_semantics<arbitrary>], iteration_bounds = array<i64: 2>, scalar_prefetch = 0 : i64, scratch_operands = 1 : i64, tpu.core_type = #tpu.core_type<tc>, window_params = [{pipeline_mode = #tpu.pipeline_mode<synchronous>, transform_indices = @transform_0, window_bounds = array<i64: 32, 288>}, {pipeline_mode = #tpu.pipeline_mode<synchronous>, transform_indices = @transform_1, window_bounds = array<i64: 32, 256>}, {transform_indices = @transform_2, window_bounds = array<i64: 1, 3, 288, 288>}, {pipeline_mode = #tpu.pipeline_mode<synchronous>, transform_indices = @transform_3, window_bounds = array<i64: 1, 16>}, {pipeline_mode = #tpu.pipeline_mode<synchronous>, transform_indices = @transform_4, window_bounds = array<i64: 1, 16>}, {pipeline_mode = #tpu.pipeline_mode<synchronous>, transform_indices = @transform_5, window_bounds = array<i64: 1, 16>}, {pipeline_mode = #tpu.pipeline_mode<synchronous>, transform_indices = @transform_6, window_bounds = array<i64: 1, 16>}, {pipeline_mode = #tpu.pipeline_mode<synchronous>, transform_indices = @transform_7, window_bounds = array<i64: 32, 256>}]} {
    %0 = tpu.iota {dimensions = array<i32: 0>} : vector<32x32xi32>
    %1 = tpu.iota {dimensions = array<i32: 1>} : vector<32x32xi32>
    %c16_i32 = arith.constant 16 : i32
    %c0_i32 = arith.constant 0 : i32
    %2 = arith.cmpi eq, %c16_i32, %c0_i32 : i32
    %c1_i32 = arith.constant 1 : i32
    %3 = arith.select %2, %c1_i32, %c16_i32 : i32
    %4 = vector.broadcast %3 : i32 to vector<32x32xi32>
    %5 = arith.remsi %0, %4 : vector<32x32xi32>
    %c0_i32_0 = arith.constant 0 : i32
    %6 = vector.broadcast %c0_i32_0 : i32 to vector<32x32xi32>
    %7 = arith.cmpi ne, %5, %6 : vector<32x32xi32>
    %c0_i32_1 = arith.constant 0 : i32
    %8 = vector.broadcast %c0_i32_1 : i32 to vector<32x32xi32>
    %9 = arith.cmpi slt, %5, %8 : vector<32x32xi32>
    %c0_i32_2 = arith.constant 0 : i32
    %10 = arith.cmpi slt, %3, %c0_i32_2 : i32
    %11 = vector.broadcast %10 : i1 to vector<32x32xi1>
    %12 = vector.broadcast %11 : vector<32x32xi1> to vector<32x32xi1>
    %13 = arith.xori %9, %12 : vector<32x32xi1>
    %14 = arith.andi %13, %7 : vector<32x32xi1>
    %15 = vector.broadcast %3 : i32 to vector<32x32xi32>
    %16 = arith.addi %5, %15 : vector<32x32xi32>
    %17 = arith.select %14, %16, %5 : vector<32x32xi1>, vector<32x32xi32>
    %c1_i32_3 = arith.constant 1 : i32
    %18 = vector.broadcast %c1_i32_3 : i32 to vector<32x32xi32>
    %19 = arith.subi %0, %18 : vector<32x32xi32>
    %20 = arith.cmpi eq, %1, %19 : vector<32x32xi32>
    %c0_i32_4 = arith.constant 0 : i32
    %21 = vector.broadcast %c0_i32_4 : i32 to vector<32x32xi32>
    %22 = arith.cmpi ne, %17, %21 : vector<32x32xi32>
    %23 = arith.andi %20, %22 : vector<32x32xi1>
    %24 = arith.extui %23 : vector<32x32xi1> to vector<32x32xi32>
    %25 = arith.sitofp %24 : vector<32x32xi32> to vector<32x32xf32>
    %c1_i32_5 = arith.constant 1 : i32
    %26 = vector.broadcast %c1_i32_5 : i32 to vector<32x32xi32>
    %27 = arith.addi %0, %26 : vector<32x32xi32>
    %28 = arith.cmpi eq, %1, %27 : vector<32x32xi32>
    %c15_i32 = arith.constant 15 : i32
    %29 = vector.broadcast %c15_i32 : i32 to vector<32x32xi32>
    %30 = arith.cmpi ne, %17, %29 : vector<32x32xi32>
    %31 = arith.andi %28, %30 : vector<32x32xi1>
    %32 = arith.extui %31 : vector<32x32xi1> to vector<32x32xi32>
    %33 = arith.sitofp %32 : vector<32x32xi32> to vector<32x32xf32>
    %c0_i32_6 = arith.constant 0 : i32
    %34 = arith.cmpi eq, %arg0, %c0_i32_6 : i32
    %35 = arith.extui %34 : i1 to i32
    %c0_i32_7 = arith.constant 0 : i32
    %36 = arith.cmpi ne, %35, %c0_i32_7 : i32
    scf.if %36 {
      %c0 = arith.constant 0 : index
      %c0_10 = arith.constant 0 : index
      %40 = vector.load %arg1[%c0, %c0_10] : memref<32x288xbf16, #tpu.memory_space<vmem>>, vector<32x288xbf16>
      %c0_11 = arith.constant 0 : index
      %c1 = arith.constant 1 : index
      %c0_12 = arith.constant 0 : index
      %c0_13 = arith.constant 0 : index
      %41 = vector.load %arg3[%c0_11, %c1, %c0_12, %c0_13] : memref<1x3x288x288xbf16, #tpu.memory_space<vmem>>, vector<1x1x288x288xbf16>
      %42 = vector.shape_cast %41 : vector<1x1x288x288xbf16> to vector<288x288xbf16>
      %cst = arith.constant dense<0.000000e+00> : vector<32x288xf32>
      %43 = tpu.matmul %40, %42, %cst {dimension_numbers = #tpu.dot_dimension_numbers<[1], [0], [0], [1], [0, 0, 1, 1], [], []>} : vector<32x288xbf16>, vector<288x288xbf16>, vector<32x288xf32> -> vector<32x288xf32>
      %c0_14 = arith.constant 0 : index
      %c0_15 = arith.constant 0 : index
      %c0_16 = arith.constant 0 : index
      %c0_17 = arith.constant 0 : index
      %44 = vector.load %arg3[%c0_14, %c0_15, %c0_16, %c0_17] : memref<1x3x288x288xbf16, #tpu.memory_space<vmem>>, vector<1x1x288x288xbf16>
      %45 = vector.shape_cast %44 : vector<1x1x288x288xbf16> to vector<288x288xbf16>
      %cst_18 = arith.constant dense<0.000000e+00> : vector<32x288xf32>
      %46 = tpu.matmul %40, %45, %cst_18 {dimension_numbers = #tpu.dot_dimension_numbers<[1], [0], [0], [1], [0, 0, 1, 1], [], []>} : vector<32x288xbf16>, vector<288x288xbf16>, vector<32x288xf32> -> vector<32x288xf32>
      %cst_19 = arith.constant dense<0.000000e+00> : vector<32x288xf32>
      %47 = tpu.matmul %25, %46, %cst_19 {dimension_numbers = #tpu.dot_dimension_numbers<[1], [0], [0], [1], [0, 0, 1, 1], [], []>} : vector<32x32xf32>, vector<32x288xf32>, vector<32x288xf32> -> vector<32x288xf32>
      %48 = arith.addf %43, %47 : vector<32x288xf32>
      %c0_20 = arith.constant 0 : index
      %c2 = arith.constant 2 : index
      %c0_21 = arith.constant 0 : index
      %c0_22 = arith.constant 0 : index
      %49 = vector.load %arg3[%c0_20, %c2, %c0_21, %c0_22] : memref<1x3x288x288xbf16, #tpu.memory_space<vmem>>, vector<1x1x288x288xbf16>
      %50 = vector.shape_cast %49 : vector<1x1x288x288xbf16> to vector<288x288xbf16>
      %cst_23 = arith.constant dense<0.000000e+00> : vector<32x288xf32>
      %51 = tpu.matmul %40, %50, %cst_23 {dimension_numbers = #tpu.dot_dimension_numbers<[1], [0], [0], [1], [0, 0, 1, 1], [], []>} : vector<32x288xbf16>, vector<288x288xbf16>, vector<32x288xf32> -> vector<32x288xf32>
      %cst_24 = arith.constant dense<0.000000e+00> : vector<32x288xf32>
      %52 = tpu.matmul %33, %51, %cst_24 {dimension_numbers = #tpu.dot_dimension_numbers<[1], [0], [0], [1], [0, 0, 1, 1], [], []>} : vector<32x32xf32>, vector<32x288xf32>, vector<32x288xf32> -> vector<32x288xf32>
      %53 = arith.addf %48, %52 : vector<32x288xf32>
      %c0_25 = arith.constant 0 : index
      %c0_26 = arith.constant 0 : index
      %54 = vector.load %arg4[%c0_25, %c0_26] : memref<1x16xf32, #tpu.memory_space<vmem>>, vector<1x16xf32>
      %c0_27 = arith.constant 0 : index
      %c0_28 = arith.constant 0 : index
      %55 = vector.load %arg5[%c0_27, %c0_28] : memref<1x16xf32, #tpu.memory_space<vmem>>, vector<1x16xf32>
      %56 = tpu.iota {dimensions = array<i32: 0>} : vector<288x16xi32>
      %57 = tpu.iota {dimensions = array<i32: 1>} : vector<288x16xi32>
      %c16_i32_29 = arith.constant 16 : i32
      %c0_i32_30 = arith.constant 0 : i32
      %58 = arith.cmpi eq, %c16_i32_29, %c0_i32_30 : i32
      %c1_i32_31 = arith.constant 1 : i32
      %59 = arith.select %58, %c1_i32_31, %c16_i32_29 : i32
      %60 = vector.broadcast %59 : i32 to vector<288x16xi32>
      %61 = arith.remsi %56, %60 : vector<288x16xi32>
      %c0_i32_32 = arith.constant 0 : i32
      %62 = vector.broadcast %c0_i32_32 : i32 to vector<288x16xi32>
      %63 = arith.cmpi ne, %61, %62 : vector<288x16xi32>
      %c0_i32_33 = arith.constant 0 : i32
      %64 = vector.broadcast %c0_i32_33 : i32 to vector<288x16xi32>
      %65 = arith.cmpi slt, %61, %64 : vector<288x16xi32>
      %c0_i32_34 = arith.constant 0 : i32
      %66 = arith.cmpi slt, %59, %c0_i32_34 : i32
      %67 = vector.broadcast %66 : i1 to vector<288x16xi1>
      %68 = vector.broadcast %67 : vector<288x16xi1> to vector<288x16xi1>
      %69 = arith.xori %65, %68 : vector<288x16xi1>
      %70 = arith.andi %69, %63 : vector<288x16xi1>
      %71 = vector.broadcast %59 : i32 to vector<288x16xi32>
      %72 = arith.addi %61, %71 : vector<288x16xi32>
      %73 = arith.select %70, %72, %61 : vector<288x16xi1>, vector<288x16xi32>
      %74 = arith.cmpi eq, %73, %57 : vector<288x16xi32>
      %75 = arith.extui %74 : vector<288x16xi1> to vector<288x16xi32>
      %76 = arith.sitofp %75 : vector<288x16xi32> to vector<288x16xf32>
      %cst_35 = arith.constant 1.000000e+00 : f32
      %77 = vector.broadcast %cst_35 : f32 to vector<1x32xf32>
      %cst_36 = arith.constant dense<0.000000e+00> : vector<1x288xf32>
      %78 = tpu.matmul %77, %53, %cst_36 {dimension_numbers = #tpu.dot_dimension_numbers<[1], [0], [0], [1], [0, 0, 1, 1], [], []>} : vector<1x32xf32>, vector<32x288xf32>, vector<1x288xf32> -> vector<1x288xf32>
      %79 = arith.mulf %53, %53 : vector<32x288xf32>
      %cst_37 = arith.constant dense<0.000000e+00> : vector<1x288xf32>
      %80 = tpu.matmul %77, %79, %cst_37 {dimension_numbers = #tpu.dot_dimension_numbers<[1], [0], [0], [1], [0, 0, 1, 1], [], []>} : vector<1x32xf32>, vector<32x288xf32>, vector<1x288xf32> -> vector<1x288xf32>
      %cst_38 = arith.constant dense<0.000000e+00> : vector<1x16xf32>
      %81 = tpu.matmul %78, %76, %cst_38 {dimension_numbers = #tpu.dot_dimension_numbers<[1], [0], [0], [1], [0, 0, 1, 1], [], []>} : vector<1x288xf32>, vector<288x16xf32>, vector<1x16xf32> -> vector<1x16xf32>
      %cst_39 = arith.constant dense<0.000000e+00> : vector<1x16xf32>
      %82 = tpu.matmul %80, %76, %cst_39 {dimension_numbers = #tpu.dot_dimension_numbers<[1], [0], [0], [1], [0, 0, 1, 1], [], []>} : vector<1x288xf32>, vector<288x16xf32>, vector<1x16xf32> -> vector<1x16xf32>
      %cst_40 = arith.constant 5.120000e+02 : f32
      %83 = vector.broadcast %cst_40 : f32 to vector<1x16xf32>
      %84 = arith.divf %81, %83 : vector<1x16xf32>
      %cst_41 = arith.constant 5.120000e+02 : f32
      %85 = vector.broadcast %cst_41 : f32 to vector<1x16xf32>
      %86 = arith.divf %82, %85 : vector<1x16xf32>
      %87 = arith.mulf %84, %84 : vector<1x16xf32>
      %88 = arith.subf %86, %87 : vector<1x16xf32>
      %cst_42 = arith.constant 9.99999974E-6 : f32
      %89 = vector.broadcast %cst_42 : f32 to vector<1x16xf32>
      %90 = arith.addf %88, %89 : vector<1x16xf32>
      %91 = math.rsqrt %90 : vector<1x16xf32>
      %92 = arith.mulf %54, %91 : vector<1x16xf32>
      %93 = arith.mulf %84, %92 : vector<1x16xf32>
      %94 = arith.subf %55, %93 : vector<1x16xf32>
      %95 = tpu.iota {dimensions = array<i32: 0>} : vector<16x288xi32>
      %96 = tpu.iota {dimensions = array<i32: 1>} : vector<16x288xi32>
      %c16_i32_43 = arith.constant 16 : i32
      %c0_i32_44 = arith.constant 0 : i32
      %97 = arith.cmpi eq, %c16_i32_43, %c0_i32_44 : i32
      %c1_i32_45 = arith.constant 1 : i32
      %98 = arith.select %97, %c1_i32_45, %c16_i32_43 : i32
      %99 = vector.broadcast %98 : i32 to vector<16x288xi32>
      %100 = arith.remsi %96, %99 : vector<16x288xi32>
      %c0_i32_46 = arith.constant 0 : i32
      %101 = vector.broadcast %c0_i32_46 : i32 to vector<16x288xi32>
      %102 = arith.cmpi ne, %100, %101 : vector<16x288xi32>
      %c0_i32_47 = arith.constant 0 : i32
      %103 = vector.broadcast %c0_i32_47 : i32 to vector<16x288xi32>
      %104 = arith.cmpi slt, %100, %103 : vector<16x288xi32>
      %c0_i32_48 = arith.constant 0 : i32
      %105 = arith.cmpi slt, %98, %c0_i32_48 : i32
      %106 = vector.broadcast %105 : i1 to vector<16x288xi1>
      %107 = vector.broadcast %106 : vector<16x288xi1> to vector<16x288xi1>
      %108 = arith.xori %104, %107 : vector<16x288xi1>
      %109 = arith.andi %108, %102 : vector<16x288xi1>
      %110 = vector.broadcast %98 : i32 to vector<16x288xi32>
      %111 = arith.addi %100, %110 : vector<16x288xi32>
      %112 = arith.select %109, %111, %100 : vector<16x288xi1>, vector<16x288xi32>
      %113 = arith.cmpi eq, %112, %95 : vector<16x288xi32>
      %c16_i32_49 = arith.constant 16 : i32
      %114 = vector.broadcast %c16_i32_49 : i32 to vector<16x288xi32>
      %115 = arith.cmpi sge, %96, %114 : vector<16x288xi32>
      %116 = arith.andi %113, %115 : vector<16x288xi1>
      %c272_i32 = arith.constant 272 : i32
      %117 = vector.broadcast %c272_i32 : i32 to vector<16x288xi32>
      %118 = arith.cmpi slt, %96, %117 : vector<16x288xi32>
      %119 = arith.andi %116, %118 : vector<16x288xi1>
      %120 = arith.extui %119 : vector<16x288xi1> to vector<16x288xi32>
      %121 = arith.sitofp %120 : vector<16x288xi32> to vector<16x288xf32>
      %122 = tpu.concatenate %92, %94 in 0 : vector<1x16xf32>, vector<1x16xf32> -> vector<2x16xf32>
      %cst_50 = arith.constant dense<0.000000e+00> : vector<2x288xf32>
      %123 = tpu.matmul %122, %121, %cst_50 {dimension_numbers = #tpu.dot_dimension_numbers<[1], [0], [0], [1], [0, 0, 1, 1], [], []>} : vector<2x16xf32>, vector<16x288xf32>, vector<2x288xf32> -> vector<2x288xf32>
      %124 = vector.extract_strided_slice %123 {offsets = [0, 0], sizes = [1, 288], strides = [1, 1]} : vector<2x288xf32> to vector<1x288xf32>
      %125 = vector.extract_strided_slice %123 {offsets = [1, 0], sizes = [1, 288], strides = [1, 1]} : vector<2x288xf32> to vector<1x288xf32>
      %126 = vector.broadcast %124 : vector<1x288xf32> to vector<32x288xf32>
      %127 = arith.mulf %53, %126 : vector<32x288xf32>
      %128 = vector.broadcast %125 : vector<1x288xf32> to vector<32x288xf32>
      %129 = arith.addf %127, %128 : vector<32x288xf32>
      %cst_51 = arith.constant 0.000000e+00 : f32
      %130 = vector.broadcast %cst_51 : f32 to vector<32x288xf32>
      %131 = arith.maximumf %129, %130 : vector<32x288xf32>
      %132 = arith.truncf %131 : vector<32x288xf32> to vector<32x288xbf16>
      %c0_52 = arith.constant 0 : index
      %c0_53 = arith.constant 0 : index
      %133 = vector.load %arg9[%c0_52, %c0_53] : memref<32x288xbf16, #tpu.memory_space<vmem>>, vector<32x288xbf16>
      tpu.vector_store %arg9[%c0_52, %c0_53], %132 {strides = array<i32>} : memref<32x288xbf16, #tpu.memory_space<vmem>>, vector<32x288xbf16>,
    } else {
    }
    %c1_i32_8 = arith.constant 1 : i32
    %37 = arith.cmpi eq, %arg0, %c1_i32_8 : i32
    %38 = arith.extui %37 : i1 to i32
    %c0_i32_9 = arith.constant 0 : i32
    %39 = arith.cmpi ne, %38, %c0_i32_9 : i32
    scf.if %39 {
      %c0 = arith.constant 0 : index
      %c0_10 = arith.constant 0 : index
      %40 = vector.load %arg9[%c0, %c0_10] : memref<32x288xbf16, #tpu.memory_space<vmem>>, vector<32x288xbf16>
      %c0_11 = arith.constant 0 : index
      %c1 = arith.constant 1 : index
      %c0_12 = arith.constant 0 : index
      %c0_13 = arith.constant 0 : index
      %41 = vector.load %arg3[%c0_11, %c1, %c0_12, %c0_13] : memref<1x3x288x288xbf16, #tpu.memory_space<vmem>>, vector<1x1x288x288xbf16>
      %42 = vector.shape_cast %41 : vector<1x1x288x288xbf16> to vector<288x288xbf16>
      %cst = arith.constant dense<0.000000e+00> : vector<32x288xf32>
      %43 = tpu.matmul %40, %42, %cst {dimension_numbers = #tpu.dot_dimension_numbers<[1], [0], [0], [1], [0, 0, 1, 1], [], []>} : vector<32x288xbf16>, vector<288x288xbf16>, vector<32x288xf32> -> vector<32x288xf32>
      %c0_14 = arith.constant 0 : index
      %c0_15 = arith.constant 0 : index
      %c0_16 = arith.constant 0 : index
      %c0_17 = arith.constant 0 : index
      %44 = vector.load %arg3[%c0_14, %c0_15, %c0_16, %c0_17] : memref<1x3x288x288xbf16, #tpu.memory_space<vmem>>, vector<1x1x288x288xbf16>
      %45 = vector.shape_cast %44 : vector<1x1x288x288xbf16> to vector<288x288xbf16>
      %cst_18 = arith.constant dense<0.000000e+00> : vector<32x288xf32>
      %46 = tpu.matmul %40, %45, %cst_18 {dimension_numbers = #tpu.dot_dimension_numbers<[1], [0], [0], [1], [0, 0, 1, 1], [], []>} : vector<32x288xbf16>, vector<288x288xbf16>, vector<32x288xf32> -> vector<32x288xf32>
      %cst_19 = arith.constant dense<0.000000e+00> : vector<32x288xf32>
      %47 = tpu.matmul %25, %46, %cst_19 {dimension_numbers = #tpu.dot_dimension_numbers<[1], [0], [0], [1], [0, 0, 1, 1], [], []>} : vector<32x32xf32>, vector<32x288xf32>, vector<32x288xf32> -> vector<32x288xf32>
      %48 = arith.addf %43, %47 : vector<32x288xf32>
      %c0_20 = arith.constant 0 : index
      %c2 = arith.constant 2 : index
      %c0_21 = arith.constant 0 : index
      %c0_22 = arith.constant 0 : index
      %49 = vector.load %arg3[%c0_20, %c2, %c0_21, %c0_22] : memref<1x3x288x288xbf16, #tpu.memory_space<vmem>>, vector<1x1x288x288xbf16>
      %50 = vector.shape_cast %49 : vector<1x1x288x288xbf16> to vector<288x288xbf16>
      %cst_23 = arith.constant dense<0.000000e+00> : vector<32x288xf32>
      %51 = tpu.matmul %40, %50, %cst_23 {dimension_numbers = #tpu.dot_dimension_numbers<[1], [0], [0], [1], [0, 0, 1, 1], [], []>} : vector<32x288xbf16>, vector<288x288xbf16>, vector<32x288xf32> -> vector<32x288xf32>
      %cst_24 = arith.constant dense<0.000000e+00> : vector<32x288xf32>
      %52 = tpu.matmul %33, %51, %cst_24 {dimension_numbers = #tpu.dot_dimension_numbers<[1], [0], [0], [1], [0, 0, 1, 1], [], []>} : vector<32x32xf32>, vector<32x288xf32>, vector<32x288xf32> -> vector<32x288xf32>
      %53 = arith.addf %48, %52 : vector<32x288xf32>
      %54 = vector.extract_strided_slice %53 {offsets = [0, 0], sizes = [32, 256], strides = [1, 1]} : vector<32x288xf32> to vector<32x256xf32>
      %c0_25 = arith.constant 0 : index
      %c0_26 = arith.constant 0 : index
      %55 = vector.load %arg6[%c0_25, %c0_26] : memref<1x16xf32, #tpu.memory_space<vmem>>, vector<1x16xf32>
      %c0_27 = arith.constant 0 : index
      %c0_28 = arith.constant 0 : index
      %56 = vector.load %arg7[%c0_27, %c0_28] : memref<1x16xf32, #tpu.memory_space<vmem>>, vector<1x16xf32>
      %57 = tpu.iota {dimensions = array<i32: 0>} : vector<256x16xi32>
      %58 = tpu.iota {dimensions = array<i32: 1>} : vector<256x16xi32>
      %c16_i32_29 = arith.constant 16 : i32
      %c0_i32_30 = arith.constant 0 : i32
      %59 = arith.cmpi eq, %c16_i32_29, %c0_i32_30 : i32
      %c1_i32_31 = arith.constant 1 : i32
      %60 = arith.select %59, %c1_i32_31, %c16_i32_29 : i32
      %61 = vector.broadcast %60 : i32 to vector<256x16xi32>
      %62 = arith.remsi %57, %61 : vector<256x16xi32>
      %c0_i32_32 = arith.constant 0 : i32
      %63 = vector.broadcast %c0_i32_32 : i32 to vector<256x16xi32>
      %64 = arith.cmpi ne, %62, %63 : vector<256x16xi32>
      %c0_i32_33 = arith.constant 0 : i32
      %65 = vector.broadcast %c0_i32_33 : i32 to vector<256x16xi32>
      %66 = arith.cmpi slt, %62, %65 : vector<256x16xi32>
      %c0_i32_34 = arith.constant 0 : i32
      %67 = arith.cmpi slt, %60, %c0_i32_34 : i32
      %68 = vector.broadcast %67 : i1 to vector<256x16xi1>
      %69 = vector.broadcast %68 : vector<256x16xi1> to vector<256x16xi1>
      %70 = arith.xori %66, %69 : vector<256x16xi1>
      %71 = arith.andi %70, %64 : vector<256x16xi1>
      %72 = vector.broadcast %60 : i32 to vector<256x16xi32>
      %73 = arith.addi %62, %72 : vector<256x16xi32>
      %74 = arith.select %71, %73, %62 : vector<256x16xi1>, vector<256x16xi32>
      %75 = arith.cmpi eq, %74, %58 : vector<256x16xi32>
      %76 = arith.extui %75 : vector<256x16xi1> to vector<256x16xi32>
      %77 = arith.sitofp %76 : vector<256x16xi32> to vector<256x16xf32>
      %cst_35 = arith.constant 1.000000e+00 : f32
      %78 = vector.broadcast %cst_35 : f32 to vector<1x32xf32>
      %cst_36 = arith.constant dense<0.000000e+00> : vector<1x256xf32>
      %79 = tpu.matmul %78, %54, %cst_36 {dimension_numbers = #tpu.dot_dimension_numbers<[1], [0], [0], [1], [0, 0, 1, 1], [], []>} : vector<1x32xf32>, vector<32x256xf32>, vector<1x256xf32> -> vector<1x256xf32>
      %80 = arith.mulf %54, %54 : vector<32x256xf32>
      %cst_37 = arith.constant dense<0.000000e+00> : vector<1x256xf32>
      %81 = tpu.matmul %78, %80, %cst_37 {dimension_numbers = #tpu.dot_dimension_numbers<[1], [0], [0], [1], [0, 0, 1, 1], [], []>} : vector<1x32xf32>, vector<32x256xf32>, vector<1x256xf32> -> vector<1x256xf32>
      %cst_38 = arith.constant dense<0.000000e+00> : vector<1x16xf32>
      %82 = tpu.matmul %79, %77, %cst_38 {dimension_numbers = #tpu.dot_dimension_numbers<[1], [0], [0], [1], [0, 0, 1, 1], [], []>} : vector<1x256xf32>, vector<256x16xf32>, vector<1x16xf32> -> vector<1x16xf32>
      %cst_39 = arith.constant dense<0.000000e+00> : vector<1x16xf32>
      %83 = tpu.matmul %81, %77, %cst_39 {dimension_numbers = #tpu.dot_dimension_numbers<[1], [0], [0], [1], [0, 0, 1, 1], [], []>} : vector<1x256xf32>, vector<256x16xf32>, vector<1x16xf32> -> vector<1x16xf32>
      %cst_40 = arith.constant 5.120000e+02 : f32
      %84 = vector.broadcast %cst_40 : f32 to vector<1x16xf32>
      %85 = arith.divf %82, %84 : vector<1x16xf32>
      %cst_41 = arith.constant 5.120000e+02 : f32
      %86 = vector.broadcast %cst_41 : f32 to vector<1x16xf32>
      %87 = arith.divf %83, %86 : vector<1x16xf32>
      %88 = arith.mulf %85, %85 : vector<1x16xf32>
      %89 = arith.subf %87, %88 : vector<1x16xf32>
      %cst_42 = arith.constant 9.99999974E-6 : f32
      %90 = vector.broadcast %cst_42 : f32 to vector<1x16xf32>
      %91 = arith.addf %89, %90 : vector<1x16xf32>
      %92 = math.rsqrt %91 : vector<1x16xf32>
      %93 = arith.mulf %55, %92 : vector<1x16xf32>
      %94 = arith.mulf %85, %93 : vector<1x16xf32>
      %95 = arith.subf %56, %94 : vector<1x16xf32>
      %96 = tpu.iota {dimensions = array<i32: 0>} : vector<16x256xi32>
      %97 = tpu.iota {dimensions = array<i32: 1>} : vector<16x256xi32>
      %c16_i32_43 = arith.constant 16 : i32
      %c0_i32_44 = arith.constant 0 : i32
      %98 = arith.cmpi eq, %c16_i32_43, %c0_i32_44 : i32
      %c1_i32_45 = arith.constant 1 : i32
      %99 = arith.select %98, %c1_i32_45, %c16_i32_43 : i32
      %100 = vector.broadcast %99 : i32 to vector<16x256xi32>
      %101 = arith.remsi %97, %100 : vector<16x256xi32>
      %c0_i32_46 = arith.constant 0 : i32
      %102 = vector.broadcast %c0_i32_46 : i32 to vector<16x256xi32>
      %103 = arith.cmpi ne, %101, %102 : vector<16x256xi32>
      %c0_i32_47 = arith.constant 0 : i32
      %104 = vector.broadcast %c0_i32_47 : i32 to vector<16x256xi32>
      %105 = arith.cmpi slt, %101, %104 : vector<16x256xi32>
      %c0_i32_48 = arith.constant 0 : i32
      %106 = arith.cmpi slt, %99, %c0_i32_48 : i32
      %107 = vector.broadcast %106 : i1 to vector<16x256xi1>
      %108 = vector.broadcast %107 : vector<16x256xi1> to vector<16x256xi1>
      %109 = arith.xori %105, %108 : vector<16x256xi1>
      %110 = arith.andi %109, %103 : vector<16x256xi1>
      %111 = vector.broadcast %99 : i32 to vector<16x256xi32>
      %112 = arith.addi %101, %111 : vector<16x256xi32>
      %113 = arith.select %110, %112, %101 : vector<16x256xi1>, vector<16x256xi32>
      %114 = arith.cmpi eq, %113, %96 : vector<16x256xi32>
      %c0_i32_49 = arith.constant 0 : i32
      %115 = vector.broadcast %c0_i32_49 : i32 to vector<16x256xi32>
      %116 = arith.cmpi sge, %97, %115 : vector<16x256xi32>
      %117 = arith.andi %114, %116 : vector<16x256xi1>
      %c256_i32 = arith.constant 256 : i32
      %118 = vector.broadcast %c256_i32 : i32 to vector<16x256xi32>
      %119 = arith.cmpi slt, %97, %118 : vector<16x256xi32>
      %120 = arith.andi %117, %119 : vector<16x256xi1>
      %121 = arith.extui %120 : vector<16x256xi1> to vector<16x256xi32>
      %122 = arith.sitofp %121 : vector<16x256xi32> to vector<16x256xf32>
      %123 = tpu.concatenate %93, %95 in 0 : vector<1x16xf32>, vector<1x16xf32> -> vector<2x16xf32>
      %cst_50 = arith.constant dense<0.000000e+00> : vector<2x256xf32>
      %124 = tpu.matmul %123, %122, %cst_50 {dimension_numbers = #tpu.dot_dimension_numbers<[1], [0], [0], [1], [0, 0, 1, 1], [], []>} : vector<2x16xf32>, vector<16x256xf32>, vector<2x256xf32> -> vector<2x256xf32>
      %125 = vector.extract_strided_slice %124 {offsets = [0, 0], sizes = [1, 256], strides = [1, 1]} : vector<2x256xf32> to vector<1x256xf32>
      %126 = vector.extract_strided_slice %124 {offsets = [1, 0], sizes = [1, 256], strides = [1, 1]} : vector<2x256xf32> to vector<1x256xf32>
      %127 = vector.broadcast %125 : vector<1x256xf32> to vector<32x256xf32>
      %128 = arith.mulf %54, %127 : vector<32x256xf32>
      %129 = vector.broadcast %126 : vector<1x256xf32> to vector<32x256xf32>
      %130 = arith.addf %128, %129 : vector<32x256xf32>
      %c0_51 = arith.constant 0 : index
      %c0_52 = arith.constant 0 : index
      %131 = vector.load %arg2[%c0_51, %c0_52] : memref<32x256xf32, #tpu.memory_space<vmem>>, vector<32x256xf32>
      %132 = arith.addf %130, %131 : vector<32x256xf32>
      %cst_53 = arith.constant 0.000000e+00 : f32
      %133 = vector.broadcast %cst_53 : f32 to vector<32x256xf32>
      %134 = arith.maximumf %132, %133 : vector<32x256xf32>
      %c0_54 = arith.constant 0 : index
      %c0_55 = arith.constant 0 : index
      %135 = vector.load %arg8[%c0_54, %c0_55] : memref<32x256xf32, #tpu.memory_space<vmem>>, vector<32x256xf32>
      tpu.vector_store %arg8[%c0_54, %c0_55], %134 {strides = array<i32>} : memref<32x256xf32, #tpu.memory_space<vmem>>, vector<32x256xf32>,
    } else {
    }
    return
  }
  func.func @transform_0(%arg0: i32) -> (i32, i32) {
    %c0_i32 = arith.constant 0 : i32
    %c0_i32_0 = arith.constant 0 : i32
    %c0_i32_1 = arith.constant 0 : i32
    return %c0_i32, %c0_i32_0 : i32, i32
  }
  func.func @transform_1(%arg0: i32) -> (i32, i32) {
    %c0_i32 = arith.constant 0 : i32
    %c0_i32_0 = arith.constant 0 : i32
    %c0_i32_1 = arith.constant 0 : i32
    return %c0_i32, %c0_i32_0 : i32, i32
  }
  func.func @transform_2(%arg0: i32) -> (i32, i32, i32, i32) {
    %c0_i32 = arith.constant 0 : i32
    %c0_i32_0 = arith.constant 0 : i32
    %c0_i32_1 = arith.constant 0 : i32
    %c0_i32_2 = arith.constant 0 : i32
    return %arg0, %c0_i32, %c0_i32_0, %c0_i32_1 : i32, i32, i32, i32
  }
  func.func @transform_3(%arg0: i32) -> (i32, i32) {
    %c0_i32 = arith.constant 0 : i32
    %c0_i32_0 = arith.constant 0 : i32
    %c0_i32_1 = arith.constant 0 : i32
    return %c0_i32, %c0_i32_0 : i32, i32
  }
  func.func @transform_4(%arg0: i32) -> (i32, i32) {
    %c0_i32 = arith.constant 0 : i32
    %c0_i32_0 = arith.constant 0 : i32
    %c0_i32_1 = arith.constant 0 : i32
    return %c0_i32, %c0_i32_0 : i32, i32
  }
  func.func @transform_5(%arg0: i32) -> (i32, i32) {
    %c0_i32 = arith.constant 0 : i32
    %c0_i32_0 = arith.constant 0 : i32
    %c0_i32_1 = arith.constant 0 : i32
    return %c0_i32, %c0_i32_0 : i32, i32
  }
  func.func @transform_6(%arg0: i32) -> (i32, i32) {
    %c0_i32 = arith.constant 0 : i32
    %c0_i32_0 = arith.constant 0 : i32
    %c0_i32_1 = arith.constant 0 : i32
    return %c0_i32, %c0_i32_0 : i32, i32
  }
  func.func @transform_7(%arg0: i32) -> (i32, i32) {
    %c0_i32 = arith.constant 0 : i32
    %c0_i32_0 = arith.constant 0 : i32
    %c0_i32_1 = arith.constant 0 : i32
    return %c0_i32, %c0_i32_0 : i32, i32
  }
}

</mosaic_0001>

<llo_original>
// kernel: tpu_custom_call.1
$region0: #{tpu_custom_call.1}
  #allocation0 [shape = 'u32[]', space=smem, size = 0x4, offset = 0x4, fixed_abs, tag = 'smem constant byte address 0x4 - core index']
  #allocation1 [shape = 'u32[72,128]{1,0:T(1,128)}', space=vmem, size = 0x9000, scoped, tag = 'internal scratch']
  #allocation2 [shape = 'bf16[32,288]{1,0:T(8,128)(2,1)}', space=vmem, size = 0x6000, scoped, tag = 'scratch operand']
  %s0 = inlined_call_operand.hbm [shape: bf16[32,288], index: 0, kind: input, shape index: {}]
  %s1 = inlined_call_operand.hbm [shape: f32[32,256], index: 1, kind: input, shape index: {}]
  %s2 = inlined_call_operand.hbm [shape: bf16[2,3,288,288], index: 2, kind: input, shape index: {}]
  %s3 = inlined_call_operand.hbm [shape: f32[1,16], index: 3, kind: input, shape index: {}]
  %s4 = inlined_call_operand.hbm [shape: f32[1,16], index: 4, kind: input, shape index: {}]
  %s5 = inlined_call_operand.hbm [shape: f32[1,16], index: 5, kind: input, shape index: {}]
  %s6 = inlined_call_operand.hbm [shape: f32[1,16], index: 6, kind: input, shape index: {}]
  %s7 = inlined_call_operand.hbm [shape: f32[32,256], index: 7, kind: output, shape index: {}]
  %s8 = sld [smem:[#allocation0]]
  $region97: #{tpu_custom_call.1} parent=0
    _
  %s10 = ssub.s32 1, %s8
  %s11 = scalar_select 0, %s10, %s8
  $region1: #{tpu_custom_call.1} parent=0
    #allocation3 [shape = 'u8[24576]{0}', space=vmem, size = 0x6000, scoped, tag = 'input window, operand 0, single buffered']
    #allocation4 [shape = 's32[2]{0}', space=sflag, size = 0x8, scoped, tag = 'scoped memory for tpu_custom_call.1']
    #allocation5 [shape = 's32[2]{0}', space=sflag, size = 0x8, scoped, tag = 'scoped memory for tpu_custom_call.1']
    #allocation6 [shape = 'u8[32768]{0}', space=vmem, size = 0x8000, scoped, tag = 'input window, operand 1, single buffered']
    #allocation7 [shape = 's32[1]{0}', space=sflag, size = 0x4, scoped, tag = 'scoped memory for tpu_custom_call.1']
    #allocation8 [shape = 'u8[1327104]{0}', space=vmem, size = 0x144000, scoped, tag = 'input window, operand 2']
    #allocation9 [shape = 'u8[512]{0}', space=vmem, size = 0x400, scoped, tag = 'input window, operand 3, single buffered']
    #allocation10 [shape = 'u8[512]{0}', space=vmem, size = 0x400, scoped, tag = 'input window, operand 4, single buffered']
    #allocation11 [shape = 's32[1]{0}', space=sflag, size = 0x4, scoped, tag = 'scoped memory for tpu_custom_call.1']
    #allocation12 [shape = 'u8[512]{0}', space=vmem, size = 0x400, scoped, tag = 'input window, operand 5, single buffered']
    #allocation13 [shape = 'u8[512]{0}', space=vmem, size = 0x400, scoped, tag = 'input window, operand 6, single buffered']
    #allocation14 [shape = 's32[1]{0}', space=sflag, size = 0x4, scoped, tag = 'scoped memory for tpu_custom_call.1']
    #allocation15 [shape = 'u8[32768]{0}', space=vmem, size = 0x8000, scoped, tag = 'output window, operand 0, single buffered']
    %12 = vsyncpa [#allocation4], 0
    %13 = vsyncpa [#allocation7], 0
    %14 = vsyncpa [#allocation11], 0
    %15 = vsyncpa [#allocation14], 0
    %16 = vsyncpa [#allocation5], 0
    loop: start=0, step=1, limit=4
    $region2: #{tpu_custom_call.1} parent=1 // loop_pre_header
      _
    $region3: #{tpu_custom_call.1} parent=1 // loop_header
      %s18 = sphi 0, %s22
      %p19 = scmp.ge.s32.totalorder %s18, 4
      %s26 = sphi 0, %s26
      %s28 = sphi 0, %s26
      %s29 = sphi 0, %s28
      %s43 = sphi 0, %s29
      %s47 = sphi 0, %s47
      %s49 = sphi 0, %s47
      %s50 = sphi 0, %s49
      %s64 = sphi 0, %s50
      %s70 = sphi 0, %s72
      %s73 = sphi 0, %s70
      %s74 = sphi 0, %s73
      %s90 = sphi 0, %s74
      %s94 = sphi 0, %s94
      %s96 = sphi 0, %s94
      %s97 = sphi 0, %s96
      %s111 = sphi 0, %s97
      %s115 = sphi 0, %s115
      %s117 = sphi 0, %s115
      %s118 = sphi 0, %s117
      %s132 = sphi 0, %s118
      %s136 = sphi 0, %s136
      %s138 = sphi 0, %s136
      %s139 = sphi 0, %s138
      %s153 = sphi 0, %s139
      %s157 = sphi 0, %s157
      %s159 = sphi 0, %s157
      %s160 = sphi 0, %s159
      %s174 = sphi 0, %s160
      %s178 = sphi 0, %s178
      %s180 = sphi 0, %s178
      %s181 = sphi 0, %s180
      %s195 = sphi 0, %s181
    $region4: #{tpu_custom_call.1} parent=1 // loop_header_branch
      %21 = sbr.rel (%p19) target = $region8
    $region5: #{tpu_custom_call.1} parent=1 // loop_body
      %s23 = ssub.s32 %s18, 1
      %s24 = ssub.s32 %s18, 2
      %s25 = sadd.s32 %s18, 1
      %s27 = sadd.s32 %s26, 1
      %p30 = scmp.eq.s32.totalorder %s18, 1
      %p31 = scmp.ne.s32.totalorder %s26, %s28
      %p32 = scmp.eq.s32.totalorder %s18, 0
      %p33 = por %p31, %p32
      %p34 = scmp.ne.s32.totalorder %s26, %s28
      %p35 = scmp.eq.s32.totalorder %s23, 1
      %p36 = por %p34, %p35
      %p37 = scmp.ne.s32.totalorder %s28, %s29
      %p38 = scmp.eq.s32.totalorder %s23, 0
      %p39 = por %p37, %p38
      %p40 = scmp.ne.s32.totalorder %s28, %s29
      %p41 = scmp.eq.s32.totalorder %s24, 1
      %p42 = por %p40, %p41
      %p44 = scmp.ne.s32.totalorder %s29, %s43
      %p45 = scmp.eq.s32.totalorder %s24, 0
      %p46 = por %p44, %p45
      %s48 = sadd.s32 %s47, 1
      %p51 = scmp.eq.s32.totalorder %s18, 1
      %p52 = scmp.ne.s32.totalorder %s47, %s49
      %p53 = scmp.eq.s32.totalorder %s18, 0
      %p54 = por %p52, %p53
      %p55 = scmp.ne.s32.totalorder %s47, %s49
      %p56 = scmp.eq.s32.totalorder %s23, 1
      %p57 = por %p55, %p56
      %p58 = scmp.ne.s32.totalorder %s49, %s50
      %p59 = scmp.eq.s32.totalorder %s23, 0
      %p60 = por %p58, %p59
      %p61 = scmp.ne.s32.totalorder %s49, %s50
      %p62 = scmp.eq.s32.totalorder %s24, 1
      %p63 = por %p61, %p62
      %p65 = scmp.ne.s32.totalorder %s50, %s64
      %p66 = scmp.eq.s32.totalorder %s24, 0
      %p67 = por %p65, %p66
      %s68 = ssub.s32 %s18, %s25
      %p69 = scmp.eq.s32.totalorder %s68, 0
      %s71 = sadd.s32 %s70, 1
      %s72 = scalar_select %p69, %s70, %s71
      %p75 = pneg %p69
      %p76 = scmp.eq.s32.totalorder %s18, 1
      %p77 = por %p75, %p76
      %p78 = scmp.ne.s32.totalorder %s70, %s73
      %p79 = scmp.eq.s32.totalorder %s18, 0
      %p80 = por %p78, %p79
      %p81 = scmp.ne.s32.totalorder %s70, %s73
      %p82 = scmp.eq.s32.totalorder %s23, 1
      %p83 = por %p81, %p82
      %p84 = scmp.ne.s32.totalorder %s73, %s74
      %p85 = scmp.eq.s32.totalorder %s23, 0
      %p86 = por %p84, %p85
      %p87 = scmp.ne.s32.totalorder %s73, %s74
      %p88 = scmp.eq.s32.totalorder %s24, 1
      %p89 = por %p87, %p88
      %p91 = scmp.ne.s32.totalorder %s74, %s90
      %p92 = scmp.eq.s32.totalorder %s24, 0
      %p93 = por %p91, %p92
      %s95 = sadd.s32 %s94, 1
      %p98 = scmp.eq.s32.totalorder %s18, 1
      %p99 = scmp.ne.s32.totalorder %s94, %s96
      %p100 = scmp.eq.s32.totalorder %s18, 0
      %p101 = por %p99, %p100
      %p102 = scmp.ne.s32.totalorder %s94, %s96
      %p103 = scmp.eq.s32.totalorder %s23, 1
      %p104 = por %p102, %p103
      %p105 = scmp.ne.s32.totalorder %s96, %s97
      %p106 = scmp.eq.s32.totalorder %s23, 0
      %p107 = por %p105, %p106
      %p108 = scmp.ne.s32.totalorder %s96, %s97
      %p109 = scmp.eq.s32.totalorder %s24, 1
      %p110 = por %p108, %p109
      %p112 = scmp.ne.s32.totalorder %s97, %s111
      %p113 = scmp.eq.s32.totalorder %s24, 0
      %p114 = por %p112, %p113
      %s116 = sadd.s32 %s115, 1
      %p119 = scmp.eq.s32.totalorder %s18, 1
      %p120 = scmp.ne.s32.totalorder %s115, %s117
      %p121 = scmp.eq.s32.totalorder %s18, 0
      %p122 = por %p120, %p121
      %p123 = scmp.ne.s32.totalorder %s115, %s117
      %p124 = scmp.eq.s32.totalorder %s23, 1
      %p125 = por %p123, %p124
      %p126 = scmp.ne.s32.totalorder %s117, %s118
      %p127 = scmp.eq.s32.totalorder %s23, 0
      %p128 = por %p126, %p127
      %p129 = scmp.ne.s32.totalorder %s117, %s118
      %p130 = scmp.eq.s32.totalorder %s24, 1
      %p131 = por %p129, %p130
      %p133 = scmp.ne.s32.totalorder %s118, %s132
      %p134 = scmp.eq.s32.totalorder %s24, 0
      %p135 = por %p133, %p134
      %s137 = sadd.s32 %s136, 1
      %p140 = scmp.eq.s32.totalorder %s18, 1
      %p141 = scmp.ne.s32.totalorder %s136, %s138
      %p142 = scmp.eq.s32.totalorder %s18, 0
      %p143 = por %p141, %p142
      %p144 = scmp.ne.s32.totalorder %s136, %s138
      %p145 = scmp.eq.s32.totalorder %s23, 1
      %p146 = por %p144, %p145
      %p147 = scmp.ne.s32.totalorder %s138, %s139
      %p148 = scmp.eq.s32.totalorder %s23, 0
      %p149 = por %p147, %p148
      %p150 = scmp.ne.s32.totalorder %s138, %s139
      %p151 = scmp.eq.s32.totalorder %s24, 1
      %p152 = por %p150, %p151
      %p154 = scmp.ne.s32.totalorder %s139, %s153
      %p155 = scmp.eq.s32.totalorder %s24, 0
      %p156 = por %p154, %p155
      %s158 = sadd.s32 %s157, 1
      %p161 = scmp.eq.s32.totalorder %s18, 1
      %p162 = scmp.ne.s32.totalorder %s157, %s159
      %p163 = scmp.eq.s32.totalorder %s18, 0
      %p164 = por %p162, %p163
      %p165 = scmp.ne.s32.totalorder %s157, %s159
      %p166 = scmp.eq.s32.totalorder %s23, 1
      %p167 = por %p165, %p166
      %p168 = scmp.ne.s32.totalorder %s159, %s160
      %p169 = scmp.eq.s32.totalorder %s23, 0
      %p170 = por %p168, %p169
      %p171 = scmp.ne.s32.totalorder %s159, %s160
      %p172 = scmp.eq.s32.totalorder %s24, 1
      %p173 = por %p171, %p172
      %p175 = scmp.ne.s32.totalorder %s160, %s174
      %p176 = scmp.eq.s32.totalorder %s24, 0
      %p177 = por %p175, %p176
      %s179 = sadd.s32 %s178, 1
      %p182 = scmp.eq.s32.totalorder %s18, 1
      %p183 = scmp.ne.s32.totalorder %s178, %s180
      %p184 = scmp.eq.s32.totalorder %s18, 0
      %p185 = por %p183, %p184
      %p186 = scmp.ne.s32.totalorder %s178, %s180
      %p187 = scmp.eq.s32.totalorder %s23, 1
      %p188 = por %p186, %p187
      %p189 = scmp.ne.s32.totalorder %s180, %s181
      %p190 = scmp.eq.s32.totalorder %s23, 0
      %p191 = por %p189, %p190
      %p192 = scmp.ne.s32.totalorder %s180, %s181
      %p193 = scmp.eq.s32.totalorder %s24, 1
      %p194 = por %p192, %p193
      %p196 = scmp.ne.s32.totalorder %s181, %s195
      %p197 = scmp.eq.s32.totalorder %s24, 0
      %p198 = por %p196, %p197
      %p199 = scmp.le.s32.totalorder 1, %s18
      %p200 = scmp.lt.s32.totalorder %s18, 3
      %p201 = pnand %p199, %p200
      %p202 = pneg %p201
      // Predicated region
      $region9: #{tpu_custom_call.1} parent=5 // pred_check
        _
      $region10: #{tpu_custom_call.1} parent=5 // pred_check_branch
        %204 = sbr.rel (%p201) target = $region12
      $region11: #{tpu_custom_call.1} parent=5 // pred_region
        %s205 = ssub.s32 %s18, 1
        // Predicated region
        $region13: #{tpu_custom_call.1} parent=11 // pred_check
          %p206 = pneg %p39
        $region14: #{tpu_custom_call.1} parent=11 // pred_check_branch
          %208 = sbr.rel (%p206) target = $region16
        $region15: #{tpu_custom_call.1} parent=11 // pred_region
          %210 = vsyncadd [#allocation4], 0
          %s211 = sshll.u32 %s0, 4
          %s212 = int_to_ptr.hbm [resolvable:$true] %s211
          %s213 = sshll.u32 [#allocation3], 4
          %s214 = int_to_ptr.vmem [resolvable:$true] %s213
          %219 = dma.hbm_to_vmem [thread:$0]  %s212, 768, %s214, [#allocation4], 192, 192, 12
        $region16: #{tpu_custom_call.1} parent=11 // pred_fallthru
          _
        // Predicated region
        $region17: #{tpu_custom_call.1} parent=11 // pred_check
          %p220 = pneg %p60
        $region18: #{tpu_custom_call.1} parent=11 // pred_check_branch
          %222 = sbr.rel (%p220) target = $region20
        $region19: #{tpu_custom_call.1} parent=11 // pred_region
          %224 = vsyncadd [#allocation7], 0
          %s225 = sshll.u32 %s1, 4
          %s226 = int_to_ptr.hbm [resolvable:$true] %s225
          %s227 = sshll.u32 [#allocation6], 4
          %s228 = int_to_ptr.vmem [resolvable:$true] %s227
          %233 = dma.hbm_to_vmem [thread:$0]  %s226, 1024, %s228, [#allocation7], 256, 256, 16
        $region20: #{tpu_custom_call.1} parent=11 // pred_fallthru
          _
        // Predicated region
        $region21: #{tpu_custom_call.1} parent=11 // pred_check
          %p234 = pneg %p107
        $region22: #{tpu_custom_call.1} parent=11 // pred_check_branch
          %236 = sbr.rel (%p234) target = $region24
        $region23: #{tpu_custom_call.1} parent=11 // pred_region
          %238 = vsyncadd [#allocation7], 0
          %s240 = sshll.u32 %s3, 4
          %s241 = int_to_ptr.hbm [resolvable:$true] %s240
          %s242 = sshll.u32 [#allocation9], 4
          %s243 = int_to_ptr.vmem [resolvable:$true] %s242
          %245 = dma.hbm_to_vmem [thread:$0]  %s241, 16, %s243, [#allocation7]
        $region24: #{tpu_custom_call.1} parent=11 // pred_fallthru
          _
        // Predicated region
        $region25: #{tpu_custom_call.1} parent=11 // pred_check
          %p246 = pneg %p128
        $region26: #{tpu_custom_call.1} parent=11 // pred_check_branch
          %248 = sbr.rel (%p246) target = $region28
        $region27: #{tpu_custom_call.1} parent=11 // pred_region
          %250 = vsyncadd [#allocation11], 0
          %s252 = sshll.u32 %s4, 4
          %s253 = int_to_ptr.hbm [resolvable:$true] %s252
          %s254 = sshll.u32 [#allocation10], 4
          %s255 = int_to_ptr.vmem [resolvable:$true] %s254
          %257 = dma.hbm_to_vmem [thread:$0]  %s253, 16, %s255, [#allocation11]
        $region28: #{tpu_custom_call.1} parent=11 // pred_fallthru
          _
        // Predicated region
        $region29: #{tpu_custom_call.1} parent=11 // pred_check
          %p258 = pneg %p149
        $region30: #{tpu_custom_call.1} parent=11 // pred_check_branch
          %260 = sbr.rel (%p258) target = $region32
        $region31: #{tpu_custom_call.1} parent=11 // pred_region
          %262 = vsyncadd [#allocation11], 0
          %s264 = sshll.u32 %s5, 4
          %s265 = int_to_ptr.hbm [resolvable:$true] %s264
          %s266 = sshll.u32 [#allocation12], 4
          %s267 = int_to_ptr.vmem [resolvable:$true] %s266
          %269 = dma.hbm_to_vmem [thread:$0]  %s265, 16, %s267, [#allocation11]
        $region32: #{tpu_custom_call.1} parent=11 // pred_fallthru
          _
        // Predicated region
        $region33: #{tpu_custom_call.1} parent=11 // pred_check
          %p270 = pneg %p170
        $region34: #{tpu_custom_call.1} parent=11 // pred_check_branch
          %272 = sbr.rel (%p270) target = $region36
        $region35: #{tpu_custom_call.1} parent=11 // pred_region
          %274 = vsyncadd [#allocation14], 0
          %s276 = sshll.u32 %s6, 4
          %s277 = int_to_ptr.hbm [resolvable:$true] %s276
          %s278 = sshll.u32 [#allocation13], 4
          %s279 = int_to_ptr.vmem [resolvable:$true] %s278
          %281 = dma.hbm_to_vmem [thread:$0]  %s277, 16, %s279, [#allocation14]
        $region36: #{tpu_custom_call.1} parent=11 // pred_fallthru
          _
      $region12: #{tpu_custom_call.1} parent=5 // pred_fallthru
        _
      %p282 = scmp.lt.s32.totalorder %s18, 2
      // Predicated region
      $region37: #{tpu_custom_call.1} parent=5 // pred_check
        %p283 = pneg %p282
      $region38: #{tpu_custom_call.1} parent=5 // pred_check_branch
        %285 = sbr.rel (%p283) target = $region40
      $region39: #{tpu_custom_call.1} parent=5 // pred_region
        // Predicated region
        $region41: #{tpu_custom_call.1} parent=39 // pred_check
          %p286 = pneg %p80
        $region42: #{tpu_custom_call.1} parent=39 // pred_check_branch
          %288 = sbr.rel (%p286) target = $region44
        $region43: #{tpu_custom_call.1} parent=39 // pred_region
          %s289 = sand.u32 %s18, 1
          %s290 = scalar_lea.sflag [#allocation4], %s289
          %s291 = sand.u32 %s70, 1
          %s292 = smul.addr %s291, 1296
          %s293 = scalar_lea.vmem [#allocation8], %s292
          %295 = vsyncadd %s290, 0
          %s296 = smul.addr %s18, 324
          %s297 = smul.addr %s296, 4
          %s298 = scalar_lea.hbm %s2, %s297
          %s299 = sshll.u32 %s298, 4
          %s300 = int_to_ptr.hbm [resolvable:$true] %s299
          %s301 = sshll.u32 %s293, 4
          %s302 = int_to_ptr.vmem [resolvable:$true] %s301
          %307 = dma.hbm_to_vmem [thread:$0]  %s300, 20736, %s302, %s290, 192, 192, 12
        $region44: #{tpu_custom_call.1} parent=39 // pred_fallthru
          _
      $region40: #{tpu_custom_call.1} parent=5 // pred_fallthru
        _
      %p308 = scmp.le.s32.totalorder 1, %s18
      %p309 = scmp.lt.s32.totalorder %s18, 3
      %p310 = pnand %p308, %p309
      %p311 = pneg %p310
      // Predicated region
      $region45: #{tpu_custom_call.1} parent=5 // pred_check
        _
      $region46: #{tpu_custom_call.1} parent=5 // pred_check_branch
        %313 = sbr.rel (%p310) target = $region48
      $region47: #{tpu_custom_call.1} parent=5 // pred_region
        %s314 = ssub.s32 %s18, 1
        // Predicated region
        $region49: #{tpu_custom_call.1} parent=47 // pred_check
          %p315 = pneg %p39
        $region50: #{tpu_custom_call.1} parent=47 // pred_check_branch
          %317 = sbr.rel (%p315) target = $region52
        $region51: #{tpu_custom_call.1} parent=47 // pred_region
          %319 = dma.done [#allocation4], 768
        $region52: #{tpu_custom_call.1} parent=47 // pred_fallthru
          _
        // Predicated region
        $region53: #{tpu_custom_call.1} parent=47 // pred_check
          %p320 = pneg %p60
        $region54: #{tpu_custom_call.1} parent=47 // pred_check_branch
          %322 = sbr.rel (%p320) target = $region56
        $region55: #{tpu_custom_call.1} parent=47 // pred_region
          %324 = dma.done [#allocation7], 1024
        $region56: #{tpu_custom_call.1} parent=47 // pred_fallthru
          _
        %s325 = sand.u32 %s23, 1
        %s326 = scalar_lea.sflag [#allocation4], %s325
        %s327 = sand.u32 %s73, 1
        %s328 = smul.addr %s327, 1296
        %s329 = scalar_lea.vmem [#allocation8], %s328
        // Predicated region
        $region57: #{tpu_custom_call.1} parent=47 // pred_check
          %p330 = pneg %p86
        $region58: #{tpu_custom_call.1} parent=47 // pred_check_branch
          %332 = sbr.rel (%p330) target = $region60
        $region59: #{tpu_custom_call.1} parent=47 // pred_region
          %334 = dma.done %s326, 20736
        $region60: #{tpu_custom_call.1} parent=47 // pred_fallthru
          _
        // Predicated region
        $region61: #{tpu_custom_call.1} parent=47 // pred_check
          %p335 = pneg %p107
        $region62: #{tpu_custom_call.1} parent=47 // pred_check_branch
          %337 = sbr.rel (%p335) target = $region64
        $region63: #{tpu_custom_call.1} parent=47 // pred_region
          %339 = dma.done [#allocation7], 16
        $region64: #{tpu_custom_call.1} parent=47 // pred_fallthru
          _
        // Predicated region
        $region65: #{tpu_custom_call.1} parent=47 // pred_check
          %p340 = pneg %p128
        $region66: #{tpu_custom_call.1} parent=47 // pred_check_branch
          %342 = sbr.rel (%p340) target = $region68
        $region67: #{tpu_custom_call.1} parent=47 // pred_region
          %344 = dma.done [#allocation11], 16
        $region68: #{tpu_custom_call.1} parent=47 // pred_fallthru
          _
        // Predicated region
        $region69: #{tpu_custom_call.1} parent=47 // pred_check
          %p345 = pneg %p149
        $region70: #{tpu_custom_call.1} parent=47 // pred_check_branch
          %347 = sbr.rel (%p345) target = $region72
        $region71: #{tpu_custom_call.1} parent=47 // pred_region
          %349 = dma.done [#allocation11], 16
        $region72: #{tpu_custom_call.1} parent=47 // pred_fallthru
          _
        // Predicated region
        $region73: #{tpu_custom_call.1} parent=47 // pred_check
          %p350 = pneg %p170
        $region74: #{tpu_custom_call.1} parent=47 // pred_check_branch
          %352 = sbr.rel (%p350) target = $region76
        $region75: #{tpu_custom_call.1} parent=47 // pred_region
          %354 = dma.done [#allocation14], 16
        $region76: #{tpu_custom_call.1} parent=47 // pred_fallthru
          _
        %p355 = pneg %p39
        %p356 = pneg %p36
        %p357 = pneg %p60
        %p358 = pneg %p57
        %s359 = sand.u32 %s23, 1
        %s360 = scalar_lea.sflag [#allocation4], %s359
        %s361 = sand.u32 %s73, 1
        %s362 = smul.addr %s361, 1296
        %s363 = scalar_lea.vmem [#allocation8], %s362
        %p364 = pneg %p86
        %p365 = pneg %p83
        %p366 = pneg %p107
        %p367 = pneg %p104
        %p368 = pneg %p128
        %p369 = pneg %p125
        %p370 = pneg %p149
        %p371 = pneg %p146
        %p372 = pneg %p170
        %p373 = pneg %p167
        %p374 = pneg %p191
        %p375 = pneg %p188
        %v377 = vlaneseq
        %v378 = vshrl.u32 %v377, 7
        %v379 = vadd.s32 %v378, 8
        %v380 = vadd.s32 %v378, 16
        %v381 = vadd.s32 %v378, 24
        %v382 = vlaneseq
        %v383 = vand.u32 %v382, 127
        %vm384 = vcmp.lt.s32.totalorder %v378, 0
        %v385 = vsub.s32 0, %v378
        %v386 = vsel %vm384, %v385, %v378
        %v387 = vshrl.u32 %v386, 4
        %v388 = vand.u32 %v386, 15
        %v389 = vsub.s32 0, %v388
        %v390 = vsel %vm384, %v389, %v388
        %vm391 = vcmp.lt.s32.totalorder %v379, 0
        %v392 = vsub.s32 0, %v379
        %v393 = vsel %vm391, %v392, %v379
        %v394 = vshrl.u32 %v393, 4
        %v395 = vand.u32 %v393, 15
        %v396 = vsub.s32 0, %v395
        %v397 = vsel %vm391, %v396, %v395
        %vm398 = vcmp.lt.s32.totalorder %v380, 0
        %v399 = vsub.s32 0, %v380
        %v400 = vsel %vm398, %v399, %v380
        %v401 = vshrl.u32 %v400, 4
        %v402 = vand.u32 %v400, 15
        %v403 = vsub.s32 0, %v402
        %v404 = vsel %vm398, %v403, %v402
        %vm405 = vcmp.lt.s32.totalorder %v381, 0
        %v406 = vsub.s32 0, %v381
        %v407 = vsel %vm405, %v406, %v381
        %v408 = vshrl.u32 %v407, 4
        %v409 = vand.u32 %v407, 15
        %v410 = vsub.s32 0, %v409
        %v411 = vsel %vm405, %v410, %v409
        %vm412 = vcmp.ne.s32.totalorder %v390, 0
        %vm413 = vcmp.ne.s32.totalorder %v397, 0
        %vm414 = vcmp.ne.s32.totalorder %v404, 0
        %vm415 = vcmp.ne.s32.totalorder %v411, 0
        %vm416 = vcmp.lt.s32.totalorder %v390, 0
        %vm417 = vcmp.lt.s32.totalorder %v397, 0
        %vm418 = vcmp.lt.s32.totalorder %v404, 0
        %vm419 = vcmp.lt.s32.totalorder %v411, 0
        %vm420 = vmand %vm416, %vm412
        %vm421 = vmand %vm417, %vm413
        %vm422 = vmand %vm418, %vm414
        %vm423 = vmand %vm419, %vm415
        %v424 = vadd.s32 %v390, 16
        %v425 = vadd.s32 %v397, 16
        %v426 = vadd.s32 %v404, 16
        %v427 = vadd.s32 %v411, 16
        %v428 = vsel %vm420, %v424, %v390
        %v429 = vsel %vm421, %v425, %v397
        %v430 = vsel %vm422, %v426, %v404
        %v431 = vsel %vm423, %v427, %v411
        %v432 = vsub.s32 %v378, 1
        %v433 = vsub.s32 %v379, 1
        %v434 = vsub.s32 %v380, 1
        %v435 = vsub.s32 %v381, 1
        %vm436 = vcmp.eq.s32.totalorder %v383, %v432
        %vm437 = vcmp.eq.s32.totalorder %v383, %v433
        %vm438 = vcmp.eq.s32.totalorder %v383, %v434
        %vm439 = vcmp.eq.s32.totalorder %v383, %v435
        %vm440 = vcmp.ne.s32.totalorder %v428, 0
        %vm441 = vcmp.ne.s32.totalorder %v429, 0
        %vm442 = vcmp.ne.s32.totalorder %v430, 0
        %vm443 = vcmp.ne.s32.totalorder %v431, 0
        %vm444 = vmand %vm436, %vm440
        %vm445 = vmand %vm437, %vm441
        %vm446 = vmand %vm438, %vm442
        %vm447 = vmand %vm439, %vm443
        %v448 = vsel %vm444, 1, 0
        %v449 = vsel %vm445, 1, 0
        %v450 = vsel %vm446, 1, 0
        %v451 = vsel %vm447, 1, 0
        %v452 = vcvt.s32.f32 %v448
        %v453 = vcvt.s32.f32 %v449
        %v454 = vcvt.s32.f32 %v450
        %v455 = vcvt.s32.f32 %v451
        %v456 = vadd.s32 %v378, 1
        %v457 = vadd.s32 %v379, 1
        %v458 = vadd.s32 %v380, 1
        %v459 = vadd.s32 %v381, 1
        %vm460 = vcmp.eq.s32.totalorder %v383, %v456
        %vm461 = vcmp.eq.s32.totalorder %v383, %v457
        %vm462 = vcmp.eq.s32.totalorder %v383, %v458
        %vm463 = vcmp.eq.s32.totalorder %v383, %v459
        %vm464 = vcmp.ne.s32.totalorder %v428, 15
        %vm465 = vcmp.ne.s32.totalorder %v429, 15
        %vm466 = vcmp.ne.s32.totalorder %v430, 15
        %vm467 = vcmp.ne.s32.totalorder %v431, 15
        %vm468 = vmand %vm460, %vm464
        %vm469 = vmand %vm461, %vm465
        %vm470 = vmand %vm462, %vm466
        %vm471 = vmand %vm463, %vm467
        %v472 = vsel %vm468, 1, 0
        %v473 = vsel %vm469, 1, 0
        %v474 = vsel %vm470, 1, 0
        %v475 = vsel %vm471, 1, 0
        %v476 = vcvt.s32.f32 %v472
        %v477 = vcvt.s32.f32 %v473
        %v478 = vcvt.s32.f32 %v474
        %v479 = vcvt.s32.f32 %v475
        %p480 = scmp.eq.s32.totalorder %s23, 0
        // Predicated region
        $region77: #{tpu_custom_call.1} parent=47 // pred_check
          %p481 = pneg %p480
        $region78: #{tpu_custom_call.1} parent=47 // pred_check_branch
          %483 = sbr.rel (%p481) target = $region80
        $region79: #{tpu_custom_call.1} parent=47 // pred_region
          %v484 = vld [vmem:[#allocation3] sm:$0xff]
          %v485 = vld [vmem:[#allocation3 + $0x8] sm:$0xf]
          %v486 = vld [vmem:[#allocation3 + $0xc] sm:$0xff]
          %v487 = vld [vmem:[#allocation3 + $0x14] sm:$0xf]
          %v488 = vld [vmem:[#allocation3 + $0x18] sm:$0xff]
          %v489 = vld [vmem:[#allocation3 + $0x20] sm:$0xf]
          %v490 = vld [vmem:[#allocation3 + $0x24] sm:$0xff]
          %v491 = vld [vmem:[#allocation3 + $0x2c] sm:$0xf]
          %s492 = scalar_lea.vmem %s329, 432 [#allocation8]
          %v493 = vld [vmem:[%s492] sm:$0xff]
          %v494 = vld [vmem:[%s492 + $0x8] sm:$0xf]
          %v495 = vld [vmem:[%s492 + $0xc] sm:$0xff]
          %v496 = vld [vmem:[%s492 + $0x14] sm:$0xf]
          %v497 = vld [vmem:[%s492 + $0x18] sm:$0xff]
          %v498 = vld [vmem:[%s492 + $0x20] sm:$0xf]
          %v499 = vld [vmem:[%s492 + $0x24] sm:$0xff]
          %v500 = vld [vmem:[%s492 + $0x2c] sm:$0xf]
          %v501 = vld [vmem:[%s492 + $0x30] sm:$0xff]
          %v502 = vld [vmem:[%s492 + $0x38] sm:$0xf]
          %v503 = vld [vmem:[%s492 + $0x3c] sm:$0xff]
          %v504 = vld [vmem:[%s492 + $0x44] sm:$0xf]
          %v505 = vld [vmem:[%s492 + $0x48] sm:$0xff]
          %v506 = vld [vmem:[%s492 + $0x50] sm:$0xf]
          %v507 = vld [vmem:[%s492 + $0x54] sm:$0xff]
          %v508 = vld [vmem:[%s492 + $0x5c] sm:$0xf]
          %v509 = vld [vmem:[%s492 + $0x60] sm:$0xff]
          %v510 = vld [vmem:[%s492 + $0x68] sm:$0xf]
          %v511 = vld [vmem:[%s492 + $0x6c] sm:$0xff]
          %v512 = vld [vmem:[%s492 + $0x74] sm:$0xf]
          %v513 = vld [vmem:[%s492 + $0x78] sm:$0xff]
          %v514 = vld [vmem:[%s492 + $0x80] sm:$0xf]
          %v515 = vld [vmem:[%s492 + $0x84] sm:$0xff]
          %v516 = vld [vmem:[%s492 + $0x8c] sm:$0xf]
          %v517 = vld [vmem:[%s492 + $0x90] sm:$0xff]
          %v518 = vld [vmem:[%s492 + $0x98] sm:$0xf]
          %v519 = vld [vmem:[%s492 + $0x9c] sm:$0xff]
          %v520 = vld [vmem:[%s492 + $0xa4] sm:$0xf]
          %v521 = vld [vmem:[%s492 + $0xa8] sm:$0xff]
          %v522 = vld [vmem:[%s492 + $0xb0] sm:$0xf]
          %v523 = vld [vmem:[%s492 + $0xb4] sm:$0xff]
          %v524 = vld [vmem:[%s492 + $0xbc] sm:$0xf]
          %v525 = vld [vmem:[%s492 + $0xc0] sm:$0xff]
          %v526 = vld [vmem:[%s492 + $0xc8] sm:$0xf]
          %v527 = vld [vmem:[%s492 + $0xcc] sm:$0xff]
          %v528 = vld [vmem:[%s492 + $0xd4] sm:$0xf]
          %v529 = vld [vmem:[%s492 + $0xd8] sm:$0xff]
          %v530 = vld [vmem:[%s492 + $0xe0] sm:$0xf]
          %v531 = vld [vmem:[%s492 + $0xe4] sm:$0xff]
          %v532 = vld [vmem:[%s492 + $0xec] sm:$0xf]
          %v533 = vld [vmem:[%s492 + $0xf0] sm:$0xff]
          %v534 = vld [vmem:[%s492 + $0xf8] sm:$0xf]
          %v535 = vld [vmem:[%s492 + $0xfc] sm:$0xff]
          %v536 = vld [vmem:[%s492 + $0x104] sm:$0xf]
          %v537 = vld [vmem:[%s492 + $0x108] sm:$0xff]
          %v538 = vld [vmem:[%s492 + $0x110] sm:$0xf]
          %v539 = vld [vmem:[%s492 + $0x114] sm:$0xff]
          %v540 = vld [vmem:[%s492 + $0x11c] sm:$0xf]
          %v541 = vld [vmem:[%s492 + $0x120] sm:$0xff]
          %v542 = vld [vmem:[%s492 + $0x128] sm:$0xf]
          %v543 = vld [vmem:[%s492 + $0x12c] sm:$0xff]
          %v544 = vld [vmem:[%s492 + $0x134] sm:$0xf]
          %v545 = vld [vmem:[%s492 + $0x138] sm:$0xff]
          %v546 = vld [vmem:[%s492 + $0x140] sm:$0xf]
          %v547 = vld [vmem:[%s492 + $0x144] sm:$0xff]
          %v548 = vld [vmem:[%s492 + $0x14c] sm:$0xf]
          %v549 = vld [vmem:[%s492 + $0x150] sm:$0xff]
          %v550 = vld [vmem:[%s492 + $0x158] sm:$0xf]
          %v551 = vld [vmem:[%s492 + $0x15c] sm:$0xff]
          %v552 = vld [vmem:[%s492 + $0x164] sm:$0xf]
          %v553 = vld [vmem:[%s492 + $0x168] sm:$0xff]
          %v554 = vld [vmem:[%s492 + $0x170] sm:$0xf]
          %v555 = vld [vmem:[%s492 + $0x174] sm:$0xff]
          %v556 = vld [vmem:[%s492 + $0x17c] sm:$0xf]
          %v557 = vld [vmem:[%s492 + $0x180] sm:$0xff]
          %v558 = vld [vmem:[%s492 + $0x188] sm:$0xf]
          %v559 = vld [vmem:[%s492 + $0x18c] sm:$0xff]
          %v560 = vld [vmem:[%s492 + $0x194] sm:$0xf]
          %v561 = vld [vmem:[%s492 + $0x198] sm:$0xff]
          %v562 = vld [vmem:[%s492 + $0x1a0] sm:$0xf]
          %v563 = vld [vmem:[%s492 + $0x1a4] sm:$0xff]
          %v564 = vld [vmem:[%s492 + $0x1ac] sm:$0xf]
          %v565 = vld [vmem:[%s329] sm:$0xff]
          %v566 = vld [vmem:[%s329 + $0x8] sm:$0xf]
          %v567 = vld [vmem:[%s329 + $0xc] sm:$0xff]
          %v568 = vld [vmem:[%s329 + $0x14] sm:$0xf]
          %v569 = vld [vmem:[%s329 + $0x18] sm:$0xff]
          %v570 = vld [vmem:[%s329 + $0x20] sm:$0xf]
          %v571 = vld [vmem:[%s329 + $0x24] sm:$0xff]
          %v572 = vld [vmem:[%s329 + $0x2c] sm:$0xf]
          %v573 = vld [vmem:[%s329 + $0x30] sm:$0xff]
          %v574 = vld [vmem:[%s329 + $0x38] sm:$0xf]
          %v575 = vld [vmem:[%s329 + $0x3c] sm:$0xff]
          %v576 = vld [vmem:[%s329 + $0x44] sm:$0xf]
          %v577 = vld [vmem:[%s329 + $0x48] sm:$0xff]
          %v578 = vld [vmem:[%s329 + $0x50] sm:$0xf]
          %v579 = vld [vmem:[%s329 + $0x54] sm:$0xff]
          %v580 = vld [vmem:[%s329 + $0x5c] sm:$0xf]
          %v581 = vld [vmem:[%s329 + $0x60] sm:$0xff]
          %v582 = vld [vmem:[%s329 + $0x68] sm:$0xf]
          %v583 = vld [vmem:[%s329 + $0x6c] sm:$0xff]
          %v584 = vld [vmem:[%s329 + $0x74] sm:$0xf]
          %v585 = vld [vmem:[%s329 + $0x78] sm:$0xff]
          %v586 = vld [vmem:[%s329 + $0x80] sm:$0xf]
          %v587 = vld [vmem:[%s329 + $0x84] sm:$0xff]
          %v588 = vld [vmem:[%s329 + $0x8c] sm:$0xf]
          %v589 = vld [vmem:[%s329 + $0x90] sm:$0xff]
          %v590 = vld [vmem:[%s329 + $0x98] sm:$0xf]
          %v591 = vld [vmem:[%s329 + $0x9c] sm:$0xff]
          %v592 = vld [vmem:[%s329 + $0xa4] sm:$0xf]
          %v593 = vld [vmem:[%s329 + $0xa8] sm:$0xff]
          %v594 = vld [vmem:[%s329 + $0xb0] sm:$0xf]
          %v595 = vld [vmem:[%s329 + $0xb4] sm:$0xff]
          %v596 = vld [vmem:[%s329 + $0xbc] sm:$0xf]
          %v597 = vld [vmem:[%s329 + $0xc0] sm:$0xff]
          %v598 = vld [vmem:[%s329 + $0xc8] sm:$0xf]
          %v599 = vld [vmem:[%s329 + $0xcc] sm:$0xff]
          %v600 = vld [vmem:[%s329 + $0xd4] sm:$0xf]
          %v601 = vld [vmem:[%s329 + $0xd8] sm:$0xff]
          %v602 = vld [vmem:[%s329 + $0xe0] sm:$0xf]
          %v603 = vld [vmem:[%s329 + $0xe4] sm:$0xff]
          %v604 = vld [vmem:[%s329 + $0xec] sm:$0xf]
          %v605 = vld [vmem:[%s329 + $0xf0] sm:$0xff]
          %v606 = vld [vmem:[%s329 + $0xf8] sm:$0xf]
          %v607 = vld [vmem:[%s329 + $0xfc] sm:$0xff]
          %v608 = vld [vmem:[%s329 + $0x104] sm:$0xf]
          %v609 = vld [vmem:[%s329 + $0x108] sm:$0xff]
          %v610 = vld [vmem:[%s329 + $0x110] sm:$0xf]
          %v611 = vld [vmem:[%s329 + $0x114] sm:$0xff]
          %v612 = vld [vmem:[%s329 + $0x11c] sm:$0xf]
          %v613 = vld [vmem:[%s329 + $0x120] sm:$0xff]
          %v614 = vld [vmem:[%s329 + $0x128] sm:$0xf]
          %v615 = vld [vmem:[%s329 + $0x12c] sm:$0xff]
          %v616 = vld [vmem:[%s329 + $0x134] sm:$0xf]
          %v617 = vld [vmem:[%s329 + $0x138] sm:$0xff]
          %v618 = vld [vmem:[%s329 + $0x140] sm:$0xf]
          %v619 = vld [vmem:[%s329 + $0x144] sm:$0xff]
          %v620 = vld [vmem:[%s329 + $0x14c] sm:$0xf]
          %v621 = vld [vmem:[%s329 + $0x150] sm:$0xff]
          %v622 = vld [vmem:[%s329 + $0x158] sm:$0xf]
          %v623 = vld [vmem:[%s329 + $0x15c] sm:$0xff]
          %v624 = vld [vmem:[%s329 + $0x164] sm:$0xf]
          %v625 = vld [vmem:[%s329 + $0x168] sm:$0xff]
          %v626 = vld [vmem:[%s329 + $0x170] sm:$0xf]
          %v627 = vld [vmem:[%s329 + $0x174] sm:$0xff]
          %v628 = vld [vmem:[%s329 + $0x17c] sm:$0xf]
          %v629 = vld [vmem:[%s329 + $0x180] sm:$0xff]
          %v630 = vld [vmem:[%s329 + $0x188] sm:$0xf]
          %v631 = vld [vmem:[%s329 + $0x18c] sm:$0xff]
          %v632 = vld [vmem:[%s329 + $0x194] sm:$0xf]
          %v633 = vld [vmem:[%s329 + $0x198] sm:$0xff]
          %v634 = vld [vmem:[%s329 + $0x1a0] sm:$0xf]
          %v635 = vld [vmem:[%s329 + $0x1a4] sm:$0xff]
          %v636 = vld [vmem:[%s329 + $0x1ac] sm:$0xf]
          %v645 = vunpack.c.l.b16 %v484
          %v646 = vunpack.c.h.b16 %v484
          %v647 = vunpack.c.l.b16 %v485
          %v648 = vunpack.c.l.b16 %v486
          %v649 = vunpack.c.h.b16 %v486
          %v650 = vunpack.c.l.b16 %v487
          %v651 = vunpack.c.l.b16 %v488
          %v652 = vunpack.c.h.b16 %v488
          %v653 = vunpack.c.l.b16 %v489
          %v654 = vunpack.c.l.b16 %v490
          %v655 = vunpack.c.h.b16 %v490
          %v656 = vunpack.c.l.b16 %v491
          %v657 = vpack.c.b16 %v648, %v645
          %v658 = vpack.c.b16 %v649, %v646
          %v659 = vpack.c.b16 %v650, %v647
          %v660 = vpack.c.b16 %v654, %v651
          %v661 = vpack.c.b16 %v655, %v652
          %v662 = vpack.c.b16 %v656, %v653
          %v739 = vunpack.c.l.b16 %v565
          %v740 = vunpack.c.h.b16 %v565
          %v741 = vunpack.c.l.b16 %v566
          %v742 = vunpack.c.l.b16 %v567
          %v743 = vunpack.c.h.b16 %v567
          %v744 = vunpack.c.l.b16 %v568
          %v745 = vunpack.c.l.b16 %v569
          %v746 = vunpack.c.h.b16 %v569
          %v747 = vunpack.c.l.b16 %v570
          %v748 = vunpack.c.l.b16 %v571
          %v749 = vunpack.c.h.b16 %v571
          %v750 = vunpack.c.l.b16 %v572
          %v751 = vunpack.c.l.b16 %v573
          %v752 = vunpack.c.h.b16 %v573
          %v753 = vunpack.c.l.b16 %v574
          %v754 = vunpack.c.l.b16 %v575
          %v755 = vunpack.c.h.b16 %v575
          %v756 = vunpack.c.l.b16 %v576
          %v757 = vunpack.c.l.b16 %v577
          %v758 = vunpack.c.h.b16 %v577
          %v759 = vunpack.c.l.b16 %v578
          %v760 = vunpack.c.l.b16 %v579
          %v761 = vunpack.c.h.b16 %v579
          %v762 = vunpack.c.l.b16 %v580
          %v763 = vunpack.c.l.b16 %v581
          %v764 = vunpack.c.h.b16 %v581
          %v765 = vunpack.c.l.b16 %v582
          %v766 = vunpack.c.l.b16 %v583
          %v767 = vunpack.c.h.b16 %v583
          %v768 = vunpack.c.l.b16 %v584
          %v769 = vunpack.c.l.b16 %v585
          %v770 = vunpack.c.h.b16 %v585
          %v771 = vunpack.c.l.b16 %v586
          %v772 = vunpack.c.l.b16 %v587
          %v773 = vunpack.c.h.b16 %v587
          %v774 = vunpack.c.l.b16 %v588
          %v775 = vunpack.c.l.b16 %v589
          %v776 = vunpack.c.h.b16 %v589
          %v777 = vunpack.c.l.b16 %v590
          %v778 = vunpack.c.l.b16 %v591
          %v779 = vunpack.c.h.b16 %v591
          %v780 = vunpack.c.l.b16 %v592
          %v781 = vunpack.c.l.b16 %v593
          %v782 = vunpack.c.h.b16 %v593
          %v783 = vunpack.c.l.b16 %v594
          %v784 = vunpack.c.l.b16 %v595
          %v785 = vunpack.c.h.b16 %v595
          %v786 = vunpack.c.l.b16 %v596
          %v787 = vunpack.c.l.b16 %v597
          %v788 = vunpack.c.h.b16 %v597
          %v789 = vunpack.c.l.b16 %v598
          %v790 = vunpack.c.l.b16 %v599
          %v791 = vunpack.c.h.b16 %v599
          %v792 = vunpack.c.l.b16 %v600
          %v793 = vunpack.c.l.b16 %v601
          %v794 = vunpack.c.h.b16 %v601
          %v795 = vunpack.c.l.b16 %v602
          %v796 = vunpack.c.l.b16 %v603
          %v797 = vunpack.c.h.b16 %v603
          %v798 = vunpack.c.l.b16 %v604
          %v799 = vunpack.c.l.b16 %v605
          %v800 = vunpack.c.h.b16 %v605
          %v801 = vunpack.c.l.b16 %v606
          %v802 = vunpack.c.l.b16 %v607
          %v803 = vunpack.c.h.b16 %v607
          %v804 = vunpack.c.l.b16 %v608
          %v805 = vunpack.c.l.b16 %v609
          %v806 = vunpack.c.h.b16 %v609
          %v807 = vunpack.c.l.b16 %v610
          %v808 = vunpack.c.l.b16 %v611
          %v809 = vunpack.c.h.b16 %v611
          %v810 = vunpack.c.l.b16 %v612
          %v811 = vunpack.c.l.b16 %v613
          %v812 = vunpack.c.h.b16 %v613
          %v813 = vunpack.c.l.b16 %v614
          %v814 = vunpack.c.l.b16 %v615
          %v815 = vunpack.c.h.b16 %v615
          %v816 = vunpack.c.l.b16 %v616
          %v817 = vunpack.c.l.b16 %v617
          %v818 = vunpack.c.h.b16 %v617
          %v819 = vunpack.c.l.b16 %v618
          %v820 = vunpack.c.l.b16 %v619
          %v821 = vunpack.c.h.b16 %v619
          %v822 = vunpack.c.l.b16 %v620
          %v823 = vunpack.c.l.b16 %v621
          %v824 = vunpack.c.h.b16 %v621
          %v825 = vunpack.c.l.b16 %v622
          %v826 = vunpack.c.l.b16 %v623
          %v827 = vunpack.c.h.b16 %v623
          %v828 = vunpack.c.l.b16 %v624
          %v829 = vunpack.c.l.b16 %v625
          %v830 = vunpack.c.h.b16 %v625
          %v831 = vunpack.c.l.b16 %v626
          %v832 = vunpack.c.l.b16 %v627
          %v833 = vunpack.c.h.b16 %v627
          %v834 = vunpack.c.l.b16 %v628
          %v835 = vunpack.c.l.b16 %v629
          %v836 = vunpack.c.h.b16 %v629
          %v837 = vunpack.c.l.b16 %v630
          %v838 = vunpack.c.l.b16 %v631
          %v839 = vunpack.c.h.b16 %v631
          %v840 = vunpack.c.l.b16 %v632
          %v841 = vunpack.c.l.b16 %v633
          %v842 = vunpack.c.h.b16 %v633
          %v843 = vunpack.c.l.b16 %v634
          %v844 = vunpack.c.l.b16 %v635
          %v845 = vunpack.c.h.b16 %v635
          %v846 = vunpack.c.l.b16 %v636
          %v847 = vpack.c.b16 %v742, %v739
          %v848 = vpack.c.b16 %v743, %v740
          %v849 = vpack.c.b16 %v744, %v741
          %v850 = vpack.c.b16 %v748, %v745
          %v851 = vpack.c.b16 %v749, %v746
          %v852 = vpack.c.b16 %v750, %v747
          %v853 = vpack.c.b16 %v754, %v751
          %v854 = vpack.c.b16 %v755, %v752
          %v855 = vpack.c.b16 %v756, %v753
          %v856 = vpack.c.b16 %v760, %v757
          %v857 = vpack.c.b16 %v761, %v758
          %v858 = vpack.c.b16 %v762, %v759
          %v859 = vpack.c.b16 %v766, %v763
          %v860 = vpack.c.b16 %v767, %v764
          %v861 = vpack.c.b16 %v768, %v765
          %v862 = vpack.c.b16 %v772, %v769
          %v863 = vpack.c.b16 %v773, %v770
          %v864 = vpack.c.b16 %v774, %v771
          %v865 = vpack.c.b16 %v778, %v775
          %v866 = vpack.c.b16 %v779, %v776
          %v867 = vpack.c.b16 %v780, %v777
          %v868 = vpack.c.b16 %v784, %v781
          %v869 = vpack.c.b16 %v785, %v782
          %v870 = vpack.c.b16 %v786, %v783
          %v871 = vpack.c.b16 %v790, %v787
          %v872 = vpack.c.b16 %v791, %v788
          %v873 = vpack.c.b16 %v792, %v789
          %v874 = vpack.c.b16 %v796, %v793
          %v875 = vpack.c.b16 %v797, %v794
          %v876 = vpack.c.b16 %v798, %v795
          %v877 = vpack.c.b16 %v802, %v799
          %v878 = vpack.c.b16 %v803, %v800
          %v879 = vpack.c.b16 %v804, %v801
          %v880 = vpack.c.b16 %v808, %v805
          %v881 = vpack.c.b16 %v809, %v806
          %v882 = vpack.c.b16 %v810, %v807
          %v883 = vpack.c.b16 %v814, %v811
          %v884 = vpack.c.b16 %v815, %v812
          %v885 = vpack.c.b16 %v816, %v813
          %v886 = vpack.c.b16 %v820, %v817
          %v887 = vpack.c.b16 %v821, %v818
          %v888 = vpack.c.b16 %v822, %v819
          %v889 = vpack.c.b16 %v826, %v823
          %v890 = vpack.c.b16 %v827, %v824
          %v891 = vpack.c.b16 %v828, %v825
          %v892 = vpack.c.b16 %v832, %v829
          %v893 = vpack.c.b16 %v833, %v830
          %v894 = vpack.c.b16 %v834, %v831
          %v895 = vpack.c.b16 %v838, %v835
          %v896 = vpack.c.b16 %v839, %v836
          %v897 = vpack.c.b16 %v840, %v837
          %v898 = vpack.c.b16 %v844, %v841
          %v899 = vpack.c.b16 %v845, %v842
          %v900 = vpack.c.b16 %v846, %v843
          %vm955 = vcmask 261120
          %v957 = vsel %vm955, %v659, 0
          %v960 = vsel %vm955, %v662, 0
          %962 = vmatpush.bf16.msra.mxu0 %v868
          %963 = vmatpush.bf16.msra.mxu0 %v865
          %964 = vmatpush.bf16.msra.mxu0 %v862
          %965 = vmatpush.bf16.msra.mxu0 %v859
          %966 = vmatpush.bf16.msra.mxu0 %v856
          %967 = vmatpush.bf16.msra.mxu0 %v853
          %968 = vmatpush.bf16.msra.mxu0 %v850
          %969 = vmatpush.bf16.msra.mxu0 %v847
          %970 = vmatmul.bf16.gmra.mxu0 %v657
          %v971 = vpop.f32.mrf.mxu0
          %v972 = vadd.f32 0.0, %v971
          %v973 = vpop.f32.mrf.mxu0
          %v974 = vadd.f32 0.0, %v973
          %975 = vmatmul.bf16.gmra.mxu0 %v660
          %v976 = vpop.f32.mrf.mxu0
          %v977 = vadd.f32 0.0, %v976
          %v978 = vpop.f32.mrf.mxu0
          %v979 = vadd.f32 0.0, %v978
          %980 = vdwg.mxu0
          %981 = vmatpush.bf16.msra.mxu0 %v892
          %982 = vmatpush.bf16.msra.mxu0 %v889
          %983 = vmatpush.bf16.msra.mxu0 %v886
          %984 = vmatpush.bf16.msra.mxu0 %v883
          %985 = vmatpush.bf16.msra.mxu0 %v880
          %986 = vmatpush.bf16.msra.mxu0 %v877
          %987 = vmatpush.bf16.msra.mxu0 %v874
          %988 = vmatpush.bf16.msra.mxu0 %v871
          %989 = vmatmul.bf16.gmra.mxu0 %v658
          %v990 = vpop.f32.mrf.mxu0
          %v991 = vadd.f32 %v972, %v990
          %v992 = vpop.f32.mrf.mxu0
          %v993 = vadd.f32 %v974, %v992
          %994 = vmatmul.bf16.gmra.mxu0 %v661
          %v995 = vpop.f32.mrf.mxu0
          %v996 = vadd.f32 %v977, %v995
          %v997 = vpop.f32.mrf.mxu0
          %v998 = vadd.f32 %v979, %v997
          %999 = vdwg.mxu0
          %1000 = vmatpush.bf16.msra.mxu0 0
          %1001 = vmatpush.bf16.msra.mxu0 0
          %1002 = vmatpush.bf16.msra.mxu0 0
          %1003 = vmatpush.bf16.msra.mxu0 0
          %1004 = vmatpush.bf16.msra.mxu0 0
          %1005 = vmatpush.bf16.msra.mxu0 0
          %1006 = vmatpush.bf16.msra.mxu0 %v898
          %1007 = vmatpush.bf16.msra.mxu0 %v895
          %1008 = vmatmul.bf16.gmra.mxu0 %v957
          %v1009 = vpop.f32.mrf.mxu0
          %v1010 = vadd.f32 %v991, %v1009
          %v1011 = vpop.f32.mrf.mxu0
          %v1012 = vadd.f32 %v993, %v1011
          %1013 = vmatmul.bf16.gmra.mxu0 %v960
          %v1014 = vpop.f32.mrf.mxu0
          %v1015 = vadd.f32 %v996, %v1014
          %v1016 = vpop.f32.mrf.mxu0
          %v1017 = vadd.f32 %v998, %v1016
          %1018 = vdwg.mxu0
          %1019 = vmatpush.bf16.msra.mxu0 %v869
          %1020 = vmatpush.bf16.msra.mxu0 %v866
          %1021 = vmatpush.bf16.msra.mxu0 %v863
          %1022 = vmatpush.bf16.msra.mxu0 %v860
          %1023 = vmatpush.bf16.msra.mxu0 %v857
          %1024 = vmatpush.bf16.msra.mxu0 %v854
          %1025 = vmatpush.bf16.msra.mxu0 %v851
          %1026 = vmatpush.bf16.msra.mxu0 %v848
          %1027 = vmatmul.bf16.gmra.mxu0 %v657
          %v1028 = vpop.f32.mrf.mxu0
          %v1029 = vadd.f32 0.0, %v1028
          %v1030 = vpop.f32.mrf.mxu0
          %v1031 = vadd.f32 0.0, %v1030
          %1032 = vmatmul.bf16.gmra.mxu0 %v660
          %v1033 = vpop.f32.mrf.mxu0
          %v1034 = vadd.f32 0.0, %v1033
          %v1035 = vpop.f32.mrf.mxu0
          %v1036 = vadd.f32 0.0, %v1035
          %1037 = vdwg.mxu0
          %1038 = vmatpush.bf16.msra.mxu0 %v893
          %1039 = vmatpush.bf16.msra.mxu0 %v890
          %1040 = vmatpush.bf16.msra.mxu0 %v887
          %1041 = vmatpush.bf16.msra.mxu0 %v884
          %1042 = vmatpush.bf16.msra.mxu0 %v881
          %1043 = vmatpush.bf16.msra.mxu0 %v878
          %1044 = vmatpush.bf16.msra.mxu0 %v875
          %1045 = vmatpush.bf16.msra.mxu0 %v872
          %1046 = vmatmul.bf16.gmra.mxu0 %v658
          %v1047 = vpop.f32.mrf.mxu0
          %v1048 = vadd.f32 %v1029, %v1047
          %v1049 = vpop.f32.mrf.mxu0
          %v1050 = vadd.f32 %v1031, %v1049
          %1051 = vmatmul.bf16.gmra.mxu0 %v661
          %v1052 = vpop.f32.mrf.mxu0
          %v1053 = vadd.f32 %v1034, %v1052
          %v1054 = vpop.f32.mrf.mxu0
          %v1055 = vadd.f32 %v1036, %v1054
          %1056 = vdwg.mxu0
          %1057 = vmatpush.bf16.msra.mxu0 0
          %1058 = vmatpush.bf16.msra.mxu0 0
          %1059 = vmatpush.bf16.msra.mxu0 0
          %1060 = vmatpush.bf16.msra.mxu0 0
          %1061 = vmatpush.bf16.msra.mxu0 0
          %1062 = vmatpush.bf16.msra.mxu0 0
          %1063 = vmatpush.bf16.msra.mxu0 %v899
          %1064 = vmatpush.bf16.msra.mxu0 %v896
          %1065 = vmatmul.bf16.gmra.mxu0 %v957
          %v1066 = vpop.f32.mrf.mxu0
          %v1067 = vadd.f32 %v1048, %v1066
          %v1068 = vpop.f32.mrf.mxu0
          %v1069 = vadd.f32 %v1050, %v1068
          %1070 = vmatmul.bf16.gmra.mxu0 %v960
          %v1071 = vpop.f32.mrf.mxu0
          %v1072 = vadd.f32 %v1053, %v1071
          %v1073 = vpop.f32.mrf.mxu0
          %v1074 = vadd.f32 %v1055, %v1073
          %1075 = vdwg.mxu0
          %1076 = vmatpush.bf16.msra.mxu0 %v870
          %1077 = vmatpush.bf16.msra.mxu0 %v867
          %1078 = vmatpush.bf16.msra.mxu0 %v864
          %1079 = vmatpush.bf16.msra.mxu0 %v861
          %1080 = vmatpush.bf16.msra.mxu0 %v858
          %1081 = vmatpush.bf16.msra.mxu0 %v855
          %1082 = vmatpush.bf16.msra.mxu0 %v852
          %1083 = vmatpush.bf16.msra.mxu0 %v849
          %1084 = vmatmul.bf16.gmra.mxu0 %v657
          %v1085 = vpop.f32.mrf.mxu0
          %v1086 = vadd.f32 0.0, %v1085
          %v1087 = vpop.f32.mrf.mxu0
          %v1088 = vadd.f32 0.0, %v1087
          %1089 = vmatmul.bf16.gmra.mxu0 %v660
          %v1090 = vpop.f32.mrf.mxu0
          %v1091 = vadd.f32 0.0, %v1090
          %v1092 = vpop.f32.mrf.mxu0
          %v1093 = vadd.f32 0.0, %v1092
          %1094 = vdwg.mxu0
          %1095 = vmatpush.bf16.msra.mxu0 %v894
          %1096 = vmatpush.bf16.msra.mxu0 %v891
          %1097 = vmatpush.bf16.msra.mxu0 %v888
          %1098 = vmatpush.bf16.msra.mxu0 %v885
          %1099 = vmatpush.bf16.msra.mxu0 %v882
          %1100 = vmatpush.bf16.msra.mxu0 %v879
          %1101 = vmatpush.bf16.msra.mxu0 %v876
          %1102 = vmatpush.bf16.msra.mxu0 %v873
          %1103 = vmatmul.bf16.gmra.mxu0 %v658
          %v1104 = vpop.f32.mrf.mxu0
          %v1105 = vadd.f32 %v1086, %v1104
          %v1106 = vpop.f32.mrf.mxu0
          %v1107 = vadd.f32 %v1088, %v1106
          %1108 = vmatmul.bf16.gmra.mxu0 %v661
          %v1109 = vpop.f32.mrf.mxu0
          %v1110 = vadd.f32 %v1091, %v1109
          %v1111 = vpop.f32.mrf.mxu0
          %v1112 = vadd.f32 %v1093, %v1111
          %1113 = vdwg.mxu0
          %1114 = vmatpush.bf16.msra.mxu0 0
          %1115 = vmatpush.bf16.msra.mxu0 0
          %1116 = vmatpush.bf16.msra.mxu0 0
          %1117 = vmatpush.bf16.msra.mxu0 0
          %1118 = vmatpush.bf16.msra.mxu0 0
          %1119 = vmatpush.bf16.msra.mxu0 0
          %1120 = vmatpush.bf16.msra.mxu0 %v900
          %1121 = vmatpush.bf16.msra.mxu0 %v897
          %1122 = vmatmul.bf16.gmra.mxu0 %v957
          %v1123 = vpop.f32.mrf.mxu0
          %v1124 = vadd.f32 %v1105, %v1123
          %v1125 = vpop.f32.mrf.mxu0
          %v1126 = vadd.f32 %v1107, %v1125
          %1127 = vmatmul.bf16.gmra.mxu0 %v960
          %v1128 = vpop.f32.mrf.mxu0
          %v1129 = vadd.f32 %v1110, %v1128
          %v1130 = vpop.f32.mrf.mxu0
          %v1131 = vadd.f32 %v1112, %v1130
          %1132 = vdwg.mxu0
          %v1134 = vsel %vm955, %v452, 0
          %v1137 = vsel %vm955, %v453, 0
          %v1140 = vsel %vm955, %v454, 0
          %v1143 = vsel %vm955, %v455, 0
          %1145 = vmatpush.msra.mxu0 0.0
          %1146 = vmatpush.msra.mxu0 0.0
          %1147 = vmatpush.msra.mxu0 0.0
          %1148 = vmatpush.msra.mxu0 0.0
          %1149 = vmatpush.msra.mxu0 0.0
          %1150 = vmatpush.msra.mxu0 0.0
          %1151 = vmatpush.msra.mxu0 0.0
          %1152 = vmatpush.msra.mxu0 0.0
          %1153 = vmatpush.msra.mxu0 0.0
          %1154 = vmatpush.msra.mxu0 0.0
          %1155 = vmatpush.msra.mxu0 0.0
          %1156 = vmatpush.msra.mxu0 0.0
          %1157 = vmatpush.msra.mxu0 %v1017
          %1158 = vmatpush.msra.mxu0 %v1015
          %1159 = vmatpush.msra.mxu0 %v1012
          %1160 = vmatpush.msra.mxu0 %v1010
          %1161 = vmatmul.f32.gmra.mxu0 %v1134
          %v1162 = vpop.f32.mrf.mxu0
          %v1163 = vadd.f32 0.0, %v1162
          %1164 = vmatmul.f32.gmra.mxu0 %v1137
          %v1165 = vpop.f32.mrf.mxu0
          %v1166 = vadd.f32 0.0, %v1165
          %1167 = vmatmul.f32.gmra.mxu0 %v1140
          %v1168 = vpop.f32.mrf.mxu0
          %v1169 = vadd.f32 0.0, %v1168
          %1170 = vmatmul.f32.gmra.mxu0 %v1143
          %v1171 = vpop.f32.mrf.mxu0
          %v1172 = vadd.f32 0.0, %v1171
          %1173 = vdwg.mxu0
          %1174 = vmatpush.msra.mxu0 0.0
          %1175 = vmatpush.msra.mxu0 0.0
          %1176 = vmatpush.msra.mxu0 0.0
          %1177 = vmatpush.msra.mxu0 0.0
          %1178 = vmatpush.msra.mxu0 0.0
          %1179 = vmatpush.msra.mxu0 0.0
          %1180 = vmatpush.msra.mxu0 0.0
          %1181 = vmatpush.msra.mxu0 0.0
          %1182 = vmatpush.msra.mxu0 0.0
          %1183 = vmatpush.msra.mxu0 0.0
          %1184 = vmatpush.msra.mxu0 0.0
          %1185 = vmatpush.msra.mxu0 0.0
          %1186 = vmatpush.msra.mxu0 %v1074
          %1187 = vmatpush.msra.mxu0 %v1072
          %1188 = vmatpush.msra.mxu0 %v1069
          %1189 = vmatpush.msra.mxu0 %v1067
          %1190 = vmatmul.f32.gmra.mxu0 %v1134
          %v1191 = vpop.f32.mrf.mxu0
          %v1192 = vadd.f32 0.0, %v1191
          %1193 = vmatmul.f32.gmra.mxu0 %v1137
          %v1194 = vpop.f32.mrf.mxu0
          %v1195 = vadd.f32 0.0, %v1194
          %1196 = vmatmul.f32.gmra.mxu0 %v1140
          %v1197 = vpop.f32.mrf.mxu0
          %v1198 = vadd.f32 0.0, %v1197
          %1199 = vmatmul.f32.gmra.mxu0 %v1143
          %v1200 = vpop.f32.mrf.mxu0
          %v1201 = vadd.f32 0.0, %v1200
          %1202 = vdwg.mxu0
          %1203 = vmatpush.msra.mxu0 0.0
          %1204 = vmatpush.msra.mxu0 0.0
          %1205 = vmatpush.msra.mxu0 0.0
          %1206 = vmatpush.msra.mxu0 0.0
          %1207 = vmatpush.msra.mxu0 0.0
          %1208 = vmatpush.msra.mxu0 0.0
          %1209 = vmatpush.msra.mxu0 0.0
          %1210 = vmatpush.msra.mxu0 0.0
          %1211 = vmatpush.msra.mxu0 0.0
          %1212 = vmatpush.msra.mxu0 0.0
          %1213 = vmatpush.msra.mxu0 0.0
          %1214 = vmatpush.msra.mxu0 0.0
          %1215 = vmatpush.msra.mxu0 %v1131
          %1216 = vmatpush.msra.mxu0 %v1129
          %1217 = vmatpush.msra.mxu0 %v1126
          %1218 = vmatpush.msra.mxu0 %v1124
          %1219 = vmatmul.f32.gmra.mxu0 %v1134
          %v1220 = vpop.f32.mrf.mxu0
          %v1221 = vadd.f32 0.0, %v1220
          %1222 = vmatmul.f32.gmra.mxu0 %v1137
          %v1223 = vpop.f32.mrf.mxu0
          %v1224 = vadd.f32 0.0, %v1223
          %1225 = vmatmul.f32.gmra.mxu0 %v1140
          %v1226 = vpop.f32.mrf.mxu0
          %v1227 = vadd.f32 0.0, %v1226
          %1228 = vmatmul.f32.gmra.mxu0 %v1143
          %v1229 = vpop.f32.mrf.mxu0
          %v1230 = vadd.f32 0.0, %v1229
          %1231 = vdwg.mxu0
          %v1304 = vunpack.c.l.b16 %v493
          %v1305 = vunpack.c.h.b16 %v493
          %v1306 = vunpack.c.l.b16 %v494
          %v1307 = vunpack.c.l.b16 %v495
          %v1308 = vunpack.c.h.b16 %v495
          %v1309 = vunpack.c.l.b16 %v496
          %v1310 = vunpack.c.l.b16 %v497
          %v1311 = vunpack.c.h.b16 %v497
          %v1312 = vunpack.c.l.b16 %v498
          %v1313 = vunpack.c.l.b16 %v499
          %v1314 = vunpack.c.h.b16 %v499
          %v1315 = vunpack.c.l.b16 %v500
          %v1316 = vunpack.c.l.b16 %v501
          %v1317 = vunpack.c.h.b16 %v501
          %v1318 = vunpack.c.l.b16 %v502
          %v1319 = vunpack.c.l.b16 %v503
          %v1320 = vunpack.c.h.b16 %v503
          %v1321 = vunpack.c.l.b16 %v504
          %v1322 = vunpack.c.l.b16 %v505
          %v1323 = vunpack.c.h.b16 %v505
          %v1324 = vunpack.c.l.b16 %v506
          %v1325 = vunpack.c.l.b16 %v507
          %v1326 = vunpack.c.h.b16 %v507
          %v1327 = vunpack.c.l.b16 %v508
          %v1328 = vunpack.c.l.b16 %v509
          %v1329 = vunpack.c.h.b16 %v509
          %v1330 = vunpack.c.l.b16 %v510
          %v1331 = vunpack.c.l.b16 %v511
          %v1332 = vunpack.c.h.b16 %v511
          %v1333 = vunpack.c.l.b16 %v512
          %v1334 = vunpack.c.l.b16 %v513
          %v1335 = vunpack.c.h.b16 %v513
          %v1336 = vunpack.c.l.b16 %v514
          %v1337 = vunpack.c.l.b16 %v515
          %v1338 = vunpack.c.h.b16 %v515
          %v1339 = vunpack.c.l.b16 %v516
          %v1340 = vunpack.c.l.b16 %v517
          %v1341 = vunpack.c.h.b16 %v517
          %v1342 = vunpack.c.l.b16 %v518
          %v1343 = vunpack.c.l.b16 %v519
          %v1344 = vunpack.c.h.b16 %v519
          %v1345 = vunpack.c.l.b16 %v520
          %v1346 = vunpack.c.l.b16 %v521
          %v1347 = vunpack.c.h.b16 %v521
          %v1348 = vunpack.c.l.b16 %v522
          %v1349 = vunpack.c.l.b16 %v523
          %v1350 = vunpack.c.h.b16 %v523
          %v1351 = vunpack.c.l.b16 %v524
          %v1352 = vunpack.c.l.b16 %v525
          %v1353 = vunpack.c.h.b16 %v525
          %v1354 = vunpack.c.l.b16 %v526
          %v1355 = vunpack.c.l.b16 %v527
          %v1356 = vunpack.c.h.b16 %v527
          %v1357 = vunpack.c.l.b16 %v528
          %v1358 = vunpack.c.l.b16 %v529
          %v1359 = vunpack.c.h.b16 %v529
          %v1360 = vunpack.c.l.b16 %v530
          %v1361 = vunpack.c.l.b16 %v531
          %v1362 = vunpack.c.h.b16 %v531
          %v1363 = vunpack.c.l.b16 %v532
          %v1364 = vunpack.c.l.b16 %v533
          %v1365 = vunpack.c.h.b16 %v533
          %v1366 = vunpack.c.l.b16 %v534
          %v1367 = vunpack.c.l.b16 %v535
          %v1368 = vunpack.c.h.b16 %v535
          %v1369 = vunpack.c.l.b16 %v536
          %v1370 = vunpack.c.l.b16 %v537
          %v1371 = vunpack.c.h.b16 %v537
          %v1372 = vunpack.c.l.b16 %v538
          %v1373 = vunpack.c.l.b16 %v539
          %v1374 = vunpack.c.h.b16 %v539
          %v1375 = vunpack.c.l.b16 %v540
          %v1376 = vunpack.c.l.b16 %v541
          %v1377 = vunpack.c.h.b16 %v541
          %v1378 = vunpack.c.l.b16 %v542
          %v1379 = vunpack.c.l.b16 %v543
          %v1380 = vunpack.c.h.b16 %v543
          %v1381 = vunpack.c.l.b16 %v544
          %v1382 = vunpack.c.l.b16 %v545
          %v1383 = vunpack.c.h.b16 %v545
          %v1384 = vunpack.c.l.b16 %v546
          %v1385 = vunpack.c.l.b16 %v547
          %v1386 = vunpack.c.h.b16 %v547
          %v1387 = vunpack.c.l.b16 %v548
          %v1388 = vunpack.c.l.b16 %v549
          %v1389 = vunpack.c.h.b16 %v549
          %v1390 = vunpack.c.l.b16 %v550
          %v1391 = vunpack.c.l.b16 %v551
          %v1392 = vunpack.c.h.b16 %v551
          %v1393 = vunpack.c.l.b16 %v552
          %v1394 = vunpack.c.l.b16 %v553
          %v1395 = vunpack.c.h.b16 %v553
          %v1396 = vunpack.c.l.b16 %v554
          %v1397 = vunpack.c.l.b16 %v555
          %v1398 = vunpack.c.h.b16 %v555
          %v1399 = vunpack.c.l.b16 %v556
          %v1400 = vunpack.c.l.b16 %v557
          %v1401 = vunpack.c.h.b16 %v557
          %v1402 = vunpack.c.l.b16 %v558
          %v1403 = vunpack.c.l.b16 %v559
          %v1404 = vunpack.c.h.b16 %v559
          %v1405 = vunpack.c.l.b16 %v560
          %v1406 = vunpack.c.l.b16 %v561
          %v1407 = vunpack.c.h.b16 %v561
          %v1408 = vunpack.c.l.b16 %v562
          %v1409 = vunpack.c.l.b16 %v563
          %v1410 = vunpack.c.h.b16 %v563
          %v1411 = vunpack.c.l.b16 %v564
          %v1412 = vpack.c.b16 %v1307, %v1304
          %v1413 = vpack.c.b16 %v1308, %v1305
          %v1414 = vpack.c.b16 %v1309, %v1306
          %v1415 = vpack.c.b16 %v1313, %v1310
          %v1416 = vpack.c.b16 %v1314, %v1311
          %v1417 = vpack.c.b16 %v1315, %v1312
          %v1418 = vpack.c.b16 %v1319, %v1316
          %v1419 = vpack.c.b16 %v1320, %v1317
          %v1420 = vpack.c.b16 %v1321, %v1318
          %v1421 = vpack.c.b16 %v1325, %v1322
          %v1422 = vpack.c.b16 %v1326, %v1323
          %v1423 = vpack.c.b16 %v1327, %v1324
          %v1424 = vpack.c.b16 %v1331, %v1328
          %v1425 = vpack.c.b16 %v1332, %v1329
          %v1426 = vpack.c.b16 %v1333, %v1330
          %v1427 = vpack.c.b16 %v1337, %v1334
          %v1428 = vpack.c.b16 %v1338, %v1335
          %v1429 = vpack.c.b16 %v1339, %v1336
          %v1430 = vpack.c.b16 %v1343, %v1340
          %v1431 = vpack.c.b16 %v1344, %v1341
          %v1432 = vpack.c.b16 %v1345, %v1342
          %v1433 = vpack.c.b16 %v1349, %v1346
          %v1434 = vpack.c.b16 %v1350, %v1347
          %v1435 = vpack.c.b16 %v1351, %v1348
          %v1436 = vpack.c.b16 %v1355, %v1352
          %v1437 = vpack.c.b16 %v1356, %v1353
          %v1438 = vpack.c.b16 %v1357, %v1354
          %v1439 = vpack.c.b16 %v1361, %v1358
          %v1440 = vpack.c.b16 %v1362, %v1359
          %v1441 = vpack.c.b16 %v1363, %v1360
          %v1442 = vpack.c.b16 %v1367, %v1364
          %v1443 = vpack.c.b16 %v1368, %v1365
          %v1444 = vpack.c.b16 %v1369, %v1366
          %v1445 = vpack.c.b16 %v1373, %v1370
          %v1446 = vpack.c.b16 %v1374, %v1371
          %v1447 = vpack.c.b16 %v1375, %v1372
          %v1448 = vpack.c.b16 %v1379, %v1376
          %v1449 = vpack.c.b16 %v1380, %v1377
          %v1450 = vpack.c.b16 %v1381, %v1378
          %v1451 = vpack.c.b16 %v1385, %v1382
          %v1452 = vpack.c.b16 %v1386, %v1383
          %v1453 = vpack.c.b16 %v1387, %v1384
          %v1454 = vpack.c.b16 %v1391, %v1388
          %v1455 = vpack.c.b16 %v1392, %v1389
          %v1456 = vpack.c.b16 %v1393, %v1390
          %v1457 = vpack.c.b16 %v1397, %v1394
          %v1458 = vpack.c.b16 %v1398, %v1395
          %v1459 = vpack.c.b16 %v1399, %v1396
          %v1460 = vpack.c.b16 %v1403, %v1400
          %v1461 = vpack.c.b16 %v1404, %v1401
          %v1462 = vpack.c.b16 %v1405, %v1402
          %v1463 = vpack.c.b16 %v1409, %v1406
          %v1464 = vpack.c.b16 %v1410, %v1407
          %v1465 = vpack.c.b16 %v1411, %v1408
          %1520 = vmatpush.bf16.msra.mxu0 %v1433
          %1521 = vmatpush.bf16.msra.mxu0 %v1430
          %1522 = vmatpush.bf16.msra.mxu0 %v1427
          %1523 = vmatpush.bf16.msra.mxu0 %v1424
          %1524 = vmatpush.bf16.msra.mxu0 %v1421
          %1525 = vmatpush.bf16.msra.mxu0 %v1418
          %1526 = vmatpush.bf16.msra.mxu0 %v1415
          %1527 = vmatpush.bf16.msra.mxu0 %v1412
          %1528 = vmatmul.bf16.gmra.mxu0 %v657
          %v1529 = vpop.f32.mrf.mxu0
          %v1530 = vadd.f32 %v1163, %v1529
          %v1531 = vpop.f32.mrf.mxu0
          %v1532 = vadd.f32 %v1166, %v1531
          %1533 = vmatmul.bf16.gmra.mxu0 %v660
          %v1534 = vpop.f32.mrf.mxu0
          %v1535 = vadd.f32 %v1169, %v1534
          %v1536 = vpop.f32.mrf.mxu0
          %v1537 = vadd.f32 %v1172, %v1536
          %1538 = vdwg.mxu0
          %1539 = vmatpush.bf16.msra.mxu0 %v1457
          %1540 = vmatpush.bf16.msra.mxu0 %v1454
          %1541 = vmatpush.bf16.msra.mxu0 %v1451
          %1542 = vmatpush.bf16.msra.mxu0 %v1448
          %1543 = vmatpush.bf16.msra.mxu0 %v1445
          %1544 = vmatpush.bf16.msra.mxu0 %v1442
          %1545 = vmatpush.bf16.msra.mxu0 %v1439
          %1546 = vmatpush.bf16.msra.mxu0 %v1436
          %1547 = vmatmul.bf16.gmra.mxu0 %v658
          %v1548 = vpop.f32.mrf.mxu0
          %v1549 = vadd.f32 %v1530, %v1548
          %v1550 = vpop.f32.mrf.mxu0
          %v1551 = vadd.f32 %v1532, %v1550
          %1552 = vmatmul.bf16.gmra.mxu0 %v661
          %v1553 = vpop.f32.mrf.mxu0
          %v1554 = vadd.f32 %v1535, %v1553
          %v1555 = vpop.f32.mrf.mxu0
          %v1556 = vadd.f32 %v1537, %v1555
          %1557 = vdwg.mxu0
          %1558 = vmatpush.bf16.msra.mxu0 0
          %1559 = vmatpush.bf16.msra.mxu0 0
          %1560 = vmatpush.bf16.msra.mxu0 0
          %1561 = vmatpush.bf16.msra.mxu0 0
          %1562 = vmatpush.bf16.msra.mxu0 0
          %1563 = vmatpush.bf16.msra.mxu0 0
          %1564 = vmatpush.bf16.msra.mxu0 %v1463
          %1565 = vmatpush.bf16.msra.mxu0 %v1460
          %1566 = vmatmul.bf16.gmra.mxu0 %v957
          %v1567 = vpop.f32.mrf.mxu0
          %v1568 = vadd.f32 %v1549, %v1567
          %v1569 = vpop.f32.mrf.mxu0
          %v1570 = vadd.f32 %v1551, %v1569
          %1571 = vmatmul.bf16.gmra.mxu0 %v960
          %v1572 = vpop.f32.mrf.mxu0
          %v1573 = vadd.f32 %v1554, %v1572
          %v1574 = vpop.f32.mrf.mxu0
          %v1575 = vadd.f32 %v1556, %v1574
          %1576 = vdwg.mxu0
          %1577 = vmatpush.bf16.msra.mxu0 %v1434
          %1578 = vmatpush.bf16.msra.mxu0 %v1431
          %1579 = vmatpush.bf16.msra.mxu0 %v1428
          %1580 = vmatpush.bf16.msra.mxu0 %v1425
          %1581 = vmatpush.bf16.msra.mxu0 %v1422
          %1582 = vmatpush.bf16.msra.mxu0 %v1419
          %1583 = vmatpush.bf16.msra.mxu0 %v1416
          %1584 = vmatpush.bf16.msra.mxu0 %v1413
          %1585 = vmatmul.bf16.gmra.mxu0 %v657
          %v1586 = vpop.f32.mrf.mxu0
          %v1587 = vadd.f32 %v1192, %v1586
          %v1588 = vpop.f32.mrf.mxu0
          %v1589 = vadd.f32 %v1195, %v1588
          %1590 = vmatmul.bf16.gmra.mxu0 %v660
          %v1591 = vpop.f32.mrf.mxu0
          %v1592 = vadd.f32 %v1198, %v1591
          %v1593 = vpop.f32.mrf.mxu0
          %v1594 = vadd.f32 %v1201, %v1593
          %1595 = vdwg.mxu0
          %1596 = vmatpush.bf16.msra.mxu0 %v1458
          %1597 = vmatpush.bf16.msra.mxu0 %v1455
          %1598 = vmatpush.bf16.msra.mxu0 %v1452
          %1599 = vmatpush.bf16.msra.mxu0 %v1449
          %1600 = vmatpush.bf16.msra.mxu0 %v1446
          %1601 = vmatpush.bf16.msra.mxu0 %v1443
          %1602 = vmatpush.bf16.msra.mxu0 %v1440
          %1603 = vmatpush.bf16.msra.mxu0 %v1437
          %1604 = vmatmul.bf16.gmra.mxu0 %v658
          %v1605 = vpop.f32.mrf.mxu0
          %v1606 = vadd.f32 %v1587, %v1605
          %v1607 = vpop.f32.mrf.mxu0
          %v1608 = vadd.f32 %v1589, %v1607
          %1609 = vmatmul.bf16.gmra.mxu0 %v661
          %v1610 = vpop.f32.mrf.mxu0
          %v1611 = vadd.f32 %v1592, %v1610
          %v1612 = vpop.f32.mrf.mxu0
          %v1613 = vadd.f32 %v1594, %v1612
          %1614 = vdwg.mxu0
          %1615 = vmatpush.bf16.msra.mxu0 0
          %1616 = vmatpush.bf16.msra.mxu0 0
          %1617 = vmatpush.bf16.msra.mxu0 0
          %1618 = vmatpush.bf16.msra.mxu0 0
          %1619 = vmatpush.bf16.msra.mxu0 0
          %1620 = vmatpush.bf16.msra.mxu0 0
          %1621 = vmatpush.bf16.msra.mxu0 %v1464
          %1622 = vmatpush.bf16.msra.mxu0 %v1461
          %1623 = vmatmul.bf16.gmra.mxu0 %v957
          %v1624 = vpop.f32.mrf.mxu0
          %v1625 = vadd.f32 %v1606, %v1624
          %v1626 = vpop.f32.mrf.mxu0
          %v1627 = vadd.f32 %v1608, %v1626
          %1628 = vmatmul.bf16.gmra.mxu0 %v960
          %v1629 = vpop.f32.mrf.mxu0
          %v1630 = vadd.f32 %v1611, %v1629
          %v1631 = vpop.f32.mrf.mxu0
          %v1632 = vadd.f32 %v1613, %v1631
          %1633 = vdwg.mxu0
          %1634 = vmatpush.bf16.msra.mxu0 %v1435
          %1635 = vmatpush.bf16.msra.mxu0 %v1432
          %1636 = vmatpush.bf16.msra.mxu0 %v1429
          %1637 = vmatpush.bf16.msra.mxu0 %v1426
          %1638 = vmatpush.bf16.msra.mxu0 %v1423
          %1639 = vmatpush.bf16.msra.mxu0 %v1420
          %1640 = vmatpush.bf16.msra.mxu0 %v1417
          %1641 = vmatpush.bf16.msra.mxu0 %v1414
          %1642 = vmatmul.bf16.gmra.mxu0 %v657
          %v1643 = vpop.f32.mrf.mxu0
          %v1644 = vadd.f32 %v1221, %v1643
          %v1645 = vpop.f32.mrf.mxu0
          %v1646 = vadd.f32 %v1224, %v1645
          %1647 = vmatmul.bf16.gmra.mxu0 %v660
          %v1648 = vpop.f32.mrf.mxu0
          %v1649 = vadd.f32 %v1227, %v1648
          %v1650 = vpop.f32.mrf.mxu0
          %v1651 = vadd.f32 %v1230, %v1650
          %1652 = vdwg.mxu0
          %1653 = vmatpush.bf16.msra.mxu0 %v1459
          %1654 = vmatpush.bf16.msra.mxu0 %v1456
          %1655 = vmatpush.bf16.msra.mxu0 %v1453
          %1656 = vmatpush.bf16.msra.mxu0 %v1450
          %1657 = vmatpush.bf16.msra.mxu0 %v1447
          %1658 = vmatpush.bf16.msra.mxu0 %v1444
          %1659 = vmatpush.bf16.msra.mxu0 %v1441
          %1660 = vmatpush.bf16.msra.mxu0 %v1438
          %1661 = vmatmul.bf16.gmra.mxu0 %v658
          %v1662 = vpop.f32.mrf.mxu0
          %v1663 = vadd.f32 %v1644, %v1662
          %v1664 = vpop.f32.mrf.mxu0
          %v1665 = vadd.f32 %v1646, %v1664
          %1666 = vmatmul.bf16.gmra.mxu0 %v661
          %v1667 = vpop.f32.mrf.mxu0
          %v1668 = vadd.f32 %v1649, %v1667
          %v1669 = vpop.f32.mrf.mxu0
          %v1670 = vadd.f32 %v1651, %v1669
          %1671 = vdwg.mxu0
          %1672 = vmatpush.bf16.msra.mxu0 0
          %1673 = vmatpush.bf16.msra.mxu0 0
          %1674 = vmatpush.bf16.msra.mxu0 0
          %1675 = vmatpush.bf16.msra.mxu0 0
          %1676 = vmatpush.bf16.msra.mxu0 0
          %1677 = vmatpush.bf16.msra.mxu0 0
          %1678 = vmatpush.bf16.msra.mxu0 %v1465
          %1679 = vmatpush.bf16.msra.mxu0 %v1462
          %1680 = vmatmul.bf16.gmra.mxu0 %v957
          %v1681 = vpop.f32.mrf.mxu0
          %v1682 = vadd.f32 %v1663, %v1681
          %v1683 = vpop.f32.mrf.mxu0
          %v1684 = vadd.f32 %v1665, %v1683
          %1685 = vmatmul.bf16.gmra.mxu0 %v960
          %v1686 = vpop.f32.mrf.mxu0
          %v1687 = vadd.f32 %v1668, %v1686
          %v1688 = vpop.f32.mrf.mxu0
          %v1689 = vadd.f32 %v1670, %v1688
          %1690 = vdwg.mxu0
          %s1691 = scalar_lea.vmem %s329, 864 [#allocation8]
          %v1692 = vld [vmem:[%s1691] sm:$0xff]
          %v1693 = vld [vmem:[%s1691 + $0x8] sm:$0xf]
          %v1694 = vld [vmem:[%s1691 + $0xc] sm:$0xff]
          %v1695 = vld [vmem:[%s1691 + $0x14] sm:$0xf]
          %v1696 = vld [vmem:[%s1691 + $0x18] sm:$0xff]
          %v1697 = vld [vmem:[%s1691 + $0x20] sm:$0xf]
          %v1698 = vld [vmem:[%s1691 + $0x24] sm:$0xff]
          %v1699 = vld [vmem:[%s1691 + $0x2c] sm:$0xf]
          %v1700 = vld [vmem:[%s1691 + $0x30] sm:$0xff]
          %v1701 = vld [vmem:[%s1691 + $0x38] sm:$0xf]
          %v1702 = vld [vmem:[%s1691 + $0x3c] sm:$0xff]
          %v1703 = vld [vmem:[%s1691 + $0x44] sm:$0xf]
          %v1704 = vld [vmem:[%s1691 + $0x48] sm:$0xff]
          %v1705 = vld [vmem:[%s1691 + $0x50] sm:$0xf]
          %v1706 = vld [vmem:[%s1691 + $0x54] sm:$0xff]
          %v1707 = vld [vmem:[%s1691 + $0x5c] sm:$0xf]
          %v1708 = vld [vmem:[%s1691 + $0x60] sm:$0xff]
          %v1709 = vld [vmem:[%s1691 + $0x68] sm:$0xf]
          %v1710 = vld [vmem:[%s1691 + $0x6c] sm:$0xff]
          %v1711 = vld [vmem:[%s1691 + $0x74] sm:$0xf]
          %v1712 = vld [vmem:[%s1691 + $0x78] sm:$0xff]
          %v1713 = vld [vmem:[%s1691 + $0x80] sm:$0xf]
          %v1714 = vld [vmem:[%s1691 + $0x84] sm:$0xff]
          %v1715 = vld [vmem:[%s1691 + $0x8c] sm:$0xf]
          %v1716 = vld [vmem:[%s1691 + $0x90] sm:$0xff]
          %v1717 = vld [vmem:[%s1691 + $0x98] sm:$0xf]
          %v1718 = vld [vmem:[%s1691 + $0x9c] sm:$0xff]
          %v1719 = vld [vmem:[%s1691 + $0xa4] sm:$0xf]
          %v1720 = vld [vmem:[%s1691 + $0xa8] sm:$0xff]
          %v1721 = vld [vmem:[%s1691 + $0xb0] sm:$0xf]
          %v1722 = vld [vmem:[%s1691 + $0xb4] sm:$0xff]
          %v1723 = vld [vmem:[%s1691 + $0xbc] sm:$0xf]
          %v1724 = vld [vmem:[%s1691 + $0xc0] sm:$0xff]
          %v1725 = vld [vmem:[%s1691 + $0xc8] sm:$0xf]
          %v1726 = vld [vmem:[%s1691 + $0xcc] sm:$0xff]
          %v1727 = vld [vmem:[%s1691 + $0xd4] sm:$0xf]
          %v1728 = vld [vmem:[%s1691 + $0xd8] sm:$0xff]
          %v1729 = vld [vmem:[%s1691 + $0xe0] sm:$0xf]
          %v1730 = vld [vmem:[%s1691 + $0xe4] sm:$0xff]
          %v1731 = vld [vmem:[%s1691 + $0xec] sm:$0xf]
          %v1732 = vld [vmem:[%s1691 + $0xf0] sm:$0xff]
          %v1733 = vld [vmem:[%s1691 + $0xf8] sm:$0xf]
          %v1734 = vld [vmem:[%s1691 + $0xfc] sm:$0xff]
          %v1735 = vld [vmem:[%s1691 + $0x104] sm:$0xf]
          %v1736 = vld [vmem:[%s1691 + $0x108] sm:$0xff]
          %v1737 = vld [vmem:[%s1691 + $0x110] sm:$0xf]
          %v1738 = vld [vmem:[%s1691 + $0x114] sm:$0xff]
          %v1739 = vld [vmem:[%s1691 + $0x11c] sm:$0xf]
          %v1740 = vld [vmem:[%s1691 + $0x120] sm:$0xff]
          %v1741 = vld [vmem:[%s1691 + $0x128] sm:$0xf]
          %v1742 = vld [vmem:[%s1691 + $0x12c] sm:$0xff]
          %v1743 = vld [vmem:[%s1691 + $0x134] sm:$0xf]
          %v1744 = vld [vmem:[%s1691 + $0x138] sm:$0xff]
          %v1745 = vld [vmem:[%s1691 + $0x140] sm:$0xf]
          %v1746 = vld [vmem:[%s1691 + $0x144] sm:$0xff]
          %v1747 = vld [vmem:[%s1691 + $0x14c] sm:$0xf]
          %v1748 = vld [vmem:[%s1691 + $0x150] sm:$0xff]
          %v1749 = vld [vmem:[%s1691 + $0x158] sm:$0xf]
          %v1750 = vld [vmem:[%s1691 + $0x15c] sm:$0xff]
          %v1751 = vld [vmem:[%s1691 + $0x164] sm:$0xf]
          %v1752 = vld [vmem:[%s1691 + $0x168] sm:$0xff]
          %v1753 = vld [vmem:[%s1691 + $0x170] sm:$0xf]
          %v1754 = vld [vmem:[%s1691 + $0x174] sm:$0xff]
          %v1755 = vld [vmem:[%s1691 + $0x17c] sm:$0xf]
          %v1756 = vld [vmem:[%s1691 + $0x180] sm:$0xff]
          %v1757 = vld [vmem:[%s1691 + $0x188] sm:$0xf]
          %v1758 = vld [vmem:[%s1691 + $0x18c] sm:$0xff]
          %v1759 = vld [vmem:[%s1691 + $0x194] sm:$0xf]
          %v1760 = vld [vmem:[%s1691 + $0x198] sm:$0xff]
          %v1761 = vld [vmem:[%s1691 + $0x1a0] sm:$0xf]
          %v1762 = vld [vmem:[%s1691 + $0x1a4] sm:$0xff]
          %v1763 = vld [vmem:[%s1691 + $0x1ac] sm:$0xf]
          %v1836 = vunpack.c.l.b16 %v1692
          %v1837 = vunpack.c.h.b16 %v1692
          %v1838 = vunpack.c.l.b16 %v1693
          %v1839 = vunpack.c.l.b16 %v1694
          %v1840 = vunpack.c.h.b16 %v1694
          %v1841 = vunpack.c.l.b16 %v1695
          %v1842 = vunpack.c.l.b16 %v1696
          %v1843 = vunpack.c.h.b16 %v1696
          %v1844 = vunpack.c.l.b16 %v1697
          %v1845 = vunpack.c.l.b16 %v1698
          %v1846 = vunpack.c.h.b16 %v1698
          %v1847 = vunpack.c.l.b16 %v1699
          %v1848 = vunpack.c.l.b16 %v1700
          %v1849 = vunpack.c.h.b16 %v1700
          %v1850 = vunpack.c.l.b16 %v1701
          %v1851 = vunpack.c.l.b16 %v1702
          %v1852 = vunpack.c.h.b16 %v1702
          %v1853 = vunpack.c.l.b16 %v1703
          %v1854 = vunpack.c.l.b16 %v1704
          %v1855 = vunpack.c.h.b16 %v1704
          %v1856 = vunpack.c.l.b16 %v1705
          %v1857 = vunpack.c.l.b16 %v1706
          %v1858 = vunpack.c.h.b16 %v1706
          %v1859 = vunpack.c.l.b16 %v1707
          %v1860 = vunpack.c.l.b16 %v1708
          %v1861 = vunpack.c.h.b16 %v1708
          %v1862 = vunpack.c.l.b16 %v1709
          %v1863 = vunpack.c.l.b16 %v1710
          %v1864 = vunpack.c.h.b16 %v1710
          %v1865 = vunpack.c.l.b16 %v1711
          %v1866 = vunpack.c.l.b16 %v1712
          %v1867 = vunpack.c.h.b16 %v1712
          %v1868 = vunpack.c.l.b16 %v1713
          %v1869 = vunpack.c.l.b16 %v1714
          %v1870 = vunpack.c.h.b16 %v1714
          %v1871 = vunpack.c.l.b16 %v1715
          %v1872 = vunpack.c.l.b16 %v1716
          %v1873 = vunpack.c.h.b16 %v1716
          %v1874 = vunpack.c.l.b16 %v1717
          %v1875 = vunpack.c.l.b16 %v1718
          %v1876 = vunpack.c.h.b16 %v1718
          %v1877 = vunpack.c.l.b16 %v1719
          %v1878 = vunpack.c.l.b16 %v1720
          %v1879 = vunpack.c.h.b16 %v1720
          %v1880 = vunpack.c.l.b16 %v1721
          %v1881 = vunpack.c.l.b16 %v1722
          %v1882 = vunpack.c.h.b16 %v1722
          %v1883 = vunpack.c.l.b16 %v1723
          %v1884 = vunpack.c.l.b16 %v1724
          %v1885 = vunpack.c.h.b16 %v1724
          %v1886 = vunpack.c.l.b16 %v1725
          %v1887 = vunpack.c.l.b16 %v1726
          %v1888 = vunpack.c.h.b16 %v1726
          %v1889 = vunpack.c.l.b16 %v1727
          %v1890 = vunpack.c.l.b16 %v1728
          %v1891 = vunpack.c.h.b16 %v1728
          %v1892 = vunpack.c.l.b16 %v1729
          %v1893 = vunpack.c.l.b16 %v1730
          %v1894 = vunpack.c.h.b16 %v1730
          %v1895 = vunpack.c.l.b16 %v1731
          %v1896 = vunpack.c.l.b16 %v1732
          %v1897 = vunpack.c.h.b16 %v1732
          %v1898 = vunpack.c.l.b16 %v1733
          %v1899 = vunpack.c.l.b16 %v1734
          %v1900 = vunpack.c.h.b16 %v1734
          %v1901 = vunpack.c.l.b16 %v1735
          %v1902 = vunpack.c.l.b16 %v1736
          %v1903 = vunpack.c.h.b16 %v1736
          %v1904 = vunpack.c.l.b16 %v1737
          %v1905 = vunpack.c.l.b16 %v1738
          %v1906 = vunpack.c.h.b16 %v1738
          %v1907 = vunpack.c.l.b16 %v1739
          %v1908 = vunpack.c.l.b16 %v1740
          %v1909 = vunpack.c.h.b16 %v1740
          %v1910 = vunpack.c.l.b16 %v1741
          %v1911 = vunpack.c.l.b16 %v1742
          %v1912 = vunpack.c.h.b16 %v1742
          %v1913 = vunpack.c.l.b16 %v1743
          %v1914 = vunpack.c.l.b16 %v1744
          %v1915 = vunpack.c.h.b16 %v1744
          %v1916 = vunpack.c.l.b16 %v1745
          %v1917 = vunpack.c.l.b16 %v1746
          %v1918 = vunpack.c.h.b16 %v1746
          %v1919 = vunpack.c.l.b16 %v1747
          %v1920 = vunpack.c.l.b16 %v1748
          %v1921 = vunpack.c.h.b16 %v1748
          %v1922 = vunpack.c.l.b16 %v1749
          %v1923 = vunpack.c.l.b16 %v1750
          %v1924 = vunpack.c.h.b16 %v1750
          %v1925 = vunpack.c.l.b16 %v1751
          %v1926 = vunpack.c.l.b16 %v1752
          %v1927 = vunpack.c.h.b16 %v1752
          %v1928 = vunpack.c.l.b16 %v1753
          %v1929 = vunpack.c.l.b16 %v1754
          %v1930 = vunpack.c.h.b16 %v1754
          %v1931 = vunpack.c.l.b16 %v1755
          %v1932 = vunpack.c.l.b16 %v1756
          %v1933 = vunpack.c.h.b16 %v1756
          %v1934 = vunpack.c.l.b16 %v1757
          %v1935 = vunpack.c.l.b16 %v1758
          %v1936 = vunpack.c.h.b16 %v1758
          %v1937 = vunpack.c.l.b16 %v1759
          %v1938 = vunpack.c.l.b16 %v1760
          %v1939 = vunpack.c.h.b16 %v1760
          %v1940 = vunpack.c.l.b16 %v1761
          %v1941 = vunpack.c.l.b16 %v1762
          %v1942 = vunpack.c.h.b16 %v1762
          %v1943 = vunpack.c.l.b16 %v1763
          %v1944 = vpack.c.b16 %v1839, %v1836
          %v1945 = vpack.c.b16 %v1840, %v1837
          %v1946 = vpack.c.b16 %v1841, %v1838
          %v1947 = vpack.c.b16 %v1845, %v1842
          %v1948 = vpack.c.b16 %v1846, %v1843
          %v1949 = vpack.c.b16 %v1847, %v1844
          %v1950 = vpack.c.b16 %v1851, %v1848
          %v1951 = vpack.c.b16 %v1852, %v1849
          %v1952 = vpack.c.b16 %v1853, %v1850
          %v1953 = vpack.c.b16 %v1857, %v1854
          %v1954 = vpack.c.b16 %v1858, %v1855
          %v1955 = vpack.c.b16 %v1859, %v1856
          %v1956 = vpack.c.b16 %v1863, %v1860
          %v1957 = vpack.c.b16 %v1864, %v1861
          %v1958 = vpack.c.b16 %v1865, %v1862
          %v1959 = vpack.c.b16 %v1869, %v1866
          %v1960 = vpack.c.b16 %v1870, %v1867
          %v1961 = vpack.c.b16 %v1871, %v1868
          %v1962 = vpack.c.b16 %v1875, %v1872
          %v1963 = vpack.c.b16 %v1876, %v1873
          %v1964 = vpack.c.b16 %v1877, %v1874
          %v1965 = vpack.c.b16 %v1881, %v1878
          %v1966 = vpack.c.b16 %v1882, %v1879
          %v1967 = vpack.c.b16 %v1883, %v1880
          %v1968 = vpack.c.b16 %v1887, %v1884
          %v1969 = vpack.c.b16 %v1888, %v1885
          %v1970 = vpack.c.b16 %v1889, %v1886
          %v1971 = vpack.c.b16 %v1893, %v1890
          %v1972 = vpack.c.b16 %v1894, %v1891
          %v1973 = vpack.c.b16 %v1895, %v1892
          %v1974 = vpack.c.b16 %v1899, %v1896
          %v1975 = vpack.c.b16 %v1900, %v1897
          %v1976 = vpack.c.b16 %v1901, %v1898
          %v1977 = vpack.c.b16 %v1905, %v1902
          %v1978 = vpack.c.b16 %v1906, %v1903
          %v1979 = vpack.c.b16 %v1907, %v1904
          %v1980 = vpack.c.b16 %v1911, %v1908
          %v1981 = vpack.c.b16 %v1912, %v1909
          %v1982 = vpack.c.b16 %v1913, %v1910
          %v1983 = vpack.c.b16 %v1917, %v1914
          %v1984 = vpack.c.b16 %v1918, %v1915
          %v1985 = vpack.c.b16 %v1919, %v1916
          %v1986 = vpack.c.b16 %v1923, %v1920
          %v1987 = vpack.c.b16 %v1924, %v1921
          %v1988 = vpack.c.b16 %v1925, %v1922
          %v1989 = vpack.c.b16 %v1929, %v1926
          %v1990 = vpack.c.b16 %v1930, %v1927
          %v1991 = vpack.c.b16 %v1931, %v1928
          %v1992 = vpack.c.b16 %v1935, %v1932
          %v1993 = vpack.c.b16 %v1936, %v1933
          %v1994 = vpack.c.b16 %v1937, %v1934
          %v1995 = vpack.c.b16 %v1941, %v1938
          %v1996 = vpack.c.b16 %v1942, %v1939
          %v1997 = vpack.c.b16 %v1943, %v1940
          %2052 = vmatpush.bf16.msra.mxu0 %v1965
          %2053 = vmatpush.bf16.msra.mxu0 %v1962
          %2054 = vmatpush.bf16.msra.mxu0 %v1959
          %2055 = vmatpush.bf16.msra.mxu0 %v1956
          %2056 = vmatpush.bf16.msra.mxu0 %v1953
          %2057 = vmatpush.bf16.msra.mxu0 %v1950
          %2058 = vmatpush.bf16.msra.mxu0 %v1947
          %2059 = vmatpush.bf16.msra.mxu0 %v1944
          %2060 = vmatmul.bf16.gmra.mxu0 %v657
          %v2061 = vpop.f32.mrf.mxu0
          %v2062 = vadd.f32 0.0, %v2061
          %v2063 = vpop.f32.mrf.mxu0
          %v2064 = vadd.f32 0.0, %v2063
          %2065 = vmatmul.bf16.gmra.mxu0 %v660
          %v2066 = vpop.f32.mrf.mxu0
          %v2067 = vadd.f32 0.0, %v2066
          %v2068 = vpop.f32.mrf.mxu0
          %v2069 = vadd.f32 0.0, %v2068
          %2070 = vdwg.mxu0
          %2071 = vmatpush.bf16.msra.mxu0 %v1989
          %2072 = vmatpush.bf16.msra.mxu0 %v1986
          %2073 = vmatpush.bf16.msra.mxu0 %v1983
          %2074 = vmatpush.bf16.msra.mxu0 %v1980
          %2075 = vmatpush.bf16.msra.mxu0 %v1977
          %2076 = vmatpush.bf16.msra.mxu0 %v1974
          %2077 = vmatpush.bf16.msra.mxu0 %v1971
          %2078 = vmatpush.bf16.msra.mxu0 %v1968
          %2079 = vmatmul.bf16.gmra.mxu0 %v658
          %v2080 = vpop.f32.mrf.mxu0
          %v2081 = vadd.f32 %v2062, %v2080
          %v2082 = vpop.f32.mrf.mxu0
          %v2083 = vadd.f32 %v2064, %v2082
          %2084 = vmatmul.bf16.gmra.mxu0 %v661
          %v2085 = vpop.f32.mrf.mxu0
          %v2086 = vadd.f32 %v2067, %v2085
          %v2087 = vpop.f32.mrf.mxu0
          %v2088 = vadd.f32 %v2069, %v2087
          %2089 = vdwg.mxu0
          %2090 = vmatpush.bf16.msra.mxu0 0
          %2091 = vmatpush.bf16.msra.mxu0 0
          %2092 = vmatpush.bf16.msra.mxu0 0
          %2093 = vmatpush.bf16.msra.mxu0 0
          %2094 = vmatpush.bf16.msra.mxu0 0
          %2095 = vmatpush.bf16.msra.mxu0 0
          %2096 = vmatpush.bf16.msra.mxu0 %v1995
          %2097 = vmatpush.bf16.msra.mxu0 %v1992
          %2098 = vmatmul.bf16.gmra.mxu0 %v957
          %v2099 = vpop.f32.mrf.mxu0
          %v2100 = vadd.f32 %v2081, %v2099
          %v2101 = vpop.f32.mrf.mxu0
          %v2102 = vadd.f32 %v2083, %v2101
          %2103 = vmatmul.bf16.gmra.mxu0 %v960
          %v2104 = vpop.f32.mrf.mxu0
          %v2105 = vadd.f32 %v2086, %v2104
          %v2106 = vpop.f32.mrf.mxu0
          %v2107 = vadd.f32 %v2088, %v2106
          %2108 = vdwg.mxu0
          %2109 = vmatpush.bf16.msra.mxu0 %v1966
          %2110 = vmatpush.bf16.msra.mxu0 %v1963
          %2111 = vmatpush.bf16.msra.mxu0 %v1960
          %2112 = vmatpush.bf16.msra.mxu0 %v1957
          %2113 = vmatpush.bf16.msra.mxu0 %v1954
          %2114 = vmatpush.bf16.msra.mxu0 %v1951
          %2115 = vmatpush.bf16.msra.mxu0 %v1948
          %2116 = vmatpush.bf16.msra.mxu0 %v1945
          %2117 = vmatmul.bf16.gmra.mxu0 %v657
          %v2118 = vpop.f32.mrf.mxu0
          %v2119 = vadd.f32 0.0, %v2118
          %v2120 = vpop.f32.mrf.mxu0
          %v2121 = vadd.f32 0.0, %v2120
          %2122 = vmatmul.bf16.gmra.mxu0 %v660
          %v2123 = vpop.f32.mrf.mxu0
          %v2124 = vadd.f32 0.0, %v2123
          %v2125 = vpop.f32.mrf.mxu0
          %v2126 = vadd.f32 0.0, %v2125
          %2127 = vdwg.mxu0
          %2128 = vmatpush.bf16.msra.mxu0 %v1990
          %2129 = vmatpush.bf16.msra.mxu0 %v1987
          %2130 = vmatpush.bf16.msra.mxu0 %v1984
          %2131 = vmatpush.bf16.msra.mxu0 %v1981
          %2132 = vmatpush.bf16.msra.mxu0 %v1978
          %2133 = vmatpush.bf16.msra.mxu0 %v1975
          %2134 = vmatpush.bf16.msra.mxu0 %v1972
          %2135 = vmatpush.bf16.msra.mxu0 %v1969
          %2136 = vmatmul.bf16.gmra.mxu0 %v658
          %v2137 = vpop.f32.mrf.mxu0
          %v2138 = vadd.f32 %v2119, %v2137
          %v2139 = vpop.f32.mrf.mxu0
          %v2140 = vadd.f32 %v2121, %v2139
          %2141 = vmatmul.bf16.gmra.mxu0 %v661
          %v2142 = vpop.f32.mrf.mxu0
          %v2143 = vadd.f32 %v2124, %v2142
          %v2144 = vpop.f32.mrf.mxu0
          %v2145 = vadd.f32 %v2126, %v2144
          %2146 = vdwg.mxu0
          %2147 = vmatpush.bf16.msra.mxu0 0
          %2148 = vmatpush.bf16.msra.mxu0 0
          %2149 = vmatpush.bf16.msra.mxu0 0
          %2150 = vmatpush.bf16.msra.mxu0 0
          %2151 = vmatpush.bf16.msra.mxu0 0
          %2152 = vmatpush.bf16.msra.mxu0 0
          %2153 = vmatpush.bf16.msra.mxu0 %v1996
          %2154 = vmatpush.bf16.msra.mxu0 %v1993
          %2155 = vmatmul.bf16.gmra.mxu0 %v957
          %v2156 = vpop.f32.mrf.mxu0
          %v2157 = vadd.f32 %v2138, %v2156
          %v2158 = vpop.f32.mrf.mxu0
          %v2159 = vadd.f32 %v2140, %v2158
          %2160 = vmatmul.bf16.gmra.mxu0 %v960
          %v2161 = vpop.f32.mrf.mxu0
          %v2162 = vadd.f32 %v2143, %v2161
          %v2163 = vpop.f32.mrf.mxu0
          %v2164 = vadd.f32 %v2145, %v2163
          %2165 = vdwg.mxu0
          %2166 = vmatpush.bf16.msra.mxu0 %v1967
          %2167 = vmatpush.bf16.msra.mxu0 %v1964
          %2168 = vmatpush.bf16.msra.mxu0 %v1961
          %2169 = vmatpush.bf16.msra.mxu0 %v1958
          %2170 = vmatpush.bf16.msra.mxu0 %v1955
          %2171 = vmatpush.bf16.msra.mxu0 %v1952
          %2172 = vmatpush.bf16.msra.mxu0 %v1949
          %2173 = vmatpush.bf16.msra.mxu0 %v1946
          %2174 = vmatmul.bf16.gmra.mxu0 %v657
          %v2175 = vpop.f32.mrf.mxu0
          %v2176 = vadd.f32 0.0, %v2175
          %v2177 = vpop.f32.mrf.mxu0
          %v2178 = vadd.f32 0.0, %v2177
          %2179 = vmatmul.bf16.gmra.mxu0 %v660
          %v2180 = vpop.f32.mrf.mxu0
          %v2181 = vadd.f32 0.0, %v2180
          %v2182 = vpop.f32.mrf.mxu0
          %v2183 = vadd.f32 0.0, %v2182
          %2184 = vdwg.mxu0
          %2185 = vmatpush.bf16.msra.mxu0 %v1991
          %2186 = vmatpush.bf16.msra.mxu0 %v1988
          %2187 = vmatpush.bf16.msra.mxu0 %v1985
          %2188 = vmatpush.bf16.msra.mxu0 %v1982
          %2189 = vmatpush.bf16.msra.mxu0 %v1979
          %2190 = vmatpush.bf16.msra.mxu0 %v1976
          %2191 = vmatpush.bf16.msra.mxu0 %v1973
          %2192 = vmatpush.bf16.msra.mxu0 %v1970
          %2193 = vmatmul.bf16.gmra.mxu0 %v658
          %v2194 = vpop.f32.mrf.mxu0
          %v2195 = vadd.f32 %v2176, %v2194
          %v2196 = vpop.f32.mrf.mxu0
          %v2197 = vadd.f32 %v2178, %v2196
          %2198 = vmatmul.bf16.gmra.mxu0 %v661
          %v2199 = vpop.f32.mrf.mxu0
          %v2200 = vadd.f32 %v2181, %v2199
          %v2201 = vpop.f32.mrf.mxu0
          %v2202 = vadd.f32 %v2183, %v2201
          %2203 = vdwg.mxu0
          %2204 = vmatpush.bf16.msra.mxu0 0
          %2205 = vmatpush.bf16.msra.mxu0 0
          %2206 = vmatpush.bf16.msra.mxu0 0
          %2207 = vmatpush.bf16.msra.mxu0 0
          %2208 = vmatpush.bf16.msra.mxu0 0
          %2209 = vmatpush.bf16.msra.mxu0 0
          %2210 = vmatpush.bf16.msra.mxu0 %v1997
          %2211 = vmatpush.bf16.msra.mxu0 %v1994
          %2212 = vmatmul.bf16.gmra.mxu0 %v957
          %v2213 = vpop.f32.mrf.mxu0
          %v2214 = vadd.f32 %v2195, %v2213
          %v2215 = vpop.f32.mrf.mxu0
          %v2216 = vadd.f32 %v2197, %v2215
          %2217 = vmatmul.bf16.gmra.mxu0 %v960
          %v2218 = vpop.f32.mrf.mxu0
          %v2219 = vadd.f32 %v2200, %v2218
          %v2220 = vpop.f32.mrf.mxu0
          %v2221 = vadd.f32 %v2202, %v2220
          %2222 = vdwg.mxu0
          %v2224 = vsel %vm955, %v476, 0
          %v2227 = vsel %vm955, %v477, 0
          %v2230 = vsel %vm955, %v478, 0
          %v2233 = vsel %vm955, %v479, 0
          %2235 = vmatpush.msra.mxu0 0.0
          %2236 = vmatpush.msra.mxu0 0.0
          %2237 = vmatpush.msra.mxu0 0.0
          %2238 = vmatpush.msra.mxu0 0.0
          %2239 = vmatpush.msra.mxu0 0.0
          %2240 = vmatpush.msra.mxu0 0.0
          %2241 = vmatpush.msra.mxu0 0.0
          %2242 = vmatpush.msra.mxu0 0.0
          %2243 = vmatpush.msra.mxu0 0.0
          %2244 = vmatpush.msra.mxu0 0.0
          %2245 = vmatpush.msra.mxu0 0.0
          %2246 = vmatpush.msra.mxu0 0.0
          %2247 = vmatpush.msra.mxu0 %v2107
          %2248 = vmatpush.msra.mxu0 %v2105
          %2249 = vmatpush.msra.mxu0 %v2102
          %2250 = vmatpush.msra.mxu0 %v2100
          %2251 = vmatmul.f32.gmra.mxu0 %v2224
          %v2252 = vpop.f32.mrf.mxu0
          %v2253 = vadd.f32 0.0, %v2252
          %2254 = vmatmul.f32.gmra.mxu0 %v2227
          %v2255 = vpop.f32.mrf.mxu0
          %v2256 = vadd.f32 0.0, %v2255
          %2257 = vmatmul.f32.gmra.mxu0 %v2230
          %v2258 = vpop.f32.mrf.mxu0
          %v2259 = vadd.f32 0.0, %v2258
          %2260 = vmatmul.f32.gmra.mxu0 %v2233
          %v2261 = vpop.f32.mrf.mxu0
          %v2262 = vadd.f32 0.0, %v2261
          %2263 = vdwg.mxu0
          %2264 = vmatpush.msra.mxu0 0.0
          %2265 = vmatpush.msra.mxu0 0.0
          %2266 = vmatpush.msra.mxu0 0.0
          %2267 = vmatpush.msra.mxu0 0.0
          %2268 = vmatpush.msra.mxu0 0.0
          %2269 = vmatpush.msra.mxu0 0.0
          %2270 = vmatpush.msra.mxu0 0.0
          %2271 = vmatpush.msra.mxu0 0.0
          %2272 = vmatpush.msra.mxu0 0.0
          %2273 = vmatpush.msra.mxu0 0.0
          %2274 = vmatpush.msra.mxu0 0.0
          %2275 = vmatpush.msra.mxu0 0.0
          %2276 = vmatpush.msra.mxu0 %v2164
          %2277 = vmatpush.msra.mxu0 %v2162
          %2278 = vmatpush.msra.mxu0 %v2159
          %2279 = vmatpush.msra.mxu0 %v2157
          %2280 = vmatmul.f32.gmra.mxu0 %v2224
          %v2281 = vpop.f32.mrf.mxu0
          %v2282 = vadd.f32 0.0, %v2281
          %2283 = vmatmul.f32.gmra.mxu0 %v2227
          %v2284 = vpop.f32.mrf.mxu0
          %v2285 = vadd.f32 0.0, %v2284
          %2286 = vmatmul.f32.gmra.mxu0 %v2230
          %v2287 = vpop.f32.mrf.mxu0
          %v2288 = vadd.f32 0.0, %v2287
          %2289 = vmatmul.f32.gmra.mxu0 %v2233
          %v2290 = vpop.f32.mrf.mxu0
          %v2291 = vadd.f32 0.0, %v2290
          %2292 = vdwg.mxu0
          %2293 = vmatpush.msra.mxu0 0.0
          %2294 = vmatpush.msra.mxu0 0.0
          %2295 = vmatpush.msra.mxu0 0.0
          %2296 = vmatpush.msra.mxu0 0.0
          %2297 = vmatpush.msra.mxu0 0.0
          %2298 = vmatpush.msra.mxu0 0.0
          %2299 = vmatpush.msra.mxu0 0.0
          %2300 = vmatpush.msra.mxu0 0.0
          %2301 = vmatpush.msra.mxu0 0.0
          %2302 = vmatpush.msra.mxu0 0.0
          %2303 = vmatpush.msra.mxu0 0.0
          %2304 = vmatpush.msra.mxu0 0.0
          %2305 = vmatpush.msra.mxu0 %v2221
          %2306 = vmatpush.msra.mxu0 %v2219
          %2307 = vmatpush.msra.mxu0 %v2216
          %2308 = vmatpush.msra.mxu0 %v2214
          %2309 = vmatmul.f32.gmra.mxu0 %v2224
          %v2310 = vpop.f32.mrf.mxu0
          %v2311 = vadd.f32 0.0, %v2310
          %2312 = vmatmul.f32.gmra.mxu0 %v2227
          %v2313 = vpop.f32.mrf.mxu0
          %v2314 = vadd.f32 0.0, %v2313
          %2315 = vmatmul.f32.gmra.mxu0 %v2230
          %v2316 = vpop.f32.mrf.mxu0
          %v2317 = vadd.f32 0.0, %v2316
          %2318 = vmatmul.f32.gmra.mxu0 %v2233
          %v2319 = vpop.f32.mrf.mxu0
          %v2320 = vadd.f32 0.0, %v2319
          %2321 = vdwg.mxu0
          %v2322 = vadd.f32 %v1568, %v2253
          %v2323 = vadd.f32 %v1625, %v2282
          %v2324 = vadd.f32 %v1682, %v2311
          %v2325 = vadd.f32 %v1570, %v2256
          %v2326 = vadd.f32 %v1627, %v2285
          %v2327 = vadd.f32 %v1684, %v2314
          %v2328 = vadd.f32 %v1573, %v2259
          %v2329 = vadd.f32 %v1630, %v2288
          %v2330 = vadd.f32 %v1687, %v2317
          %v2331 = vadd.f32 %v1575, %v2262
          %v2332 = vadd.f32 %v1632, %v2291
          %v2333 = vadd.f32 %v1689, %v2320
          %v2334 = vld [vmem:[#allocation9] sm:$0x1]
          %v2335 = vld [vmem:[#allocation10] sm:$0x1]
          %v2336 = vadd.s32 %v378, 32
          %v2337 = vadd.s32 %v378, 40
          %v2338 = vadd.s32 %v378, 48
          %v2339 = vadd.s32 %v378, 56
          %v2340 = vadd.s32 %v378, 64
          %v2341 = vadd.s32 %v378, 72
          %v2342 = vadd.s32 %v378, 80
          %v2343 = vadd.s32 %v378, 88
          %v2344 = vadd.s32 %v378, 96
          %v2345 = vadd.s32 %v378, 104
          %v2346 = vadd.s32 %v378, 112
          %v2347 = vadd.s32 %v378, 120
          %v2348 = vadd.s32 %v378, 128
          %v2349 = vadd.s32 %v378, 136
          %v2350 = vadd.s32 %v378, 144
          %v2351 = vadd.s32 %v378, 152
          %v2352 = vadd.s32 %v378, 160
          %v2353 = vadd.s32 %v378, 168
          %v2354 = vadd.s32 %v378, 176
          %v2355 = vadd.s32 %v378, 184
          %v2356 = vadd.s32 %v378, 192
          %v2357 = vadd.s32 %v378, 200
          %v2358 = vadd.s32 %v378, 208
          %v2359 = vadd.s32 %v378, 216
          %v2360 = vadd.s32 %v378, 224
          %v2361 = vadd.s32 %v378, 232
          %v2362 = vadd.s32 %v378, 240
          %v2363 = vadd.s32 %v378, 248
          %v2364 = vadd.s32 %v378, 256
          %v2365 = vadd.s32 %v378, 264
          %v2366 = vadd.s32 %v378, 272
          %v2367 = vadd.s32 %v378, 280
          %vm2368 = vcmp.lt.s32.totalorder %v2336, 0
          %v2369 = vsub.s32 0, %v2336
          %v2370 = vsel %vm2368, %v2369, %v2336
          %v2371 = vshrl.u32 %v2370, 4
          %v2372 = vand.u32 %v2370, 15
          %v2373 = vsub.s32 0, %v2372
          %v2374 = vsel %vm2368, %v2373, %v2372
          %vm2375 = vcmp.lt.s32.totalorder %v2337, 0
          %v2376 = vsub.s32 0, %v2337
          %v2377 = vsel %vm2375, %v2376, %v2337
          %v2378 = vshrl.u32 %v2377, 4
          %v2379 = vand.u32 %v2377, 15
          %v2380 = vsub.s32 0, %v2379
          %v2381 = vsel %vm2375, %v2380, %v2379
          %vm2382 = vcmp.lt.s32.totalorder %v2338, 0
          %v2383 = vsub.s32 0, %v2338
          %v2384 = vsel %vm2382, %v2383, %v2338
          %v2385 = vshrl.u32 %v2384, 4
          %v2386 = vand.u32 %v2384, 15
          %v2387 = vsub.s32 0, %v2386
          %v2388 = vsel %vm2382, %v2387, %v2386
          %vm2389 = vcmp.lt.s32.totalorder %v2339, 0
          %v2390 = vsub.s32 0, %v2339
          %v2391 = vsel %vm2389, %v2390, %v2339
          %v2392 = vshrl.u32 %v2391, 4
          %v2393 = vand.u32 %v2391, 15
          %v2394 = vsub.s32 0, %v2393
          %v2395 = vsel %vm2389, %v2394, %v2393
          %vm2396 = vcmp.lt.s32.totalorder %v2340, 0
          %v2397 = vsub.s32 0, %v2340
          %v2398 = vsel %vm2396, %v2397, %v2340
          %v2399 = vshrl.u32 %v2398, 4
          %v2400 = vand.u32 %v2398, 15
          %v2401 = vsub.s32 0, %v2400
          %v2402 = vsel %vm2396, %v2401, %v2400
          %vm2403 = vcmp.lt.s32.totalorder %v2341, 0
          %v2404 = vsub.s32 0, %v2341
          %v2405 = vsel %vm2403, %v2404, %v2341
          %v2406 = vshrl.u32 %v2405, 4
          %v2407 = vand.u32 %v2405, 15
          %v2408 = vsub.s32 0, %v2407
          %v2409 = vsel %vm2403, %v2408, %v2407
          %vm2410 = vcmp.lt.s32.totalorder %v2342, 0
          %v2411 = vsub.s32 0, %v2342
          %v2412 = vsel %vm2410, %v2411, %v2342
          %v2413 = vshrl.u32 %v2412, 4
          %v2414 = vand.u32 %v2412, 15
          %v2415 = vsub.s32 0, %v2414
          %v2416 = vsel %vm2410, %v2415, %v2414
          %vm2417 = vcmp.lt.s32.totalorder %v2343, 0
          %v2418 = vsub.s32 0, %v2343
          %v2419 = vsel %vm2417, %v2418, %v2343
          %v2420 = vshrl.u32 %v2419, 4
          %v2421 = vand.u32 %v2419, 15
          %v2422 = vsub.s32 0, %v2421
          %v2423 = vsel %vm2417, %v2422, %v2421
          %vm2424 = vcmp.lt.s32.totalorder %v2344, 0
          %v2425 = vsub.s32 0, %v2344
          %v2426 = vsel %vm2424, %v2425, %v2344
          %v2427 = vshrl.u32 %v2426, 4
          %v2428 = vand.u32 %v2426, 15
          %v2429 = vsub.s32 0, %v2428
          %v2430 = vsel %vm2424, %v2429, %v2428
          %vm2431 = vcmp.lt.s32.totalorder %v2345, 0
          %v2432 = vsub.s32 0, %v2345
          %v2433 = vsel %vm2431, %v2432, %v2345
          %v2434 = vshrl.u32 %v2433, 4
          %v2435 = vand.u32 %v2433, 15
          %v2436 = vsub.s32 0, %v2435
          %v2437 = vsel %vm2431, %v2436, %v2435
          %vm2438 = vcmp.lt.s32.totalorder %v2346, 0
          %v2439 = vsub.s32 0, %v2346
          %v2440 = vsel %vm2438, %v2439, %v2346
          %v2441 = vshrl.u32 %v2440, 4
          %v2442 = vand.u32 %v2440, 15
          %v2443 = vsub.s32 0, %v2442
          %v2444 = vsel %vm2438, %v2443, %v2442
          %vm2445 = vcmp.lt.s32.totalorder %v2347, 0
          %v2446 = vsub.s32 0, %v2347
          %v2447 = vsel %vm2445, %v2446, %v2347
          %v2448 = vshrl.u32 %v2447, 4
          %v2449 = vand.u32 %v2447, 15
          %v2450 = vsub.s32 0, %v2449
          %v2451 = vsel %vm2445, %v2450, %v2449
          %vm2452 = vcmp.lt.s32.totalorder %v2348, 0
          %v2453 = vsub.s32 0, %v2348
          %v2454 = vsel %vm2452, %v2453, %v2348
          %v2455 = vshrl.u32 %v2454, 4
          %v2456 = vand.u32 %v2454, 15
          %v2457 = vsub.s32 0, %v2456
          %v2458 = vsel %vm2452, %v2457, %v2456
          %vm2459 = vcmp.lt.s32.totalorder %v2349, 0
          %v2460 = vsub.s32 0, %v2349
          %v2461 = vsel %vm2459, %v2460, %v2349
          %v2462 = vshrl.u32 %v2461, 4
          %v2463 = vand.u32 %v2461, 15
          %v2464 = vsub.s32 0, %v2463
          %v2465 = vsel %vm2459, %v2464, %v2463
          %vm2466 = vcmp.lt.s32.totalorder %v2350, 0
          %v2467 = vsub.s32 0, %v2350
          %v2468 = vsel %vm2466, %v2467, %v2350
          %v2469 = vshrl.u32 %v2468, 4
          %v2470 = vand.u32 %v2468, 15
          %v2471 = vsub.s32 0, %v2470
          %v2472 = vsel %vm2466, %v2471, %v2470
          %vm2473 = vcmp.lt.s32.totalorder %v2351, 0
          %v2474 = vsub.s32 0, %v2351
          %v2475 = vsel %vm2473, %v2474, %v2351
          %v2476 = vshrl.u32 %v2475, 4
          %v2477 = vand.u32 %v2475, 15
          %v2478 = vsub.s32 0, %v2477
          %v2479 = vsel %vm2473, %v2478, %v2477
          %vm2480 = vcmp.lt.s32.totalorder %v2352, 0
          %v2481 = vsub.s32 0, %v2352
          %v2482 = vsel %vm2480, %v2481, %v2352
          %v2483 = vshrl.u32 %v2482, 4
          %v2484 = vand.u32 %v2482, 15
          %v2485 = vsub.s32 0, %v2484
          %v2486 = vsel %vm2480, %v2485, %v2484
          %vm2487 = vcmp.lt.s32.totalorder %v2353, 0
          %v2488 = vsub.s32 0, %v2353
          %v2489 = vsel %vm2487, %v2488, %v2353
          %v2490 = vshrl.u32 %v2489, 4
          %v2491 = vand.u32 %v2489, 15
          %v2492 = vsub.s32 0, %v2491
          %v2493 = vsel %vm2487, %v2492, %v2491
          %vm2494 = vcmp.lt.s32.totalorder %v2354, 0
          %v2495 = vsub.s32 0, %v2354
          %v2496 = vsel %vm2494, %v2495, %v2354
          %v2497 = vshrl.u32 %v2496, 4
          %v2498 = vand.u32 %v2496, 15
          %v2499 = vsub.s32 0, %v2498
          %v2500 = vsel %vm2494, %v2499, %v2498
          %vm2501 = vcmp.lt.s32.totalorder %v2355, 0
          %v2502 = vsub.s32 0, %v2355
          %v2503 = vsel %vm2501, %v2502, %v2355
          %v2504 = vshrl.u32 %v2503, 4
          %v2505 = vand.u32 %v2503, 15
          %v2506 = vsub.s32 0, %v2505
          %v2507 = vsel %vm2501, %v2506, %v2505
          %vm2508 = vcmp.lt.s32.totalorder %v2356, 0
          %v2509 = vsub.s32 0, %v2356
          %v2510 = vsel %vm2508, %v2509, %v2356
          %v2511 = vshrl.u32 %v2510, 4
          %v2512 = vand.u32 %v2510, 15
          %v2513 = vsub.s32 0, %v2512
          %v2514 = vsel %vm2508, %v2513, %v2512
          %vm2515 = vcmp.lt.s32.totalorder %v2357, 0
          %v2516 = vsub.s32 0, %v2357
          %v2517 = vsel %vm2515, %v2516, %v2357
          %v2518 = vshrl.u32 %v2517, 4
          %v2519 = vand.u32 %v2517, 15
          %v2520 = vsub.s32 0, %v2519
          %v2521 = vsel %vm2515, %v2520, %v2519
          %vm2522 = vcmp.lt.s32.totalorder %v2358, 0
          %v2523 = vsub.s32 0, %v2358
          %v2524 = vsel %vm2522, %v2523, %v2358
          %v2525 = vshrl.u32 %v2524, 4
          %v2526 = vand.u32 %v2524, 15
          %v2527 = vsub.s32 0, %v2526
          %v2528 = vsel %vm2522, %v2527, %v2526
          %vm2529 = vcmp.lt.s32.totalorder %v2359, 0
          %v2530 = vsub.s32 0, %v2359
          %v2531 = vsel %vm2529, %v2530, %v2359
          %v2532 = vshrl.u32 %v2531, 4
          %v2533 = vand.u32 %v2531, 15
          %v2534 = vsub.s32 0, %v2533
          %v2535 = vsel %vm2529, %v2534, %v2533
          %vm2536 = vcmp.lt.s32.totalorder %v2360, 0
          %v2537 = vsub.s32 0, %v2360
          %v2538 = vsel %vm2536, %v2537, %v2360
          %v2539 = vshrl.u32 %v2538, 4
          %v2540 = vand.u32 %v2538, 15
          %v2541 = vsub.s32 0, %v2540
          %v2542 = vsel %vm2536, %v2541, %v2540
          %vm2543 = vcmp.lt.s32.totalorder %v2361, 0
          %v2544 = vsub.s32 0, %v2361
          %v2545 = vsel %vm2543, %v2544, %v2361
          %v2546 = vshrl.u32 %v2545, 4
          %v2547 = vand.u32 %v2545, 15
          %v2548 = vsub.s32 0, %v2547
          %v2549 = vsel %vm2543, %v2548, %v2547
          %vm2550 = vcmp.lt.s32.totalorder %v2362, 0
          %v2551 = vsub.s32 0, %v2362
          %v2552 = vsel %vm2550, %v2551, %v2362
          %v2553 = vshrl.u32 %v2552, 4
          %v2554 = vand.u32 %v2552, 15
          %v2555 = vsub.s32 0, %v2554
          %v2556 = vsel %vm2550, %v2555, %v2554
          %vm2557 = vcmp.lt.s32.totalorder %v2363, 0
          %v2558 = vsub.s32 0, %v2363
          %v2559 = vsel %vm2557, %v2558, %v2363
          %v2560 = vshrl.u32 %v2559, 4
          %v2561 = vand.u32 %v2559, 15
          %v2562 = vsub.s32 0, %v2561
          %v2563 = vsel %vm2557, %v2562, %v2561
          %vm2564 = vcmp.lt.s32.totalorder %v2364, 0
          %v2565 = vsub.s32 0, %v2364
          %v2566 = vsel %vm2564, %v2565, %v2364
          %v2567 = vshrl.u32 %v2566, 4
          %v2568 = vand.u32 %v2566, 15
          %v2569 = vsub.s32 0, %v2568
          %v2570 = vsel %vm2564, %v2569, %v2568
          %vm2571 = vcmp.lt.s32.totalorder %v2365, 0
          %v2572 = vsub.s32 0, %v2365
          %v2573 = vsel %vm2571, %v2572, %v2365
          %v2574 = vshrl.u32 %v2573, 4
          %v2575 = vand.u32 %v2573, 15
          %v2576 = vsub.s32 0, %v2575
          %v2577 = vsel %vm2571, %v2576, %v2575
          %vm2578 = vcmp.lt.s32.totalorder %v2366, 0
          %v2579 = vsub.s32 0, %v2366
          %v2580 = vsel %vm2578, %v2579, %v2366
          %v2581 = vshrl.u32 %v2580, 4
          %v2582 = vand.u32 %v2580, 15
          %v2583 = vsub.s32 0, %v2582
          %v2584 = vsel %vm2578, %v2583, %v2582
          %vm2585 = vcmp.lt.s32.totalorder %v2367, 0
          %v2586 = vsub.s32 0, %v2367
          %v2587 = vsel %vm2585, %v2586, %v2367
          %v2588 = vshrl.u32 %v2587, 4
          %v2589 = vand.u32 %v2587, 15
          %v2590 = vsub.s32 0, %v2589
          %v2591 = vsel %vm2585, %v2590, %v2589
          %vm2592 = vcmp.ne.s32.totalorder %v2374, 0
          %vm2593 = vcmp.ne.s32.totalorder %v2381, 0
          %vm2594 = vcmp.ne.s32.totalorder %v2388, 0
          %vm2595 = vcmp.ne.s32.totalorder %v2395, 0
          %vm2596 = vcmp.ne.s32.totalorder %v2402, 0
          %vm2597 = vcmp.ne.s32.totalorder %v2409, 0
          %vm2598 = vcmp.ne.s32.totalorder %v2416, 0
          %vm2599 = vcmp.ne.s32.totalorder %v2423, 0
          %vm2600 = vcmp.ne.s32.totalorder %v2430, 0
          %vm2601 = vcmp.ne.s32.totalorder %v2437, 0
          %vm2602 = vcmp.ne.s32.totalorder %v2444, 0
          %vm2603 = vcmp.ne.s32.totalorder %v2451, 0
          %vm2604 = vcmp.ne.s32.totalorder %v2458, 0
          %vm2605 = vcmp.ne.s32.totalorder %v2465, 0
          %vm2606 = vcmp.ne.s32.totalorder %v2472, 0
          %vm2607 = vcmp.ne.s32.totalorder %v2479, 0
          %vm2608 = vcmp.ne.s32.totalorder %v2486, 0
          %vm2609 = vcmp.ne.s32.totalorder %v2493, 0
          %vm2610 = vcmp.ne.s32.totalorder %v2500, 0
          %vm2611 = vcmp.ne.s32.totalorder %v2507, 0
          %vm2612 = vcmp.ne.s32.totalorder %v2514, 0
          %vm2613 = vcmp.ne.s32.totalorder %v2521, 0
          %vm2614 = vcmp.ne.s32.totalorder %v2528, 0
          %vm2615 = vcmp.ne.s32.totalorder %v2535, 0
          %vm2616 = vcmp.ne.s32.totalorder %v2542, 0
          %vm2617 = vcmp.ne.s32.totalorder %v2549, 0
          %vm2618 = vcmp.ne.s32.totalorder %v2556, 0
          %vm2619 = vcmp.ne.s32.totalorder %v2563, 0
          %vm2620 = vcmp.ne.s32.totalorder %v2570, 0
          %vm2621 = vcmp.ne.s32.totalorder %v2577, 0
          %vm2622 = vcmp.ne.s32.totalorder %v2584, 0
          %vm2623 = vcmp.ne.s32.totalorder %v2591, 0
          %vm2624 = vcmp.lt.s32.totalorder %v2374, 0
          %vm2625 = vcmp.lt.s32.totalorder %v2381, 0
          %vm2626 = vcmp.lt.s32.totalorder %v2388, 0
          %vm2627 = vcmp.lt.s32.totalorder %v2395, 0
          %vm2628 = vcmp.lt.s32.totalorder %v2402, 0
          %vm2629 = vcmp.lt.s32.totalorder %v2409, 0
          %vm2630 = vcmp.lt.s32.totalorder %v2416, 0
          %vm2631 = vcmp.lt.s32.totalorder %v2423, 0
          %vm2632 = vcmp.lt.s32.totalorder %v2430, 0
          %vm2633 = vcmp.lt.s32.totalorder %v2437, 0
          %vm2634 = vcmp.lt.s32.totalorder %v2444, 0
          %vm2635 = vcmp.lt.s32.totalorder %v2451, 0
          %vm2636 = vcmp.lt.s32.totalorder %v2458, 0
          %vm2637 = vcmp.lt.s32.totalorder %v2465, 0
          %vm2638 = vcmp.lt.s32.totalorder %v2472, 0
          %vm2639 = vcmp.lt.s32.totalorder %v2479, 0
          %vm2640 = vcmp.lt.s32.totalorder %v2486, 0
          %vm2641 = vcmp.lt.s32.totalorder %v2493, 0
          %vm2642 = vcmp.lt.s32.totalorder %v2500, 0
          %vm2643 = vcmp.lt.s32.totalorder %v2507, 0
          %vm2644 = vcmp.lt.s32.totalorder %v2514, 0
          %vm2645 = vcmp.lt.s32.totalorder %v2521, 0
          %vm2646 = vcmp.lt.s32.totalorder %v2528, 0
          %vm2647 = vcmp.lt.s32.totalorder %v2535, 0
          %vm2648 = vcmp.lt.s32.totalorder %v2542, 0
          %vm2649 = vcmp.lt.s32.totalorder %v2549, 0
          %vm2650 = vcmp.lt.s32.totalorder %v2556, 0
          %vm2651 = vcmp.lt.s32.totalorder %v2563, 0
          %vm2652 = vcmp.lt.s32.totalorder %v2570, 0
          %vm2653 = vcmp.lt.s32.totalorder %v2577, 0
          %vm2654 = vcmp.lt.s32.totalorder %v2584, 0
          %vm2655 = vcmp.lt.s32.totalorder %v2591, 0
          %vm2656 = vmand %vm2624, %vm2592
          %vm2657 = vmand %vm2625, %vm2593
          %vm2658 = vmand %vm2626, %vm2594
          %vm2659 = vmand %vm2627, %vm2595
          %vm2660 = vmand %vm2628, %vm2596
          %vm2661 = vmand %vm2629, %vm2597
          %vm2662 = vmand %vm2630, %vm2598
          %vm2663 = vmand %vm2631, %vm2599
          %vm2664 = vmand %vm2632, %vm2600
          %vm2665 = vmand %vm2633, %vm2601
          %vm2666 = vmand %vm2634, %vm2602
          %vm2667 = vmand %vm2635, %vm2603
          %vm2668 = vmand %vm2636, %vm2604
          %vm2669 = vmand %vm2637, %vm2605
          %vm2670 = vmand %vm2638, %vm2606
          %vm2671 = vmand %vm2639, %vm2607
          %vm2672 = vmand %vm2640, %vm2608
          %vm2673 = vmand %vm2641, %vm2609
          %vm2674 = vmand %vm2642, %vm2610
          %vm2675 = vmand %vm2643, %vm2611
          %vm2676 = vmand %vm2644, %vm2612
          %vm2677 = vmand %vm2645, %vm2613
          %vm2678 = vmand %vm2646, %vm2614
          %vm2679 = vmand %vm2647, %vm2615
          %vm2680 = vmand %vm2648, %vm2616
          %vm2681 = vmand %vm2649, %vm2617
          %vm2682 = vmand %vm2650, %vm2618
          %vm2683 = vmand %vm2651, %vm2619
          %vm2684 = vmand %vm2652, %vm2620
          %vm2685 = vmand %vm2653, %vm2621
          %vm2686 = vmand %vm2654, %vm2622
          %vm2687 = vmand %vm2655, %vm2623
          %v2688 = vadd.s32 %v2374, 16
          %v2689 = vadd.s32 %v2381, 16
          %v2690 = vadd.s32 %v2388, 16
          %v2691 = vadd.s32 %v2395, 16
          %v2692 = vadd.s32 %v2402, 16
          %v2693 = vadd.s32 %v2409, 16
          %v2694 = vadd.s32 %v2416, 16
          %v2695 = vadd.s32 %v2423, 16
          %v2696 = vadd.s32 %v2430, 16
          %v2697 = vadd.s32 %v2437, 16
          %v2698 = vadd.s32 %v2444, 16
          %v2699 = vadd.s32 %v2451, 16
          %v2700 = vadd.s32 %v2458, 16
          %v2701 = vadd.s32 %v2465, 16
          %v2702 = vadd.s32 %v2472, 16
          %v2703 = vadd.s32 %v2479, 16
          %v2704 = vadd.s32 %v2486, 16
          %v2705 = vadd.s32 %v2493, 16
          %v2706 = vadd.s32 %v2500, 16
          %v2707 = vadd.s32 %v2507, 16
          %v2708 = vadd.s32 %v2514, 16
          %v2709 = vadd.s32 %v2521, 16
          %v2710 = vadd.s32 %v2528, 16
          %v2711 = vadd.s32 %v2535, 16
          %v2712 = vadd.s32 %v2542, 16
          %v2713 = vadd.s32 %v2549, 16
          %v2714 = vadd.s32 %v2556, 16
          %v2715 = vadd.s32 %v2563, 16
          %v2716 = vadd.s32 %v2570, 16
          %v2717 = vadd.s32 %v2577, 16
          %v2718 = vadd.s32 %v2584, 16
          %v2719 = vadd.s32 %v2591, 16
          %v2720 = vsel %vm2656, %v2688, %v2374
          %v2721 = vsel %vm2657, %v2689, %v2381
          %v2722 = vsel %vm2658, %v2690, %v2388
          %v2723 = vsel %vm2659, %v2691, %v2395
          %v2724 = vsel %vm2660, %v2692, %v2402
          %v2725 = vsel %vm2661, %v2693, %v2409
          %v2726 = vsel %vm2662, %v2694, %v2416
          %v2727 = vsel %vm2663, %v2695, %v2423
          %v2728 = vsel %vm2664, %v2696, %v2430
          %v2729 = vsel %vm2665, %v2697, %v2437
          %v2730 = vsel %vm2666, %v2698, %v2444
          %v2731 = vsel %vm2667, %v2699, %v2451
          %v2732 = vsel %vm2668, %v2700, %v2458
          %v2733 = vsel %vm2669, %v2701, %v2465
          %v2734 = vsel %vm2670, %v2702, %v2472
          %v2735 = vsel %vm2671, %v2703, %v2479
          %v2736 = vsel %vm2672, %v2704, %v2486
          %v2737 = vsel %vm2673, %v2705, %v2493
          %v2738 = vsel %vm2674, %v2706, %v2500
          %v2739 = vsel %vm2675, %v2707, %v2507
          %v2740 = vsel %vm2676, %v2708, %v2514
          %v2741 = vsel %vm2677, %v2709, %v2521
          %v2742 = vsel %vm2678, %v2710, %v2528
          %v2743 = vsel %vm2679, %v2711, %v2535
          %v2744 = vsel %vm2680, %v2712, %v2542
          %v2745 = vsel %vm2681, %v2713, %v2549
          %v2746 = vsel %vm2682, %v2714, %v2556
          %v2747 = vsel %vm2683, %v2715, %v2563
          %v2748 = vsel %vm2684, %v2716, %v2570
          %v2749 = vsel %vm2685, %v2717, %v2577
          %v2750 = vsel %vm2686, %v2718, %v2584
          %v2751 = vsel %vm2687, %v2719, %v2591
          %vm2752 = vcmp.eq.s32.totalorder %v428, %v383
          %vm2753 = vcmp.eq.s32.totalorder %v429, %v383
          %vm2754 = vcmp.eq.s32.totalorder %v430, %v383
          %vm2755 = vcmp.eq.s32.totalorder %v431, %v383
          %vm2756 = vcmp.eq.s32.totalorder %v2720, %v383
          %vm2757 = vcmp.eq.s32.totalorder %v2721, %v383
          %vm2758 = vcmp.eq.s32.totalorder %v2722, %v383
          %vm2759 = vcmp.eq.s32.totalorder %v2723, %v383
          %vm2760 = vcmp.eq.s32.totalorder %v2724, %v383
          %vm2761 = vcmp.eq.s32.totalorder %v2725, %v383
          %vm2762 = vcmp.eq.s32.totalorder %v2726, %v383
          %vm2763 = vcmp.eq.s32.totalorder %v2727, %v383
          %vm2764 = vcmp.eq.s32.totalorder %v2728, %v383
          %vm2765 = vcmp.eq.s32.totalorder %v2729, %v383
          %vm2766 = vcmp.eq.s32.totalorder %v2730, %v383
          %vm2767 = vcmp.eq.s32.totalorder %v2731, %v383
          %vm2768 = vcmp.eq.s32.totalorder %v2732, %v383
          %vm2769 = vcmp.eq.s32.totalorder %v2733, %v383
          %vm2770 = vcmp.eq.s32.totalorder %v2734, %v383
          %vm2771 = vcmp.eq.s32.totalorder %v2735, %v383
          %vm2772 = vcmp.eq.s32.totalorder %v2736, %v383
          %vm2773 = vcmp.eq.s32.totalorder %v2737, %v383
          %vm2774 = vcmp.eq.s32.totalorder %v2738, %v383
          %vm2775 = vcmp.eq.s32.totalorder %v2739, %v383
          %vm2776 = vcmp.eq.s32.totalorder %v2740, %v383
          %vm2777 = vcmp.eq.s32.totalorder %v2741, %v383
          %vm2778 = vcmp.eq.s32.totalorder %v2742, %v383
          %vm2779 = vcmp.eq.s32.totalorder %v2743, %v383
          %vm2780 = vcmp.eq.s32.totalorder %v2744, %v383
          %vm2781 = vcmp.eq.s32.totalorder %v2745, %v383
          %vm2782 = vcmp.eq.s32.totalorder %v2746, %v383
          %vm2783 = vcmp.eq.s32.totalorder %v2747, %v383
          %vm2784 = vcmp.eq.s32.totalorder %v2748, %v383
          %vm2785 = vcmp.eq.s32.totalorder %v2749, %v383
          %vm2786 = vcmp.eq.s32.totalorder %v2750, %v383
          %vm2787 = vcmp.eq.s32.totalorder %v2751, %v383
          %v2788 = vsel %vm2752, 1, 0
          %v2789 = vsel %vm2753, 1, 0
          %v2790 = vsel %vm2754, 1, 0
          %v2791 = vsel %vm2755, 1, 0
          %v2792 = vsel %vm2756, 1, 0
          %v2793 = vsel %vm2757, 1, 0
          %v2794 = vsel %vm2758, 1, 0
          %v2795 = vsel %vm2759, 1, 0
          %v2796 = vsel %vm2760, 1, 0
          %v2797 = vsel %vm2761, 1, 0
          %v2798 = vsel %vm2762, 1, 0
          %v2799 = vsel %vm2763, 1, 0
          %v2800 = vsel %vm2764, 1, 0
          %v2801 = vsel %vm2765, 1, 0
          %v2802 = vsel %vm2766, 1, 0
          %v2803 = vsel %vm2767, 1, 0
          %v2804 = vsel %vm2768, 1, 0
          %v2805 = vsel %vm2769, 1, 0
          %v2806 = vsel %vm2770, 1, 0
          %v2807 = vsel %vm2771, 1, 0
          %v2808 = vsel %vm2772, 1, 0
          %v2809 = vsel %vm2773, 1, 0
          %v2810 = vsel %vm2774, 1, 0
          %v2811 = vsel %vm2775, 1, 0
          %v2812 = vsel %vm2776, 1, 0
          %v2813 = vsel %vm2777, 1, 0
          %v2814 = vsel %vm2778, 1, 0
          %v2815 = vsel %vm2779, 1, 0
          %v2816 = vsel %vm2780, 1, 0
          %v2817 = vsel %vm2781, 1, 0
          %v2818 = vsel %vm2782, 1, 0
          %v2819 = vsel %vm2783, 1, 0
          %v2820 = vsel %vm2784, 1, 0
          %v2821 = vsel %vm2785, 1, 0
          %v2822 = vsel %vm2786, 1, 0
          %v2823 = vsel %vm2787, 1, 0
          %v2824 = vcvt.s32.f32 %v2788
          %v2825 = vcvt.s32.f32 %v2789
          %v2826 = vcvt.s32.f32 %v2790
          %v2827 = vcvt.s32.f32 %v2791
          %v2828 = vcvt.s32.f32 %v2792
          %v2829 = vcvt.s32.f32 %v2793
          %v2830 = vcvt.s32.f32 %v2794
          %v2831 = vcvt.s32.f32 %v2795
          %v2832 = vcvt.s32.f32 %v2796
          %v2833 = vcvt.s32.f32 %v2797
          %v2834 = vcvt.s32.f32 %v2798
          %v2835 = vcvt.s32.f32 %v2799
          %v2836 = vcvt.s32.f32 %v2800
          %v2837 = vcvt.s32.f32 %v2801
          %v2838 = vcvt.s32.f32 %v2802
          %v2839 = vcvt.s32.f32 %v2803
          %v2840 = vcvt.s32.f32 %v2804
          %v2841 = vcvt.s32.f32 %v2805
          %v2842 = vcvt.s32.f32 %v2806
          %v2843 = vcvt.s32.f32 %v2807
          %v2844 = vcvt.s32.f32 %v2808
          %v2845 = vcvt.s32.f32 %v2809
          %v2846 = vcvt.s32.f32 %v2810
          %v2847 = vcvt.s32.f32 %v2811
          %v2848 = vcvt.s32.f32 %v2812
          %v2849 = vcvt.s32.f32 %v2813
          %v2850 = vcvt.s32.f32 %v2814
          %v2851 = vcvt.s32.f32 %v2815
          %v2852 = vcvt.s32.f32 %v2816
          %v2853 = vcvt.s32.f32 %v2817
          %v2854 = vcvt.s32.f32 %v2818
          %v2855 = vcvt.s32.f32 %v2819
          %v2856 = vcvt.s32.f32 %v2820
          %v2857 = vcvt.s32.f32 %v2821
          %v2858 = vcvt.s32.f32 %v2822
          %v2859 = vcvt.s32.f32 %v2823
          %v2861 = vsel %vm955, 1.0, 0
          %2863 = vmatpush.msra.mxu0 0.0
          %2864 = vmatpush.msra.mxu0 0.0
          %2865 = vmatpush.msra.mxu0 0.0
          %2866 = vmatpush.msra.mxu0 0.0
          %2867 = vmatpush.msra.mxu0 0.0
          %2868 = vmatpush.msra.mxu0 0.0
          %2869 = vmatpush.msra.mxu0 0.0
          %2870 = vmatpush.msra.mxu0 0.0
          %2871 = vmatpush.msra.mxu0 0.0
          %2872 = vmatpush.msra.mxu0 0.0
          %2873 = vmatpush.msra.mxu0 0.0
          %2874 = vmatpush.msra.mxu0 0.0
          %2875 = vmatpush.msra.mxu0 %v2331
          %2876 = vmatpush.msra.mxu0 %v2328
          %2877 = vmatpush.msra.mxu0 %v2325
          %2878 = vmatpush.msra.mxu0 %v2322
          %2879 = vmatmul.f32.gmra.mxu0 %v2861
          %v2880 = vpop.f32.mrf.mxu0
          %v2881 = vadd.f32 0.0, %v2880
          %2882 = vdwg.mxu0
          %2883 = vmatpush.msra.mxu0 0.0
          %2884 = vmatpush.msra.mxu0 0.0
          %2885 = vmatpush.msra.mxu0 0.0
          %2886 = vmatpush.msra.mxu0 0.0
          %2887 = vmatpush.msra.mxu0 0.0
          %2888 = vmatpush.msra.mxu0 0.0
          %2889 = vmatpush.msra.mxu0 0.0
          %2890 = vmatpush.msra.mxu0 0.0
          %2891 = vmatpush.msra.mxu0 0.0
          %2892 = vmatpush.msra.mxu0 0.0
          %2893 = vmatpush.msra.mxu0 0.0
          %2894 = vmatpush.msra.mxu0 0.0
          %2895 = vmatpush.msra.mxu0 %v2332
          %2896 = vmatpush.msra.mxu0 %v2329
          %2897 = vmatpush.msra.mxu0 %v2326
          %2898 = vmatpush.msra.mxu0 %v2323
          %2899 = vmatmul.f32.gmra.mxu0 %v2861
          %v2900 = vpop.f32.mrf.mxu0
          %v2901 = vadd.f32 0.0, %v2900
          %2902 = vdwg.mxu0
          %2903 = vmatpush.msra.mxu0 0.0
          %2904 = vmatpush.msra.mxu0 0.0
          %2905 = vmatpush.msra.mxu0 0.0
          %2906 = vmatpush.msra.mxu0 0.0
          %2907 = vmatpush.msra.mxu0 0.0
          %2908 = vmatpush.msra.mxu0 0.0
          %2909 = vmatpush.msra.mxu0 0.0
          %2910 = vmatpush.msra.mxu0 0.0
          %2911 = vmatpush.msra.mxu0 0.0
          %2912 = vmatpush.msra.mxu0 0.0
          %2913 = vmatpush.msra.mxu0 0.0
          %2914 = vmatpush.msra.mxu0 0.0
          %2915 = vmatpush.msra.mxu0 %v2333
          %2916 = vmatpush.msra.mxu0 %v2330
          %2917 = vmatpush.msra.mxu0 %v2327
          %2918 = vmatpush.msra.mxu0 %v2324
          %2919 = vmatmul.f32.gmra.mxu0 %v2861
          %v2920 = vpop.f32.mrf.mxu0
          %v2921 = vadd.f32 0.0, %v2920
          %2922 = vdwg.mxu0
          %v2923 = vmul.f32 %v2322, %v2322
          %v2924 = vmul.f32 %v2323, %v2323
          %v2925 = vmul.f32 %v2324, %v2324
          %v2926 = vmul.f32 %v2325, %v2325
          %v2927 = vmul.f32 %v2326, %v2326
          %v2928 = vmul.f32 %v2327, %v2327
          %v2929 = vmul.f32 %v2328, %v2328
          %v2930 = vmul.f32 %v2329, %v2329
          %v2931 = vmul.f32 %v2330, %v2330
          %v2932 = vmul.f32 %v2331, %v2331
          %v2933 = vmul.f32 %v2332, %v2332
          %v2934 = vmul.f32 %v2333, %v2333
          %2935 = vmatpush.msra.mxu0 0.0
          %2936 = vmatpush.msra.mxu0 0.0
          %2937 = vmatpush.msra.mxu0 0.0
          %2938 = vmatpush.msra.mxu0 0.0
          %2939 = vmatpush.msra.mxu0 0.0
          %2940 = vmatpush.msra.mxu0 0.0
          %2941 = vmatpush.msra.mxu0 0.0
          %2942 = vmatpush.msra.mxu0 0.0
          %2943 = vmatpush.msra.mxu0 0.0
          %2944 = vmatpush.msra.mxu0 0.0
          %2945 = vmatpush.msra.mxu0 0.0
          %2946 = vmatpush.msra.mxu0 0.0
          %2947 = vmatpush.msra.mxu0 %v2932
          %2948 = vmatpush.msra.mxu0 %v2929
          %2949 = vmatpush.msra.mxu0 %v2926
          %2950 = vmatpush.msra.mxu0 %v2923
          %2951 = vmatmul.f32.gmra.mxu0 %v2861
          %v2952 = vpop.f32.mrf.mxu0
          %v2953 = vadd.f32 0.0, %v2952
          %2954 = vdwg.mxu0
          %2955 = vmatpush.msra.mxu0 0.0
          %2956 = vmatpush.msra.mxu0 0.0
          %2957 = vmatpush.msra.mxu0 0.0
          %2958 = vmatpush.msra.mxu0 0.0
          %2959 = vmatpush.msra.mxu0 0.0
          %2960 = vmatpush.msra.mxu0 0.0
          %2961 = vmatpush.msra.mxu0 0.0
          %2962 = vmatpush.msra.mxu0 0.0
          %2963 = vmatpush.msra.mxu0 0.0
          %2964 = vmatpush.msra.mxu0 0.0
          %2965 = vmatpush.msra.mxu0 0.0
          %2966 = vmatpush.msra.mxu0 0.0
          %2967 = vmatpush.msra.mxu0 %v2933
          %2968 = vmatpush.msra.mxu0 %v2930
          %2969 = vmatpush.msra.mxu0 %v2927
          %2970 = vmatpush.msra.mxu0 %v2924
          %2971 = vmatmul.f32.gmra.mxu0 %v2861
          %v2972 = vpop.f32.mrf.mxu0
          %v2973 = vadd.f32 0.0, %v2972
          %2974 = vdwg.mxu0
          %2975 = vmatpush.msra.mxu0 0.0
          %2976 = vmatpush.msra.mxu0 0.0
          %2977 = vmatpush.msra.mxu0 0.0
          %2978 = vmatpush.msra.mxu0 0.0
          %2979 = vmatpush.msra.mxu0 0.0
          %2980 = vmatpush.msra.mxu0 0.0
          %2981 = vmatpush.msra.mxu0 0.0
          %2982 = vmatpush.msra.mxu0 0.0
          %2983 = vmatpush.msra.mxu0 0.0
          %2984 = vmatpush.msra.mxu0 0.0
          %2985 = vmatpush.msra.mxu0 0.0
          %2986 = vmatpush.msra.mxu0 0.0
          %2987 = vmatpush.msra.mxu0 %v2934
          %2988 = vmatpush.msra.mxu0 %v2931
          %2989 = vmatpush.msra.mxu0 %v2928
          %2990 = vmatpush.msra.mxu0 %v2925
          %2991 = vmatmul.f32.gmra.mxu0 %v2861
          %v2992 = vpop.f32.mrf.mxu0
          %v2993 = vadd.f32 0.0, %v2992
          %2994 = vdwg.mxu0
          %v2996 = vsel %vm955, %v2921, 0
          %2998 = vmatpush.msra.mxu0 %v2839
          %2999 = vmatpush.msra.mxu0 %v2838
          %3000 = vmatpush.msra.mxu0 %v2837
          %3001 = vmatpush.msra.mxu0 %v2836
          %3002 = vmatpush.msra.mxu0 %v2835
          %3003 = vmatpush.msra.mxu0 %v2834
          %3004 = vmatpush.msra.mxu0 %v2833
          %3005 = vmatpush.msra.mxu0 %v2832
          %3006 = vmatpush.msra.mxu0 %v2831
          %3007 = vmatpush.msra.mxu0 %v2830
          %3008 = vmatpush.msra.mxu0 %v2829
          %3009 = vmatpush.msra.mxu0 %v2828
          %3010 = vmatpush.msra.mxu0 %v2827
          %3011 = vmatpush.msra.mxu0 %v2826
          %3012 = vmatpush.msra.mxu0 %v2825
          %3013 = vmatpush.msra.mxu0 %v2824
          %3014 = vmatmul.f32.gmra.mxu0 %v2881
          %v3015 = vpop.f32.mrf.mxu0
          %v3016 = vadd.f32 0.0, %v3015
          %3017 = vdwg.mxu0
          %3018 = vmatpush.msra.mxu0 %v2855
          %3019 = vmatpush.msra.mxu0 %v2854
          %3020 = vmatpush.msra.mxu0 %v2853
          %3021 = vmatpush.msra.mxu0 %v2852
          %3022 = vmatpush.msra.mxu0 %v2851
          %3023 = vmatpush.msra.mxu0 %v2850
          %3024 = vmatpush.msra.mxu0 %v2849
          %3025 = vmatpush.msra.mxu0 %v2848
          %3026 = vmatpush.msra.mxu0 %v2847
          %3027 = vmatpush.msra.mxu0 %v2846
          %3028 = vmatpush.msra.mxu0 %v2845
          %3029 = vmatpush.msra.mxu0 %v2844
          %3030 = vmatpush.msra.mxu0 %v2843
          %3031 = vmatpush.msra.mxu0 %v2842
          %3032 = vmatpush.msra.mxu0 %v2841
          %3033 = vmatpush.msra.mxu0 %v2840
          %3034 = vmatmul.f32.gmra.mxu0 %v2901
          %v3035 = vpop.f32.mrf.mxu0
          %v3036 = vadd.f32 %v3016, %v3035
          %3037 = vdwg.mxu0
          %3038 = vmatpush.msra.mxu0 0.0
          %3039 = vmatpush.msra.mxu0 0.0
          %3040 = vmatpush.msra.mxu0 0.0
          %3041 = vmatpush.msra.mxu0 0.0
          %3042 = vmatpush.msra.mxu0 0.0
          %3043 = vmatpush.msra.mxu0 0.0
          %3044 = vmatpush.msra.mxu0 0.0
          %3045 = vmatpush.msra.mxu0 0.0
          %3046 = vmatpush.msra.mxu0 0.0
          %3047 = vmatpush.msra.mxu0 0.0
          %3048 = vmatpush.msra.mxu0 0.0
          %3049 = vmatpush.msra.mxu0 0.0
          %3050 = vmatpush.msra.mxu0 %v2859
          %3051 = vmatpush.msra.mxu0 %v2858
          %3052 = vmatpush.msra.mxu0 %v2857
          %3053 = vmatpush.msra.mxu0 %v2856
          %3054 = vmatmul.f32.gmra.mxu0 %v2996
          %v3055 = vpop.f32.mrf.mxu0
          %v3056 = vadd.f32 %v3036, %v3055
          %3057 = vdwg.mxu0
          %v3059 = vsel %vm955, %v2993, 0
          %3061 = vmatpush.msra.mxu0 %v2839
          %3062 = vmatpush.msra.mxu0 %v2838
          %3063 = vmatpush.msra.mxu0 %v2837
          %3064 = vmatpush.msra.mxu0 %v2836
          %3065 = vmatpush.msra.mxu0 %v2835
          %3066 = vmatpush.msra.mxu0 %v2834
          %3067 = vmatpush.msra.mxu0 %v2833
          %3068 = vmatpush.msra.mxu0 %v2832
          %3069 = vmatpush.msra.mxu0 %v2831
          %3070 = vmatpush.msra.mxu0 %v2830
          %3071 = vmatpush.msra.mxu0 %v2829
          %3072 = vmatpush.msra.mxu0 %v2828
          %3073 = vmatpush.msra.mxu0 %v2827
          %3074 = vmatpush.msra.mxu0 %v2826
          %3075 = vmatpush.msra.mxu0 %v2825
          %3076 = vmatpush.msra.mxu0 %v2824
          %3077 = vmatmul.f32.gmra.mxu0 %v2953
          %v3078 = vpop.f32.mrf.mxu0
          %v3079 = vadd.f32 0.0, %v3078
          %3080 = vdwg.mxu0
          %3081 = vmatpush.msra.mxu0 %v2855
          %3082 = vmatpush.msra.mxu0 %v2854
          %3083 = vmatpush.msra.mxu0 %v2853
          %3084 = vmatpush.msra.mxu0 %v2852
          %3085 = vmatpush.msra.mxu0 %v2851
          %3086 = vmatpush.msra.mxu0 %v2850
          %3087 = vmatpush.msra.mxu0 %v2849
          %3088 = vmatpush.msra.mxu0 %v2848
          %3089 = vmatpush.msra.mxu0 %v2847
          %3090 = vmatpush.msra.mxu0 %v2846
          %3091 = vmatpush.msra.mxu0 %v2845
          %3092 = vmatpush.msra.mxu0 %v2844
          %3093 = vmatpush.msra.mxu0 %v2843
          %3094 = vmatpush.msra.mxu0 %v2842
          %3095 = vmatpush.msra.mxu0 %v2841
          %3096 = vmatpush.msra.mxu0 %v2840
          %3097 = vmatmul.f32.gmra.mxu0 %v2973
          %v3098 = vpop.f32.mrf.mxu0
          %v3099 = vadd.f32 %v3079, %v3098
          %3100 = vdwg.mxu0
          %3101 = vmatpush.msra.mxu0 0.0
          %3102 = vmatpush.msra.mxu0 0.0
          %3103 = vmatpush.msra.mxu0 0.0
          %3104 = vmatpush.msra.mxu0 0.0
          %3105 = vmatpush.msra.mxu0 0.0
          %3106 = vmatpush.msra.mxu0 0.0
          %3107 = vmatpush.msra.mxu0 0.0
          %3108 = vmatpush.msra.mxu0 0.0
          %3109 = vmatpush.msra.mxu0 0.0
          %3110 = vmatpush.msra.mxu0 0.0
          %3111 = vmatpush.msra.mxu0 0.0
          %3112 = vmatpush.msra.mxu0 0.0
          %3113 = vmatpush.msra.mxu0 %v2859
          %3114 = vmatpush.msra.mxu0 %v2858
          %3115 = vmatpush.msra.mxu0 %v2857
          %3116 = vmatpush.msra.mxu0 %v2856
          %3117 = vmatmul.f32.gmra.mxu0 %v3059
          %v3118 = vpop.f32.mrf.mxu0
          %v3119 = vadd.f32 %v3099, %v3118
          %3120 = vdwg.mxu0
          %v3121 = vrcp.pop 512.0
          %v3122 = vmul.f32 512.0, %v3121
          %v3123 = vsub.f32 1.0, %v3122
          %v3124 = vmul.f32 %v3121, %v3123
          %v3125 = vadd.f32 %v3121, %v3124
          %vm3126 = vweird.f32 %v3121
          %v3127 = vsel %vm3126, %v3121, %v3125
          %v3128 = vmul.f32 %v3056, %v3127
          %v3129 = vmul.f32 %v3119, %v3127
          %v3130 = vmul.f32 %v3128, %v3128
          %v3131 = vsub.f32 %v3129, %v3130
          %v3132 = vadd.f32 %v3131, 1e-05
          %v3133 = vrsqrt.pop %v3132
          %v3134 = vmul.f32 %v3133, %v3132
          %v3135 = vmul.f32 %v3134, %v3133
          %v3136 = vmul.f32 0.5, %v3135
          %v3137 = vsub.f32 1.5, %v3136
          %v3138 = vmul.f32 %v3133, %v3137
          %vm3139 = vweird.f32 %v3132
          %vm3140 = vweird.f32 %v3133
          %vm3141 = vmor %vm3139, %vm3140
          %v3142 = vsel %vm3141, %v3133, %v3138
          %v3143 = vmul.f32 %v2334, %v3142
          %v3144 = vmul.f32 %v3128, %v3143
          %v3145 = vsub.f32 %v2335, %v3144
          %v3146 = vadd.s32 %v383, 128
          %v3147 = vadd.s32 %v383, 256
          %vm3148 = vcmp.lt.s32.totalorder %v383, 0
          %v3149 = vsub.s32 0, %v383
          %v3150 = vsel %vm3148, %v3149, %v383
          %v3151 = vshrl.u32 %v3150, 4
          %v3152 = vand.u32 %v3150, 15
          %v3153 = vsub.s32 0, %v3152
          %v3154 = vsel %vm3148, %v3153, %v3152
          %vm3155 = vcmp.lt.s32.totalorder %v3146, 0
          %v3156 = vsub.s32 0, %v3146
          %v3157 = vsel %vm3155, %v3156, %v3146
          %v3158 = vshrl.u32 %v3157, 4
          %v3159 = vand.u32 %v3157, 15
          %v3160 = vsub.s32 0, %v3159
          %v3161 = vsel %vm3155, %v3160, %v3159
          %vm3162 = vcmp.lt.s32.totalorder %v3147, 0
          %v3163 = vsub.s32 0, %v3147
          %v3164 = vsel %vm3162, %v3163, %v3147
          %v3165 = vshrl.u32 %v3164, 4
          %v3166 = vand.u32 %v3164, 15
          %v3167 = vsub.s32 0, %v3166
          %v3168 = vsel %vm3162, %v3167, %v3166
          %vm3169 = vcmp.ne.s32.totalorder %v3154, 0
          %vm3170 = vcmp.ne.s32.totalorder %v3161, 0
          %vm3171 = vcmp.ne.s32.totalorder %v3168, 0
          %vm3172 = vcmp.lt.s32.totalorder %v3154, 0
          %vm3173 = vcmp.lt.s32.totalorder %v3161, 0
          %vm3174 = vcmp.lt.s32.totalorder %v3168, 0
          %vm3175 = vmand %vm3172, %vm3169
          %vm3176 = vmand %vm3173, %vm3170
          %vm3177 = vmand %vm3174, %vm3171
          %v3178 = vadd.s32 %v3154, 16
          %v3179 = vadd.s32 %v3161, 16
          %v3180 = vadd.s32 %v3168, 16
          %v3181 = vsel %vm3175, %v3178, %v3154
          %v3182 = vsel %vm3176, %v3179, %v3161
          %v3183 = vsel %vm3177, %v3180, %v3168
          %vm3184 = vcmp.eq.s32.totalorder %v3181, %v378
          %vm3185 = vcmp.eq.s32.totalorder %v3182, %v378
          %vm3186 = vcmp.eq.s32.totalorder %v3183, %v378
          %vm3187 = vcmp.eq.s32.totalorder %v3181, %v379
          %vm3188 = vcmp.eq.s32.totalorder %v3182, %v379
          %vm3189 = vcmp.eq.s32.totalorder %v3183, %v379
          %vm3190 = vcmp.ge.s32.totalorder %v383, 16
          %vm3191 = vcmp.ge.s32.totalorder %v3146, 16
          %vm3192 = vcmp.ge.s32.totalorder %v3147, 16
          %vm3193 = vmand %vm3184, %vm3190
          %vm3194 = vmand %vm3185, %vm3191
          %vm3195 = vmand %vm3186, %vm3192
          %vm3196 = vmand %vm3187, %vm3190
          %vm3197 = vmand %vm3188, %vm3191
          %vm3198 = vmand %vm3189, %vm3192
          %vm3199 = vcmp.lt.s32.totalorder %v383, 272
          %vm3200 = vcmp.lt.s32.totalorder %v3146, 272
          %vm3201 = vcmp.lt.s32.totalorder %v3147, 272
          %vm3202 = vmand %vm3193, %vm3199
          %vm3203 = vmand %vm3194, %vm3200
          %vm3204 = vmand %vm3195, %vm3201
          %vm3205 = vmand %vm3196, %vm3199
          %vm3206 = vmand %vm3197, %vm3200
          %vm3207 = vmand %vm3198, %vm3201
          %v3208 = vsel %vm3202, 1, 0
          %v3209 = vsel %vm3203, 1, 0
          %v3210 = vsel %vm3204, 1, 0
          %v3211 = vsel %vm3205, 1, 0
          %v3212 = vsel %vm3206, 1, 0
          %v3213 = vsel %vm3207, 1, 0
          %v3214 = vcvt.s32.f32 %v3208
          %v3215 = vcvt.s32.f32 %v3209
          %v3216 = vcvt.s32.f32 %v3210
          %v3217 = vcvt.s32.f32 %v3211
          %v3218 = vcvt.s32.f32 %v3212
          %v3219 = vcvt.s32.f32 %v3213
          %v3221 = vperm.slane %v3145, 0
          %vm3223 = vcmask 1040384
          %v3224 = vsel %vm3223, %v3143, %v3221
          %vm3225 = vcmask 130048
          %v3227 = vsel %vm3225, %v3224, 0
          %3229 = vmatpush.msra.mxu0 0.0
          %3230 = vmatpush.msra.mxu0 0.0
          %3231 = vmatpush.msra.mxu0 0.0
          %3232 = vmatpush.msra.mxu0 0.0
          %3233 = vmatpush.msra.mxu0 0.0
          %3234 = vmatpush.msra.mxu0 0.0
          %3235 = vmatpush.msra.mxu0 0.0
          %3236 = vmatpush.msra.mxu0 0.0
          %3237 = vmatpush.msra.mxu0 0.0
          %3238 = vmatpush.msra.mxu0 0.0
          %3239 = vmatpush.msra.mxu0 0.0
          %3240 = vmatpush.msra.mxu0 0.0
          %3241 = vmatpush.msra.mxu0 0.0
          %3242 = vmatpush.msra.mxu0 0.0
          %3243 = vmatpush.msra.mxu0 %v3217
          %3244 = vmatpush.msra.mxu0 %v3214
          %3245 = vmatmul.f32.gmra.mxu0 %v3227
          %v3246 = vpop.f32.mrf.mxu0
          %v3247 = vadd.f32 0.0, %v3246
          %3248 = vdwg.mxu0
          %3249 = vmatpush.msra.mxu0 0.0
          %3250 = vmatpush.msra.mxu0 0.0
          %3251 = vmatpush.msra.mxu0 0.0
          %3252 = vmatpush.msra.mxu0 0.0
          %3253 = vmatpush.msra.mxu0 0.0
          %3254 = vmatpush.msra.mxu0 0.0
          %3255 = vmatpush.msra.mxu0 0.0
          %3256 = vmatpush.msra.mxu0 0.0
          %3257 = vmatpush.msra.mxu0 0.0
          %3258 = vmatpush.msra.mxu0 0.0
          %3259 = vmatpush.msra.mxu0 0.0
          %3260 = vmatpush.msra.mxu0 0.0
          %3261 = vmatpush.msra.mxu0 0.0
          %3262 = vmatpush.msra.mxu0 0.0
          %3263 = vmatpush.msra.mxu0 %v3218
          %3264 = vmatpush.msra.mxu0 %v3215
          %3265 = vmatmul.f32.gmra.mxu0 %v3227
          %v3266 = vpop.f32.mrf.mxu0
          %v3267 = vadd.f32 0.0, %v3266
          %3268 = vdwg.mxu0
          %3269 = vmatpush.msra.mxu0 0.0
          %3270 = vmatpush.msra.mxu0 0.0
          %3271 = vmatpush.msra.mxu0 0.0
          %3272 = vmatpush.msra.mxu0 0.0
          %3273 = vmatpush.msra.mxu0 0.0
          %3274 = vmatpush.msra.mxu0 0.0
          %3275 = vmatpush.msra.mxu0 0.0
          %3276 = vmatpush.msra.mxu0 0.0
          %3277 = vmatpush.msra.mxu0 0.0
          %3278 = vmatpush.msra.mxu0 0.0
          %3279 = vmatpush.msra.mxu0 0.0
          %3280 = vmatpush.msra.mxu0 0.0
          %3281 = vmatpush.msra.mxu0 0.0
          %3282 = vmatpush.msra.mxu0 0.0
          %3283 = vmatpush.msra.mxu0 %v3219
          %3284 = vmatpush.msra.mxu0 %v3216
          %3285 = vmatmul.f32.gmra.mxu0 %v3227
          %v3286 = vpop.f32.mrf.mxu0
          %v3287 = vadd.f32 0.0, %v3286
          %3288 = vdwg.mxu0
          %v3289 = vperm.slane %v3247, 0
          %v3290 = vperm.slane %v3267, 0
          %v3291 = vperm.slane %v3287, 0
          %v3292 = vmul.f32 %v2322, %v3289
          %v3293 = vmul.f32 %v2323, %v3290
          %v3294 = vmul.f32 %v2324, %v3291
          %v3295 = vmul.f32 %v2325, %v3289
          %v3296 = vmul.f32 %v2326, %v3290
          %v3297 = vmul.f32 %v2327, %v3291
          %v3298 = vmul.f32 %v2328, %v3289
          %v3299 = vmul.f32 %v2329, %v3290
          %v3300 = vmul.f32 %v2330, %v3291
          %v3301 = vmul.f32 %v2331, %v3289
          %v3302 = vmul.f32 %v2332, %v3290
          %v3303 = vmul.f32 %v2333, %v3291
          %v3304 = vperm.slane %v3247, 1
          %v3305 = vperm.slane %v3267, 1
          %v3306 = vperm.slane %v3287, 1
          %v3307 = vadd.f32 %v3292, %v3304
          %v3308 = vadd.f32 %v3293, %v3305
          %v3309 = vadd.f32 %v3294, %v3306
          %v3310 = vadd.f32 %v3295, %v3304
          %v3311 = vadd.f32 %v3296, %v3305
          %v3312 = vadd.f32 %v3297, %v3306
          %v3313 = vadd.f32 %v3298, %v3304
          %v3314 = vadd.f32 %v3299, %v3305
          %v3315 = vadd.f32 %v3300, %v3306
          %v3316 = vadd.f32 %v3301, %v3304
          %v3317 = vadd.f32 %v3302, %v3305
          %v3318 = vadd.f32 %v3303, %v3306
          %v3319 = vmax.f32 %v3307, 0.0
          %v3320 = vmax.f32 %v3308, 0.0
          %v3321 = vmax.f32 %v3309, 0.0
          %v3322 = vmax.f32 %v3310, 0.0
          %v3323 = vmax.f32 %v3311, 0.0
          %v3324 = vmax.f32 %v3312, 0.0
          %v3325 = vmax.f32 %v3313, 0.0
          %v3326 = vmax.f32 %v3314, 0.0
          %v3327 = vmax.f32 %v3315, 0.0
          %v3328 = vmax.f32 %v3316, 0.0
          %v3329 = vmax.f32 %v3317, 0.0
          %v3330 = vmax.f32 %v3318, 0.0
          %v3331 = vpack.c.bf16 %v3320, %v3319
          %v3332 = vpack.c.bf16 %v3321, %v3321
          %v3333 = vpack.c.bf16 %v3323, %v3322
          %v3334 = vpack.c.bf16 %v3324, %v3324
          %v3335 = vpack.c.bf16 %v3326, %v3325
          %v3336 = vpack.c.bf16 %v3327, %v3327
          %v3337 = vpack.c.bf16 %v3329, %v3328
          %v3338 = vpack.c.bf16 %v3330, %v3330
          %3339 = vst [vmem:[#allocation2] sm:$0xff] %v3331
          %vm3340 = vcmask 257024
          %3341 = vst.msk [vmem:[#allocation2 + $0x8] sm:$0xf] %vm3340, %v3332
          %3342 = vst [vmem:[#allocation2 + $0xc] sm:$0xff] %v3333
          %3343 = vst.msk [vmem:[#allocation2 + $0x14] sm:$0xf] %vm3340, %v3334
          %3344 = vst [vmem:[#allocation2 + $0x18] sm:$0xff] %v3335
          %3345 = vst.msk [vmem:[#allocation2 + $0x20] sm:$0xf] %vm3340, %v3336
          %3346 = vst [vmem:[#allocation2 + $0x24] sm:$0xff] %v3337
          %3347 = vst.msk [vmem:[#allocation2 + $0x2c] sm:$0xf] %vm3340, %v3338
        $region80: #{tpu_custom_call.1} parent=47 // pred_fallthru
          _
        %p3348 = scmp.eq.s32.totalorder %s23, 1
        // Predicated region
        $region81: #{tpu_custom_call.1} parent=47 // pred_check
          %p3349 = pneg %p3348
        $region82: #{tpu_custom_call.1} parent=47 // pred_check_branch
          %3351 = sbr.rel (%p3349) target = $region84
        $region83: #{tpu_custom_call.1} parent=47 // pred_region
          %v3352 = vld [vmem:[#allocation2] sm:$0xff]
          %v3353 = vld [vmem:[#allocation2 + $0x8] sm:$0xf]
          %v3354 = vld [vmem:[#allocation2 + $0xc] sm:$0xff]
          %v3355 = vld [vmem:[#allocation2 + $0x14] sm:$0xf]
          %v3356 = vld [vmem:[#allocation2 + $0x18] sm:$0xff]
          %v3357 = vld [vmem:[#allocation2 + $0x20] sm:$0xf]
          %v3358 = vld [vmem:[#allocation2 + $0x24] sm:$0xff]
          %v3359 = vld [vmem:[#allocation2 + $0x2c] sm:$0xf]
          %s3360 = scalar_lea.vmem %s329, 432 [#allocation8]
          %v3361 = vld [vmem:[%s3360] sm:$0xff]
          %v3362 = vld [vmem:[%s3360 + $0xc] sm:$0xff]
          %v3363 = vld [vmem:[%s3360 + $0x18] sm:$0xff]
          %v3364 = vld [vmem:[%s3360 + $0x24] sm:$0xff]
          %v3365 = vld [vmem:[%s3360 + $0x30] sm:$0xff]
          %v3366 = vld [vmem:[%s3360 + $0x3c] sm:$0xff]
          %v3367 = vld [vmem:[%s3360 + $0x48] sm:$0xff]
          %v3368 = vld [vmem:[%s3360 + $0x54] sm:$0xff]
          %v3369 = vld [vmem:[%s3360 + $0x60] sm:$0xff]
          %v3370 = vld [vmem:[%s3360 + $0x6c] sm:$0xff]
          %v3371 = vld [vmem:[%s3360 + $0x78] sm:$0xff]
          %v3372 = vld [vmem:[%s3360 + $0x84] sm:$0xff]
          %v3373 = vld [vmem:[%s3360 + $0x90] sm:$0xff]
          %v3374 = vld [vmem:[%s3360 + $0x9c] sm:$0xff]
          %v3375 = vld [vmem:[%s3360 + $0xa8] sm:$0xff]
          %v3376 = vld [vmem:[%s3360 + $0xb4] sm:$0xff]
          %v3377 = vld [vmem:[%s3360 + $0xc0] sm:$0xff]
          %v3378 = vld [vmem:[%s3360 + $0xcc] sm:$0xff]
          %v3379 = vld [vmem:[%s3360 + $0xd8] sm:$0xff]
          %v3380 = vld [vmem:[%s3360 + $0xe4] sm:$0xff]
          %v3381 = vld [vmem:[%s3360 + $0xf0] sm:$0xff]
          %v3382 = vld [vmem:[%s3360 + $0xfc] sm:$0xff]
          %v3383 = vld [vmem:[%s3360 + $0x108] sm:$0xff]
          %v3384 = vld [vmem:[%s3360 + $0x114] sm:$0xff]
          %v3385 = vld [vmem:[%s3360 + $0x120] sm:$0xff]
          %v3386 = vld [vmem:[%s3360 + $0x12c] sm:$0xff]
          %v3387 = vld [vmem:[%s3360 + $0x138] sm:$0xff]
          %v3388 = vld [vmem:[%s3360 + $0x144] sm:$0xff]
          %v3389 = vld [vmem:[%s3360 + $0x150] sm:$0xff]
          %v3390 = vld [vmem:[%s3360 + $0x15c] sm:$0xff]
          %v3391 = vld [vmem:[%s3360 + $0x168] sm:$0xff]
          %v3392 = vld [vmem:[%s3360 + $0x174] sm:$0xff]
          %v3393 = vld [vmem:[%s3360 + $0x180] sm:$0xff]
          %v3394 = vld [vmem:[%s3360 + $0x18c] sm:$0xff]
          %v3395 = vld [vmem:[%s3360 + $0x198] sm:$0xff]
          %v3396 = vld [vmem:[%s3360 + $0x1a4] sm:$0xff]
          %v3397 = vld [vmem:[%s329] sm:$0xff]
          %v3398 = vld [vmem:[%s329 + $0xc] sm:$0xff]
          %v3399 = vld [vmem:[%s329 + $0x18] sm:$0xff]
          %v3400 = vld [vmem:[%s329 + $0x24] sm:$0xff]
          %v3401 = vld [vmem:[%s329 + $0x30] sm:$0xff]
          %v3402 = vld [vmem:[%s329 + $0x3c] sm:$0xff]
          %v3403 = vld [vmem:[%s329 + $0x48] sm:$0xff]
          %v3404 = vld [vmem:[%s329 + $0x54] sm:$0xff]
          %v3405 = vld [vmem:[%s329 + $0x60] sm:$0xff]
          %v3406 = vld [vmem:[%s329 + $0x6c] sm:$0xff]
          %v3407 = vld [vmem:[%s329 + $0x78] sm:$0xff]
          %v3408 = vld [vmem:[%s329 + $0x84] sm:$0xff]
          %v3409 = vld [vmem:[%s329 + $0x90] sm:$0xff]
          %v3410 = vld [vmem:[%s329 + $0x9c] sm:$0xff]
          %v3411 = vld [vmem:[%s329 + $0xa8] sm:$0xff]
          %v3412 = vld [vmem:[%s329 + $0xb4] sm:$0xff]
          %v3413 = vld [vmem:[%s329 + $0xc0] sm:$0xff]
          %v3414 = vld [vmem:[%s329 + $0xcc] sm:$0xff]
          %v3415 = vld [vmem:[%s329 + $0xd8] sm:$0xff]
          %v3416 = vld [vmem:[%s329 + $0xe4] sm:$0xff]
          %v3417 = vld [vmem:[%s329 + $0xf0] sm:$0xff]
          %v3418 = vld [vmem:[%s329 + $0xfc] sm:$0xff]
          %v3419 = vld [vmem:[%s329 + $0x108] sm:$0xff]
          %v3420 = vld [vmem:[%s329 + $0x114] sm:$0xff]
          %v3421 = vld [vmem:[%s329 + $0x120] sm:$0xff]
          %v3422 = vld [vmem:[%s329 + $0x12c] sm:$0xff]
          %v3423 = vld [vmem:[%s329 + $0x138] sm:$0xff]
          %v3424 = vld [vmem:[%s329 + $0x144] sm:$0xff]
          %v3425 = vld [vmem:[%s329 + $0x150] sm:$0xff]
          %v3426 = vld [vmem:[%s329 + $0x15c] sm:$0xff]
          %v3427 = vld [vmem:[%s329 + $0x168] sm:$0xff]
          %v3428 = vld [vmem:[%s329 + $0x174] sm:$0xff]
          %v3429 = vld [vmem:[%s329 + $0x180] sm:$0xff]
          %v3430 = vld [vmem:[%s329 + $0x18c] sm:$0xff]
          %v3431 = vld [vmem:[%s329 + $0x198] sm:$0xff]
          %v3432 = vld [vmem:[%s329 + $0x1a4] sm:$0xff]
          %v3441 = vunpack.c.l.b16 %v3352
          %v3442 = vunpack.c.h.b16 %v3352
          %v3443 = vunpack.c.l.b16 %v3353
          %v3444 = vunpack.c.l.b16 %v3354
          %v3445 = vunpack.c.h.b16 %v3354
          %v3446 = vunpack.c.l.b16 %v3355
          %v3447 = vunpack.c.l.b16 %v3356
          %v3448 = vunpack.c.h.b16 %v3356
          %v3449 = vunpack.c.l.b16 %v3357
          %v3450 = vunpack.c.l.b16 %v3358
          %v3451 = vunpack.c.h.b16 %v3358
          %v3452 = vunpack.c.l.b16 %v3359
          %v3453 = vpack.c.b16 %v3444, %v3441
          %v3454 = vpack.c.b16 %v3445, %v3442
          %v3455 = vpack.c.b16 %v3446, %v3443
          %v3456 = vpack.c.b16 %v3450, %v3447
          %v3457 = vpack.c.b16 %v3451, %v3448
          %v3458 = vpack.c.b16 %v3452, %v3449
          %v3499 = vunpack.c.l.b16 %v3397
          %v3500 = vunpack.c.h.b16 %v3397
          %v3501 = vunpack.c.l.b16 %v3398
          %v3502 = vunpack.c.h.b16 %v3398
          %v3503 = vunpack.c.l.b16 %v3399
          %v3504 = vunpack.c.h.b16 %v3399
          %v3505 = vunpack.c.l.b16 %v3400
          %v3506 = vunpack.c.h.b16 %v3400
          %v3507 = vunpack.c.l.b16 %v3401
          %v3508 = vunpack.c.h.b16 %v3401
          %v3509 = vunpack.c.l.b16 %v3402
          %v3510 = vunpack.c.h.b16 %v3402
          %v3511 = vunpack.c.l.b16 %v3403
          %v3512 = vunpack.c.h.b16 %v3403
          %v3513 = vunpack.c.l.b16 %v3404
          %v3514 = vunpack.c.h.b16 %v3404
          %v3515 = vunpack.c.l.b16 %v3405
          %v3516 = vunpack.c.h.b16 %v3405
          %v3517 = vunpack.c.l.b16 %v3406
          %v3518 = vunpack.c.h.b16 %v3406
          %v3519 = vunpack.c.l.b16 %v3407
          %v3520 = vunpack.c.h.b16 %v3407
          %v3521 = vunpack.c.l.b16 %v3408
          %v3522 = vunpack.c.h.b16 %v3408
          %v3523 = vunpack.c.l.b16 %v3409
          %v3524 = vunpack.c.h.b16 %v3409
          %v3525 = vunpack.c.l.b16 %v3410
          %v3526 = vunpack.c.h.b16 %v3410
          %v3527 = vunpack.c.l.b16 %v3411
          %v3528 = vunpack.c.h.b16 %v3411
          %v3529 = vunpack.c.l.b16 %v3412
          %v3530 = vunpack.c.h.b16 %v3412
          %v3531 = vunpack.c.l.b16 %v3413
          %v3532 = vunpack.c.h.b16 %v3413
          %v3533 = vunpack.c.l.b16 %v3414
          %v3534 = vunpack.c.h.b16 %v3414
          %v3535 = vunpack.c.l.b16 %v3415
          %v3536 = vunpack.c.h.b16 %v3415
          %v3537 = vunpack.c.l.b16 %v3416
          %v3538 = vunpack.c.h.b16 %v3416
          %v3539 = vunpack.c.l.b16 %v3417
          %v3540 = vunpack.c.h.b16 %v3417
          %v3541 = vunpack.c.l.b16 %v3418
          %v3542 = vunpack.c.h.b16 %v3418
          %v3543 = vunpack.c.l.b16 %v3419
          %v3544 = vunpack.c.h.b16 %v3419
          %v3545 = vunpack.c.l.b16 %v3420
          %v3546 = vunpack.c.h.b16 %v3420
          %v3547 = vunpack.c.l.b16 %v3421
          %v3548 = vunpack.c.h.b16 %v3421
          %v3549 = vunpack.c.l.b16 %v3422
          %v3550 = vunpack.c.h.b16 %v3422
          %v3551 = vunpack.c.l.b16 %v3423
          %v3552 = vunpack.c.h.b16 %v3423
          %v3553 = vunpack.c.l.b16 %v3424
          %v3554 = vunpack.c.h.b16 %v3424
          %v3555 = vunpack.c.l.b16 %v3425
          %v3556 = vunpack.c.h.b16 %v3425
          %v3557 = vunpack.c.l.b16 %v3426
          %v3558 = vunpack.c.h.b16 %v3426
          %v3559 = vunpack.c.l.b16 %v3427
          %v3560 = vunpack.c.h.b16 %v3427
          %v3561 = vunpack.c.l.b16 %v3428
          %v3562 = vunpack.c.h.b16 %v3428
          %v3563 = vunpack.c.l.b16 %v3429
          %v3564 = vunpack.c.h.b16 %v3429
          %v3565 = vunpack.c.l.b16 %v3430
          %v3566 = vunpack.c.h.b16 %v3430
          %v3567 = vunpack.c.l.b16 %v3431
          %v3568 = vunpack.c.h.b16 %v3431
          %v3569 = vunpack.c.l.b16 %v3432
          %v3570 = vunpack.c.h.b16 %v3432
          %v3571 = vpack.c.b16 %v3501, %v3499
          %v3572 = vpack.c.b16 %v3502, %v3500
          %v3573 = vpack.c.b16 %v3505, %v3503
          %v3574 = vpack.c.b16 %v3506, %v3504
          %v3575 = vpack.c.b16 %v3509, %v3507
          %v3576 = vpack.c.b16 %v3510, %v3508
          %v3577 = vpack.c.b16 %v3513, %v3511
          %v3578 = vpack.c.b16 %v3514, %v3512
          %v3579 = vpack.c.b16 %v3517, %v3515
          %v3580 = vpack.c.b16 %v3518, %v3516
          %v3581 = vpack.c.b16 %v3521, %v3519
          %v3582 = vpack.c.b16 %v3522, %v3520
          %v3583 = vpack.c.b16 %v3525, %v3523
          %v3584 = vpack.c.b16 %v3526, %v3524
          %v3585 = vpack.c.b16 %v3529, %v3527
          %v3586 = vpack.c.b16 %v3530, %v3528
          %v3587 = vpack.c.b16 %v3533, %v3531
          %v3588 = vpack.c.b16 %v3534, %v3532
          %v3589 = vpack.c.b16 %v3537, %v3535
          %v3590 = vpack.c.b16 %v3538, %v3536
          %v3591 = vpack.c.b16 %v3541, %v3539
          %v3592 = vpack.c.b16 %v3542, %v3540
          %v3593 = vpack.c.b16 %v3545, %v3543
          %v3594 = vpack.c.b16 %v3546, %v3544
          %v3595 = vpack.c.b16 %v3549, %v3547
          %v3596 = vpack.c.b16 %v3550, %v3548
          %v3597 = vpack.c.b16 %v3553, %v3551
          %v3598 = vpack.c.b16 %v3554, %v3552
          %v3599 = vpack.c.b16 %v3557, %v3555
          %v3600 = vpack.c.b16 %v3558, %v3556
          %v3601 = vpack.c.b16 %v3561, %v3559
          %v3602 = vpack.c.b16 %v3562, %v3560
          %v3603 = vpack.c.b16 %v3565, %v3563
          %v3604 = vpack.c.b16 %v3566, %v3564
          %v3605 = vpack.c.b16 %v3569, %v3567
          %v3606 = vpack.c.b16 %v3570, %v3568
          %vm3643 = vcmask 261120
          %v3645 = vsel %vm3643, %v3455, 0
          %v3648 = vsel %vm3643, %v3458, 0
          %3650 = vmatpush.bf16.msra.mxu0 %v3585
          %3651 = vmatpush.bf16.msra.mxu0 %v3583
          %3652 = vmatpush.bf16.msra.mxu0 %v3581
          %3653 = vmatpush.bf16.msra.mxu0 %v3579
          %3654 = vmatpush.bf16.msra.mxu0 %v3577
          %3655 = vmatpush.bf16.msra.mxu0 %v3575
          %3656 = vmatpush.bf16.msra.mxu0 %v3573
          %3657 = vmatpush.bf16.msra.mxu0 %v3571
          %3658 = vmatmul.bf16.gmra.mxu0 %v3453
          %v3659 = vpop.f32.mrf.mxu0
          %v3660 = vadd.f32 0.0, %v3659
          %v3661 = vpop.f32.mrf.mxu0
          %v3662 = vadd.f32 0.0, %v3661
          %3663 = vmatmul.bf16.gmra.mxu0 %v3456
          %v3664 = vpop.f32.mrf.mxu0
          %v3665 = vadd.f32 0.0, %v3664
          %v3666 = vpop.f32.mrf.mxu0
          %v3667 = vadd.f32 0.0, %v3666
          %3668 = vdwg.mxu0
          %3669 = vmatpush.bf16.msra.mxu0 %v3601
          %3670 = vmatpush.bf16.msra.mxu0 %v3599
          %3671 = vmatpush.bf16.msra.mxu0 %v3597
          %3672 = vmatpush.bf16.msra.mxu0 %v3595
          %3673 = vmatpush.bf16.msra.mxu0 %v3593
          %3674 = vmatpush.bf16.msra.mxu0 %v3591
          %3675 = vmatpush.bf16.msra.mxu0 %v3589
          %3676 = vmatpush.bf16.msra.mxu0 %v3587
          %3677 = vmatmul.bf16.gmra.mxu0 %v3454
          %v3678 = vpop.f32.mrf.mxu0
          %v3679 = vadd.f32 %v3660, %v3678
          %v3680 = vpop.f32.mrf.mxu0
          %v3681 = vadd.f32 %v3662, %v3680
          %3682 = vmatmul.bf16.gmra.mxu0 %v3457
          %v3683 = vpop.f32.mrf.mxu0
          %v3684 = vadd.f32 %v3665, %v3683
          %v3685 = vpop.f32.mrf.mxu0
          %v3686 = vadd.f32 %v3667, %v3685
          %3687 = vdwg.mxu0
          %3688 = vmatpush.bf16.msra.mxu0 0
          %3689 = vmatpush.bf16.msra.mxu0 0
          %3690 = vmatpush.bf16.msra.mxu0 0
          %3691 = vmatpush.bf16.msra.mxu0 0
          %3692 = vmatpush.bf16.msra.mxu0 0
          %3693 = vmatpush.bf16.msra.mxu0 0
          %3694 = vmatpush.bf16.msra.mxu0 %v3605
          %3695 = vmatpush.bf16.msra.mxu0 %v3603
          %3696 = vmatmul.bf16.gmra.mxu0 %v3645
          %v3697 = vpop.f32.mrf.mxu0
          %v3698 = vadd.f32 %v3679, %v3697
          %v3699 = vpop.f32.mrf.mxu0
          %v3700 = vadd.f32 %v3681, %v3699
          %3701 = vmatmul.bf16.gmra.mxu0 %v3648
          %v3702 = vpop.f32.mrf.mxu0
          %v3703 = vadd.f32 %v3684, %v3702
          %v3704 = vpop.f32.mrf.mxu0
          %v3705 = vadd.f32 %v3686, %v3704
          %3706 = vdwg.mxu0
          %3707 = vmatpush.bf16.msra.mxu0 %v3586
          %3708 = vmatpush.bf16.msra.mxu0 %v3584
          %3709 = vmatpush.bf16.msra.mxu0 %v3582
          %3710 = vmatpush.bf16.msra.mxu0 %v3580
          %3711 = vmatpush.bf16.msra.mxu0 %v3578
          %3712 = vmatpush.bf16.msra.mxu0 %v3576
          %3713 = vmatpush.bf16.msra.mxu0 %v3574
          %3714 = vmatpush.bf16.msra.mxu0 %v3572
          %3715 = vmatmul.bf16.gmra.mxu0 %v3453
          %v3716 = vpop.f32.mrf.mxu0
          %v3717 = vadd.f32 0.0, %v3716
          %v3718 = vpop.f32.mrf.mxu0
          %v3719 = vadd.f32 0.0, %v3718
          %3720 = vmatmul.bf16.gmra.mxu0 %v3456
          %v3721 = vpop.f32.mrf.mxu0
          %v3722 = vadd.f32 0.0, %v3721
          %v3723 = vpop.f32.mrf.mxu0
          %v3724 = vadd.f32 0.0, %v3723
          %3725 = vdwg.mxu0
          %3726 = vmatpush.bf16.msra.mxu0 %v3602
          %3727 = vmatpush.bf16.msra.mxu0 %v3600
          %3728 = vmatpush.bf16.msra.mxu0 %v3598
          %3729 = vmatpush.bf16.msra.mxu0 %v3596
          %3730 = vmatpush.bf16.msra.mxu0 %v3594
          %3731 = vmatpush.bf16.msra.mxu0 %v3592
          %3732 = vmatpush.bf16.msra.mxu0 %v3590
          %3733 = vmatpush.bf16.msra.mxu0 %v3588
          %3734 = vmatmul.bf16.gmra.mxu0 %v3454
          %v3735 = vpop.f32.mrf.mxu0
          %v3736 = vadd.f32 %v3717, %v3735
          %v3737 = vpop.f32.mrf.mxu0
          %v3738 = vadd.f32 %v3719, %v3737
          %3739 = vmatmul.bf16.gmra.mxu0 %v3457
          %v3740 = vpop.f32.mrf.mxu0
          %v3741 = vadd.f32 %v3722, %v3740
          %v3742 = vpop.f32.mrf.mxu0
          %v3743 = vadd.f32 %v3724, %v3742
          %3744 = vdwg.mxu0
          %3745 = vmatpush.bf16.msra.mxu0 0
          %3746 = vmatpush.bf16.msra.mxu0 0
          %3747 = vmatpush.bf16.msra.mxu0 0
          %3748 = vmatpush.bf16.msra.mxu0 0
          %3749 = vmatpush.bf16.msra.mxu0 0
          %3750 = vmatpush.bf16.msra.mxu0 0
          %3751 = vmatpush.bf16.msra.mxu0 %v3606
          %3752 = vmatpush.bf16.msra.mxu0 %v3604
          %3753 = vmatmul.bf16.gmra.mxu0 %v3645
          %v3754 = vpop.f32.mrf.mxu0
          %v3755 = vadd.f32 %v3736, %v3754
          %v3756 = vpop.f32.mrf.mxu0
          %v3757 = vadd.f32 %v3738, %v3756
          %3758 = vmatmul.bf16.gmra.mxu0 %v3648
          %v3759 = vpop.f32.mrf.mxu0
          %v3760 = vadd.f32 %v3741, %v3759
          %v3761 = vpop.f32.mrf.mxu0
          %v3762 = vadd.f32 %v3743, %v3761
          %3763 = vdwg.mxu0
          %v3765 = vsel %vm3643, %v452, 0
          %v3768 = vsel %vm3643, %v453, 0
          %v3771 = vsel %vm3643, %v454, 0
          %v3774 = vsel %vm3643, %v455, 0
          %3776 = vmatpush.msra.mxu0 0.0
          %3777 = vmatpush.msra.mxu0 0.0
          %3778 = vmatpush.msra.mxu0 0.0
          %3779 = vmatpush.msra.mxu0 0.0
          %3780 = vmatpush.msra.mxu0 0.0
          %3781 = vmatpush.msra.mxu0 0.0
          %3782 = vmatpush.msra.mxu0 0.0
          %3783 = vmatpush.msra.mxu0 0.0
          %3784 = vmatpush.msra.mxu0 0.0
          %3785 = vmatpush.msra.mxu0 0.0
          %3786 = vmatpush.msra.mxu0 0.0
          %3787 = vmatpush.msra.mxu0 0.0
          %3788 = vmatpush.msra.mxu0 %v3705
          %3789 = vmatpush.msra.mxu0 %v3703
          %3790 = vmatpush.msra.mxu0 %v3700
          %3791 = vmatpush.msra.mxu0 %v3698
          %3792 = vmatmul.f32.gmra.mxu0 %v3765
          %v3793 = vpop.f32.mrf.mxu0
          %v3794 = vadd.f32 0.0, %v3793
          %3795 = vmatmul.f32.gmra.mxu0 %v3768
          %v3796 = vpop.f32.mrf.mxu0
          %v3797 = vadd.f32 0.0, %v3796
          %3798 = vmatmul.f32.gmra.mxu0 %v3771
          %v3799 = vpop.f32.mrf.mxu0
          %v3800 = vadd.f32 0.0, %v3799
          %3801 = vmatmul.f32.gmra.mxu0 %v3774
          %v3802 = vpop.f32.mrf.mxu0
          %v3803 = vadd.f32 0.0, %v3802
          %3804 = vdwg.mxu0
          %3805 = vmatpush.msra.mxu0 0.0
          %3806 = vmatpush.msra.mxu0 0.0
          %3807 = vmatpush.msra.mxu0 0.0
          %3808 = vmatpush.msra.mxu0 0.0
          %3809 = vmatpush.msra.mxu0 0.0
          %3810 = vmatpush.msra.mxu0 0.0
          %3811 = vmatpush.msra.mxu0 0.0
          %3812 = vmatpush.msra.mxu0 0.0
          %3813 = vmatpush.msra.mxu0 0.0
          %3814 = vmatpush.msra.mxu0 0.0
          %3815 = vmatpush.msra.mxu0 0.0
          %3816 = vmatpush.msra.mxu0 0.0
          %3817 = vmatpush.msra.mxu0 %v3762
          %3818 = vmatpush.msra.mxu0 %v3760
          %3819 = vmatpush.msra.mxu0 %v3757
          %3820 = vmatpush.msra.mxu0 %v3755
          %3821 = vmatmul.f32.gmra.mxu0 %v3765
          %v3822 = vpop.f32.mrf.mxu0
          %v3823 = vadd.f32 0.0, %v3822
          %3824 = vmatmul.f32.gmra.mxu0 %v3768
          %v3825 = vpop.f32.mrf.mxu0
          %v3826 = vadd.f32 0.0, %v3825
          %3827 = vmatmul.f32.gmra.mxu0 %v3771
          %v3828 = vpop.f32.mrf.mxu0
          %v3829 = vadd.f32 0.0, %v3828
          %3830 = vmatmul.f32.gmra.mxu0 %v3774
          %v3831 = vpop.f32.mrf.mxu0
          %v3832 = vadd.f32 0.0, %v3831
          %3833 = vdwg.mxu0
          %v3870 = vunpack.c.l.b16 %v3361
          %v3871 = vunpack.c.h.b16 %v3361
          %v3872 = vunpack.c.l.b16 %v3362
          %v3873 = vunpack.c.h.b16 %v3362
          %v3874 = vunpack.c.l.b16 %v3363
          %v3875 = vunpack.c.h.b16 %v3363
          %v3876 = vunpack.c.l.b16 %v3364
          %v3877 = vunpack.c.h.b16 %v3364
          %v3878 = vunpack.c.l.b16 %v3365
          %v3879 = vunpack.c.h.b16 %v3365
          %v3880 = vunpack.c.l.b16 %v3366
          %v3881 = vunpack.c.h.b16 %v3366
          %v3882 = vunpack.c.l.b16 %v3367
          %v3883 = vunpack.c.h.b16 %v3367
          %v3884 = vunpack.c.l.b16 %v3368
          %v3885 = vunpack.c.h.b16 %v3368
          %v3886 = vunpack.c.l.b16 %v3369
          %v3887 = vunpack.c.h.b16 %v3369
          %v3888 = vunpack.c.l.b16 %v3370
          %v3889 = vunpack.c.h.b16 %v3370
          %v3890 = vunpack.c.l.b16 %v3371
          %v3891 = vunpack.c.h.b16 %v3371
          %v3892 = vunpack.c.l.b16 %v3372
          %v3893 = vunpack.c.h.b16 %v3372
          %v3894 = vunpack.c.l.b16 %v3373
          %v3895 = vunpack.c.h.b16 %v3373
          %v3896 = vunpack.c.l.b16 %v3374
          %v3897 = vunpack.c.h.b16 %v3374
          %v3898 = vunpack.c.l.b16 %v3375
          %v3899 = vunpack.c.h.b16 %v3375
          %v3900 = vunpack.c.l.b16 %v3376
          %v3901 = vunpack.c.h.b16 %v3376
          %v3902 = vunpack.c.l.b16 %v3377
          %v3903 = vunpack.c.h.b16 %v3377
          %v3904 = vunpack.c.l.b16 %v3378
          %v3905 = vunpack.c.h.b16 %v3378
          %v3906 = vunpack.c.l.b16 %v3379
          %v3907 = vunpack.c.h.b16 %v3379
          %v3908 = vunpack.c.l.b16 %v3380
          %v3909 = vunpack.c.h.b16 %v3380
          %v3910 = vunpack.c.l.b16 %v3381
          %v3911 = vunpack.c.h.b16 %v3381
          %v3912 = vunpack.c.l.b16 %v3382
          %v3913 = vunpack.c.h.b16 %v3382
          %v3914 = vunpack.c.l.b16 %v3383
          %v3915 = vunpack.c.h.b16 %v3383
          %v3916 = vunpack.c.l.b16 %v3384
          %v3917 = vunpack.c.h.b16 %v3384
          %v3918 = vunpack.c.l.b16 %v3385
          %v3919 = vunpack.c.h.b16 %v3385
          %v3920 = vunpack.c.l.b16 %v3386
          %v3921 = vunpack.c.h.b16 %v3386
          %v3922 = vunpack.c.l.b16 %v3387
          %v3923 = vunpack.c.h.b16 %v3387
          %v3924 = vunpack.c.l.b16 %v3388
          %v3925 = vunpack.c.h.b16 %v3388
          %v3926 = vunpack.c.l.b16 %v3389
          %v3927 = vunpack.c.h.b16 %v3389
          %v3928 = vunpack.c.l.b16 %v3390
          %v3929 = vunpack.c.h.b16 %v3390
          %v3930 = vunpack.c.l.b16 %v3391
          %v3931 = vunpack.c.h.b16 %v3391
          %v3932 = vunpack.c.l.b16 %v3392
          %v3933 = vunpack.c.h.b16 %v3392
          %v3934 = vunpack.c.l.b16 %v3393
          %v3935 = vunpack.c.h.b16 %v3393
          %v3936 = vunpack.c.l.b16 %v3394
          %v3937 = vunpack.c.h.b16 %v3394
          %v3938 = vunpack.c.l.b16 %v3395
          %v3939 = vunpack.c.h.b16 %v3395
          %v3940 = vunpack.c.l.b16 %v3396
          %v3941 = vunpack.c.h.b16 %v3396
          %v3942 = vpack.c.b16 %v3872, %v3870
          %v3943 = vpack.c.b16 %v3873, %v3871
          %v3944 = vpack.c.b16 %v3876, %v3874
          %v3945 = vpack.c.b16 %v3877, %v3875
          %v3946 = vpack.c.b16 %v3880, %v3878
          %v3947 = vpack.c.b16 %v3881, %v3879
          %v3948 = vpack.c.b16 %v3884, %v3882
          %v3949 = vpack.c.b16 %v3885, %v3883
          %v3950 = vpack.c.b16 %v3888, %v3886
          %v3951 = vpack.c.b16 %v3889, %v3887
          %v3952 = vpack.c.b16 %v3892, %v3890
          %v3953 = vpack.c.b16 %v3893, %v3891
          %v3954 = vpack.c.b16 %v3896, %v3894
          %v3955 = vpack.c.b16 %v3897, %v3895
          %v3956 = vpack.c.b16 %v3900, %v3898
          %v3957 = vpack.c.b16 %v3901, %v3899
          %v3958 = vpack.c.b16 %v3904, %v3902
          %v3959 = vpack.c.b16 %v3905, %v3903
          %v3960 = vpack.c.b16 %v3908, %v3906
          %v3961 = vpack.c.b16 %v3909, %v3907
          %v3962 = vpack.c.b16 %v3912, %v3910
          %v3963 = vpack.c.b16 %v3913, %v3911
          %v3964 = vpack.c.b16 %v3916, %v3914
          %v3965 = vpack.c.b16 %v3917, %v3915
          %v3966 = vpack.c.b16 %v3920, %v3918
          %v3967 = vpack.c.b16 %v3921, %v3919
          %v3968 = vpack.c.b16 %v3924, %v3922
          %v3969 = vpack.c.b16 %v3925, %v3923
          %v3970 = vpack.c.b16 %v3928, %v3926
          %v3971 = vpack.c.b16 %v3929, %v3927
          %v3972 = vpack.c.b16 %v3932, %v3930
          %v3973 = vpack.c.b16 %v3933, %v3931
          %v3974 = vpack.c.b16 %v3936, %v3934
          %v3975 = vpack.c.b16 %v3937, %v3935
          %v3976 = vpack.c.b16 %v3940, %v3938
          %v3977 = vpack.c.b16 %v3941, %v3939
          %4014 = vmatpush.bf16.msra.mxu0 %v3956
          %4015 = vmatpush.bf16.msra.mxu0 %v3954
          %4016 = vmatpush.bf16.msra.mxu0 %v3952
          %4017 = vmatpush.bf16.msra.mxu0 %v3950
          %4018 = vmatpush.bf16.msra.mxu0 %v3948
          %4019 = vmatpush.bf16.msra.mxu0 %v3946
          %4020 = vmatpush.bf16.msra.mxu0 %v3944
          %4021 = vmatpush.bf16.msra.mxu0 %v3942
          %4022 = vmatmul.bf16.gmra.mxu0 %v3453
          %v4023 = vpop.f32.mrf.mxu0
          %v4024 = vadd.f32 %v3794, %v4023
          %v4025 = vpop.f32.mrf.mxu0
          %v4026 = vadd.f32 %v3797, %v4025
          %4027 = vmatmul.bf16.gmra.mxu0 %v3456
          %v4028 = vpop.f32.mrf.mxu0
          %v4029 = vadd.f32 %v3800, %v4028
          %v4030 = vpop.f32.mrf.mxu0
          %v4031 = vadd.f32 %v3803, %v4030
          %4032 = vdwg.mxu0
          %4033 = vmatpush.bf16.msra.mxu0 %v3972
          %4034 = vmatpush.bf16.msra.mxu0 %v3970
          %4035 = vmatpush.bf16.msra.mxu0 %v3968
          %4036 = vmatpush.bf16.msra.mxu0 %v3966
          %4037 = vmatpush.bf16.msra.mxu0 %v3964
          %4038 = vmatpush.bf16.msra.mxu0 %v3962
          %4039 = vmatpush.bf16.msra.mxu0 %v3960
          %4040 = vmatpush.bf16.msra.mxu0 %v3958
          %4041 = vmatmul.bf16.gmra.mxu0 %v3454
          %v4042 = vpop.f32.mrf.mxu0
          %v4043 = vadd.f32 %v4024, %v4042
          %v4044 = vpop.f32.mrf.mxu0
          %v4045 = vadd.f32 %v4026, %v4044
          %4046 = vmatmul.bf16.gmra.mxu0 %v3457
          %v4047 = vpop.f32.mrf.mxu0
          %v4048 = vadd.f32 %v4029, %v4047
          %v4049 = vpop.f32.mrf.mxu0
          %v4050 = vadd.f32 %v4031, %v4049
          %4051 = vdwg.mxu0
          %4052 = vmatpush.bf16.msra.mxu0 0
          %4053 = vmatpush.bf16.msra.mxu0 0
          %4054 = vmatpush.bf16.msra.mxu0 0
          %4055 = vmatpush.bf16.msra.mxu0 0
          %4056 = vmatpush.bf16.msra.mxu0 0
          %4057 = vmatpush.bf16.msra.mxu0 0
          %4058 = vmatpush.bf16.msra.mxu0 %v3976
          %4059 = vmatpush.bf16.msra.mxu0 %v3974
          %4060 = vmatmul.bf16.gmra.mxu0 %v3645
          %v4061 = vpop.f32.mrf.mxu0
          %v4062 = vadd.f32 %v4043, %v4061
          %v4063 = vpop.f32.mrf.mxu0
          %v4064 = vadd.f32 %v4045, %v4063
          %4065 = vmatmul.bf16.gmra.mxu0 %v3648
          %v4066 = vpop.f32.mrf.mxu0
          %v4067 = vadd.f32 %v4048, %v4066
          %v4068 = vpop.f32.mrf.mxu0
          %v4069 = vadd.f32 %v4050, %v4068
          %4070 = vdwg.mxu0
          %4071 = vmatpush.bf16.msra.mxu0 %v3957
          %4072 = vmatpush.bf16.msra.mxu0 %v3955
          %4073 = vmatpush.bf16.msra.mxu0 %v3953
          %4074 = vmatpush.bf16.msra.mxu0 %v3951
          %4075 = vmatpush.bf16.msra.mxu0 %v3949
          %4076 = vmatpush.bf16.msra.mxu0 %v3947
          %4077 = vmatpush.bf16.msra.mxu0 %v3945
          %4078 = vmatpush.bf16.msra.mxu0 %v3943
          %4079 = vmatmul.bf16.gmra.mxu0 %v3453
          %v4080 = vpop.f32.mrf.mxu0
          %v4081 = vadd.f32 %v3823, %v4080
          %v4082 = vpop.f32.mrf.mxu0
          %v4083 = vadd.f32 %v3826, %v4082
          %4084 = vmatmul.bf16.gmra.mxu0 %v3456
          %v4085 = vpop.f32.mrf.mxu0
          %v4086 = vadd.f32 %v3829, %v4085
          %v4087 = vpop.f32.mrf.mxu0
          %v4088 = vadd.f32 %v3832, %v4087
          %4089 = vdwg.mxu0
          %4090 = vmatpush.bf16.msra.mxu0 %v3973
          %4091 = vmatpush.bf16.msra.mxu0 %v3971
          %4092 = vmatpush.bf16.msra.mxu0 %v3969
          %4093 = vmatpush.bf16.msra.mxu0 %v3967
          %4094 = vmatpush.bf16.msra.mxu0 %v3965
          %4095 = vmatpush.bf16.msra.mxu0 %v3963
          %4096 = vmatpush.bf16.msra.mxu0 %v3961
          %4097 = vmatpush.bf16.msra.mxu0 %v3959
          %4098 = vmatmul.bf16.gmra.mxu0 %v3454
          %v4099 = vpop.f32.mrf.mxu0
          %v4100 = vadd.f32 %v4081, %v4099
          %v4101 = vpop.f32.mrf.mxu0
          %v4102 = vadd.f32 %v4083, %v4101
          %4103 = vmatmul.bf16.gmra.mxu0 %v3457
          %v4104 = vpop.f32.mrf.mxu0
          %v4105 = vadd.f32 %v4086, %v4104
          %v4106 = vpop.f32.mrf.mxu0
          %v4107 = vadd.f32 %v4088, %v4106
          %4108 = vdwg.mxu0
          %4109 = vmatpush.bf16.msra.mxu0 0
          %4110 = vmatpush.bf16.msra.mxu0 0
          %4111 = vmatpush.bf16.msra.mxu0 0
          %4112 = vmatpush.bf16.msra.mxu0 0
          %4113 = vmatpush.bf16.msra.mxu0 0
          %4114 = vmatpush.bf16.msra.mxu0 0
          %4115 = vmatpush.bf16.msra.mxu0 %v3977
          %4116 = vmatpush.bf16.msra.mxu0 %v3975
          %4117 = vmatmul.bf16.gmra.mxu0 %v3645
          %v4118 = vpop.f32.mrf.mxu0
          %v4119 = vadd.f32 %v4100, %v4118
          %v4120 = vpop.f32.mrf.mxu0
          %v4121 = vadd.f32 %v4102, %v4120
          %4122 = vmatmul.bf16.gmra.mxu0 %v3648
          %v4123 = vpop.f32.mrf.mxu0
          %v4124 = vadd.f32 %v4105, %v4123
          %v4125 = vpop.f32.mrf.mxu0
          %v4126 = vadd.f32 %v4107, %v4125
          %4127 = vdwg.mxu0
          %s4128 = scalar_lea.vmem %s329, 864 [#allocation8]
          %v4129 = vld [vmem:[%s4128] sm:$0xff]
          %v4130 = vld [vmem:[%s4128 + $0xc] sm:$0xff]
          %v4131 = vld [vmem:[%s4128 + $0x18] sm:$0xff]
          %v4132 = vld [vmem:[%s4128 + $0x24] sm:$0xff]
          %v4133 = vld [vmem:[%s4128 + $0x30] sm:$0xff]
          %v4134 = vld [vmem:[%s4128 + $0x3c] sm:$0xff]
          %v4135 = vld [vmem:[%s4128 + $0x48] sm:$0xff]
          %v4136 = vld [vmem:[%s4128 + $0x54] sm:$0xff]
          %v4137 = vld [vmem:[%s4128 + $0x60] sm:$0xff]
          %v4138 = vld [vmem:[%s4128 + $0x6c] sm:$0xff]
          %v4139 = vld [vmem:[%s4128 + $0x78] sm:$0xff]
          %v4140 = vld [vmem:[%s4128 + $0x84] sm:$0xff]
          %v4141 = vld [vmem:[%s4128 + $0x90] sm:$0xff]
          %v4142 = vld [vmem:[%s4128 + $0x9c] sm:$0xff]
          %v4143 = vld [vmem:[%s4128 + $0xa8] sm:$0xff]
          %v4144 = vld [vmem:[%s4128 + $0xb4] sm:$0xff]
          %v4145 = vld [vmem:[%s4128 + $0xc0] sm:$0xff]
          %v4146 = vld [vmem:[%s4128 + $0xcc] sm:$0xff]
          %v4147 = vld [vmem:[%s4128 + $0xd8] sm:$0xff]
          %v4148 = vld [vmem:[%s4128 + $0xe4] sm:$0xff]
          %v4149 = vld [vmem:[%s4128 + $0xf0] sm:$0xff]
          %v4150 = vld [vmem:[%s4128 + $0xfc] sm:$0xff]
          %v4151 = vld [vmem:[%s4128 + $0x108] sm:$0xff]
          %v4152 = vld [vmem:[%s4128 + $0x114] sm:$0xff]
          %v4153 = vld [vmem:[%s4128 + $0x120] sm:$0xff]
          %v4154 = vld [vmem:[%s4128 + $0x12c] sm:$0xff]
          %v4155 = vld [vmem:[%s4128 + $0x138] sm:$0xff]
          %v4156 = vld [vmem:[%s4128 + $0x144] sm:$0xff]
          %v4157 = vld [vmem:[%s4128 + $0x150] sm:$0xff]
          %v4158 = vld [vmem:[%s4128 + $0x15c] sm:$0xff]
          %v4159 = vld [vmem:[%s4128 + $0x168] sm:$0xff]
          %v4160 = vld [vmem:[%s4128 + $0x174] sm:$0xff]
          %v4161 = vld [vmem:[%s4128 + $0x180] sm:$0xff]
          %v4162 = vld [vmem:[%s4128 + $0x18c] sm:$0xff]
          %v4163 = vld [vmem:[%s4128 + $0x198] sm:$0xff]
          %v4164 = vld [vmem:[%s4128 + $0x1a4] sm:$0xff]
          %v4201 = vunpack.c.l.b16 %v4129
          %v4202 = vunpack.c.h.b16 %v4129
          %v4203 = vunpack.c.l.b16 %v4130
          %v4204 = vunpack.c.h.b16 %v4130
          %v4205 = vunpack.c.l.b16 %v4131
          %v4206 = vunpack.c.h.b16 %v4131
          %v4207 = vunpack.c.l.b16 %v4132
          %v4208 = vunpack.c.h.b16 %v4132
          %v4209 = vunpack.c.l.b16 %v4133
          %v4210 = vunpack.c.h.b16 %v4133
          %v4211 = vunpack.c.l.b16 %v4134
          %v4212 = vunpack.c.h.b16 %v4134
          %v4213 = vunpack.c.l.b16 %v4135
          %v4214 = vunpack.c.h.b16 %v4135
          %v4215 = vunpack.c.l.b16 %v4136
          %v4216 = vunpack.c.h.b16 %v4136
          %v4217 = vunpack.c.l.b16 %v4137
          %v4218 = vunpack.c.h.b16 %v4137
          %v4219 = vunpack.c.l.b16 %v4138
          %v4220 = vunpack.c.h.b16 %v4138
          %v4221 = vunpack.c.l.b16 %v4139
          %v4222 = vunpack.c.h.b16 %v4139
          %v4223 = vunpack.c.l.b16 %v4140
          %v4224 = vunpack.c.h.b16 %v4140
          %v4225 = vunpack.c.l.b16 %v4141
          %v4226 = vunpack.c.h.b16 %v4141
          %v4227 = vunpack.c.l.b16 %v4142
          %v4228 = vunpack.c.h.b16 %v4142
          %v4229 = vunpack.c.l.b16 %v4143
          %v4230 = vunpack.c.h.b16 %v4143
          %v4231 = vunpack.c.l.b16 %v4144
          %v4232 = vunpack.c.h.b16 %v4144
          %v4233 = vunpack.c.l.b16 %v4145
          %v4234 = vunpack.c.h.b16 %v4145
          %v4235 = vunpack.c.l.b16 %v4146
          %v4236 = vunpack.c.h.b16 %v4146
          %v4237 = vunpack.c.l.b16 %v4147
          %v4238 = vunpack.c.h.b16 %v4147
          %v4239 = vunpack.c.l.b16 %v4148
          %v4240 = vunpack.c.h.b16 %v4148
          %v4241 = vunpack.c.l.b16 %v4149
          %v4242 = vunpack.c.h.b16 %v4149
          %v4243 = vunpack.c.l.b16 %v4150
          %v4244 = vunpack.c.h.b16 %v4150
          %v4245 = vunpack.c.l.b16 %v4151
          %v4246 = vunpack.c.h.b16 %v4151
          %v4247 = vunpack.c.l.b16 %v4152
          %v4248 = vunpack.c.h.b16 %v4152
          %v4249 = vunpack.c.l.b16 %v4153
          %v4250 = vunpack.c.h.b16 %v4153
          %v4251 = vunpack.c.l.b16 %v4154
          %v4252 = vunpack.c.h.b16 %v4154
          %v4253 = vunpack.c.l.b16 %v4155
          %v4254 = vunpack.c.h.b16 %v4155
          %v4255 = vunpack.c.l.b16 %v4156
          %v4256 = vunpack.c.h.b16 %v4156
          %v4257 = vunpack.c.l.b16 %v4157
          %v4258 = vunpack.c.h.b16 %v4157
          %v4259 = vunpack.c.l.b16 %v4158
          %v4260 = vunpack.c.h.b16 %v4158
          %v4261 = vunpack.c.l.b16 %v4159
          %v4262 = vunpack.c.h.b16 %v4159
          %v4263 = vunpack.c.l.b16 %v4160
          %v4264 = vunpack.c.h.b16 %v4160
          %v4265 = vunpack.c.l.b16 %v4161
          %v4266 = vunpack.c.h.b16 %v4161
          %v4267 = vunpack.c.l.b16 %v4162
          %v4268 = vunpack.c.h.b16 %v4162
          %v4269 = vunpack.c.l.b16 %v4163
          %v4270 = vunpack.c.h.b16 %v4163
          %v4271 = vunpack.c.l.b16 %v4164
          %v4272 = vunpack.c.h.b16 %v4164
          %v4273 = vpack.c.b16 %v4203, %v4201
          %v4274 = vpack.c.b16 %v4204, %v4202
          %v4275 = vpack.c.b16 %v4207, %v4205
          %v4276 = vpack.c.b16 %v4208, %v4206
          %v4277 = vpack.c.b16 %v4211, %v4209
          %v4278 = vpack.c.b16 %v4212, %v4210
          %v4279 = vpack.c.b16 %v4215, %v4213
          %v4280 = vpack.c.b16 %v4216, %v4214
          %v4281 = vpack.c.b16 %v4219, %v4217
          %v4282 = vpack.c.b16 %v4220, %v4218
          %v4283 = vpack.c.b16 %v4223, %v4221
          %v4284 = vpack.c.b16 %v4224, %v4222
          %v4285 = vpack.c.b16 %v4227, %v4225
          %v4286 = vpack.c.b16 %v4228, %v4226
          %v4287 = vpack.c.b16 %v4231, %v4229
          %v4288 = vpack.c.b16 %v4232, %v4230
          %v4289 = vpack.c.b16 %v4235, %v4233
          %v4290 = vpack.c.b16 %v4236, %v4234
          %v4291 = vpack.c.b16 %v4239, %v4237
          %v4292 = vpack.c.b16 %v4240, %v4238
          %v4293 = vpack.c.b16 %v4243, %v4241
          %v4294 = vpack.c.b16 %v4244, %v4242
          %v4295 = vpack.c.b16 %v4247, %v4245
          %v4296 = vpack.c.b16 %v4248, %v4246
          %v4297 = vpack.c.b16 %v4251, %v4249
          %v4298 = vpack.c.b16 %v4252, %v4250
          %v4299 = vpack.c.b16 %v4255, %v4253
          %v4300 = vpack.c.b16 %v4256, %v4254
          %v4301 = vpack.c.b16 %v4259, %v4257
          %v4302 = vpack.c.b16 %v4260, %v4258
          %v4303 = vpack.c.b16 %v4263, %v4261
          %v4304 = vpack.c.b16 %v4264, %v4262
          %v4305 = vpack.c.b16 %v4267, %v4265
          %v4306 = vpack.c.b16 %v4268, %v4266
          %v4307 = vpack.c.b16 %v4271, %v4269
          %v4308 = vpack.c.b16 %v4272, %v4270
          %4345 = vmatpush.bf16.msra.mxu0 %v4287
          %4346 = vmatpush.bf16.msra.mxu0 %v4285
          %4347 = vmatpush.bf16.msra.mxu0 %v4283
          %4348 = vmatpush.bf16.msra.mxu0 %v4281
          %4349 = vmatpush.bf16.msra.mxu0 %v4279
          %4350 = vmatpush.bf16.msra.mxu0 %v4277
          %4351 = vmatpush.bf16.msra.mxu0 %v4275
          %4352 = vmatpush.bf16.msra.mxu0 %v4273
          %4353 = vmatmul.bf16.gmra.mxu0 %v3453
          %v4354 = vpop.f32.mrf.mxu0
          %v4355 = vadd.f32 0.0, %v4354
          %v4356 = vpop.f32.mrf.mxu0
          %v4357 = vadd.f32 0.0, %v4356
          %4358 = vmatmul.bf16.gmra.mxu0 %v3456
          %v4359 = vpop.f32.mrf.mxu0
          %v4360 = vadd.f32 0.0, %v4359
          %v4361 = vpop.f32.mrf.mxu0
          %v4362 = vadd.f32 0.0, %v4361
          %4363 = vdwg.mxu0
          %4364 = vmatpush.bf16.msra.mxu0 %v4303
          %4365 = vmatpush.bf16.msra.mxu0 %v4301
          %4366 = vmatpush.bf16.msra.mxu0 %v4299
          %4367 = vmatpush.bf16.msra.mxu0 %v4297
          %4368 = vmatpush.bf16.msra.mxu0 %v4295
          %4369 = vmatpush.bf16.msra.mxu0 %v4293
          %4370 = vmatpush.bf16.msra.mxu0 %v4291
          %4371 = vmatpush.bf16.msra.mxu0 %v4289
          %4372 = vmatmul.bf16.gmra.mxu0 %v3454
          %v4373 = vpop.f32.mrf.mxu0
          %v4374 = vadd.f32 %v4355, %v4373
          %v4375 = vpop.f32.mrf.mxu0
          %v4376 = vadd.f32 %v4357, %v4375
          %4377 = vmatmul.bf16.gmra.mxu0 %v3457
          %v4378 = vpop.f32.mrf.mxu0
          %v4379 = vadd.f32 %v4360, %v4378
          %v4380 = vpop.f32.mrf.mxu0
          %v4381 = vadd.f32 %v4362, %v4380
          %4382 = vdwg.mxu0
          %4383 = vmatpush.bf16.msra.mxu0 0
          %4384 = vmatpush.bf16.msra.mxu0 0
          %4385 = vmatpush.bf16.msra.mxu0 0
          %4386 = vmatpush.bf16.msra.mxu0 0
          %4387 = vmatpush.bf16.msra.mxu0 0
          %4388 = vmatpush.bf16.msra.mxu0 0
          %4389 = vmatpush.bf16.msra.mxu0 %v4307
          %4390 = vmatpush.bf16.msra.mxu0 %v4305
          %4391 = vmatmul.bf16.gmra.mxu0 %v3645
          %v4392 = vpop.f32.mrf.mxu0
          %v4393 = vadd.f32 %v4374, %v4392
          %v4394 = vpop.f32.mrf.mxu0
          %v4395 = vadd.f32 %v4376, %v4394
          %4396 = vmatmul.bf16.gmra.mxu0 %v3648
          %v4397 = vpop.f32.mrf.mxu0
          %v4398 = vadd.f32 %v4379, %v4397
          %v4399 = vpop.f32.mrf.mxu0
          %v4400 = vadd.f32 %v4381, %v4399
          %4401 = vdwg.mxu0
          %4402 = vmatpush.bf16.msra.mxu0 %v4288
          %4403 = vmatpush.bf16.msra.mxu0 %v4286
          %4404 = vmatpush.bf16.msra.mxu0 %v4284
          %4405 = vmatpush.bf16.msra.mxu0 %v4282
          %4406 = vmatpush.bf16.msra.mxu0 %v4280
          %4407 = vmatpush.bf16.msra.mxu0 %v4278
          %4408 = vmatpush.bf16.msra.mxu0 %v4276
          %4409 = vmatpush.bf16.msra.mxu0 %v4274
          %4410 = vmatmul.bf16.gmra.mxu0 %v3453
          %v4411 = vpop.f32.mrf.mxu0
          %v4412 = vadd.f32 0.0, %v4411
          %v4413 = vpop.f32.mrf.mxu0
          %v4414 = vadd.f32 0.0, %v4413
          %4415 = vmatmul.bf16.gmra.mxu0 %v3456
          %v4416 = vpop.f32.mrf.mxu0
          %v4417 = vadd.f32 0.0, %v4416
          %v4418 = vpop.f32.mrf.mxu0
          %v4419 = vadd.f32 0.0, %v4418
          %4420 = vdwg.mxu0
          %4421 = vmatpush.bf16.msra.mxu0 %v4304
          %4422 = vmatpush.bf16.msra.mxu0 %v4302
          %4423 = vmatpush.bf16.msra.mxu0 %v4300
          %4424 = vmatpush.bf16.msra.mxu0 %v4298
          %4425 = vmatpush.bf16.msra.mxu0 %v4296
          %4426 = vmatpush.bf16.msra.mxu0 %v4294
          %4427 = vmatpush.bf16.msra.mxu0 %v4292
          %4428 = vmatpush.bf16.msra.mxu0 %v4290
          %4429 = vmatmul.bf16.gmra.mxu0 %v3454
          %v4430 = vpop.f32.mrf.mxu0
          %v4431 = vadd.f32 %v4412, %v4430
          %v4432 = vpop.f32.mrf.mxu0
          %v4433 = vadd.f32 %v4414, %v4432
          %4434 = vmatmul.bf16.gmra.mxu0 %v3457
          %v4435 = vpop.f32.mrf.mxu0
          %v4436 = vadd.f32 %v4417, %v4435
          %v4437 = vpop.f32.mrf.mxu0
          %v4438 = vadd.f32 %v4419, %v4437
          %4439 = vdwg.mxu0
          %4440 = vmatpush.bf16.msra.mxu0 0
          %4441 = vmatpush.bf16.msra.mxu0 0
          %4442 = vmatpush.bf16.msra.mxu0 0
          %4443 = vmatpush.bf16.msra.mxu0 0
          %4444 = vmatpush.bf16.msra.mxu0 0
          %4445 = vmatpush.bf16.msra.mxu0 0
          %4446 = vmatpush.bf16.msra.mxu0 %v4308
          %4447 = vmatpush.bf16.msra.mxu0 %v4306
          %4448 = vmatmul.bf16.gmra.mxu0 %v3645
          %v4449 = vpop.f32.mrf.mxu0
          %v4450 = vadd.f32 %v4431, %v4449
          %v4451 = vpop.f32.mrf.mxu0
          %v4452 = vadd.f32 %v4433, %v4451
          %4453 = vmatmul.bf16.gmra.mxu0 %v3648
          %v4454 = vpop.f32.mrf.mxu0
          %v4455 = vadd.f32 %v4436, %v4454
          %v4456 = vpop.f32.mrf.mxu0
          %v4457 = vadd.f32 %v4438, %v4456
          %4458 = vdwg.mxu0
          %v4460 = vsel %vm3643, %v476, 0
          %v4463 = vsel %vm3643, %v477, 0
          %v4466 = vsel %vm3643, %v478, 0
          %v4469 = vsel %vm3643, %v479, 0
          %4471 = vmatpush.msra.mxu0 0.0
          %4472 = vmatpush.msra.mxu0 0.0
          %4473 = vmatpush.msra.mxu0 0.0
          %4474 = vmatpush.msra.mxu0 0.0
          %4475 = vmatpush.msra.mxu0 0.0
          %4476 = vmatpush.msra.mxu0 0.0
          %4477 = vmatpush.msra.mxu0 0.0
          %4478 = vmatpush.msra.mxu0 0.0
          %4479 = vmatpush.msra.mxu0 0.0
          %4480 = vmatpush.msra.mxu0 0.0
          %4481 = vmatpush.msra.mxu0 0.0
          %4482 = vmatpush.msra.mxu0 0.0
          %4483 = vmatpush.msra.mxu0 %v4400
          %4484 = vmatpush.msra.mxu0 %v4398
          %4485 = vmatpush.msra.mxu0 %v4395
          %4486 = vmatpush.msra.mxu0 %v4393
          %4487 = vmatmul.f32.gmra.mxu0 %v4460
          %v4488 = vpop.f32.mrf.mxu0
          %v4489 = vadd.f32 0.0, %v4488
          %4490 = vmatmul.f32.gmra.mxu0 %v4463
          %v4491 = vpop.f32.mrf.mxu0
          %v4492 = vadd.f32 0.0, %v4491
          %4493 = vmatmul.f32.gmra.mxu0 %v4466
          %v4494 = vpop.f32.mrf.mxu0
          %v4495 = vadd.f32 0.0, %v4494
          %4496 = vmatmul.f32.gmra.mxu0 %v4469
          %v4497 = vpop.f32.mrf.mxu0
          %v4498 = vadd.f32 0.0, %v4497
          %4499 = vdwg.mxu0
          %4500 = vmatpush.msra.mxu0 0.0
          %4501 = vmatpush.msra.mxu0 0.0
          %4502 = vmatpush.msra.mxu0 0.0
          %4503 = vmatpush.msra.mxu0 0.0
          %4504 = vmatpush.msra.mxu0 0.0
          %4505 = vmatpush.msra.mxu0 0.0
          %4506 = vmatpush.msra.mxu0 0.0
          %4507 = vmatpush.msra.mxu0 0.0
          %4508 = vmatpush.msra.mxu0 0.0
          %4509 = vmatpush.msra.mxu0 0.0
          %4510 = vmatpush.msra.mxu0 0.0
          %4511 = vmatpush.msra.mxu0 0.0
          %4512 = vmatpush.msra.mxu0 %v4457
          %4513 = vmatpush.msra.mxu0 %v4455
          %4514 = vmatpush.msra.mxu0 %v4452
          %4515 = vmatpush.msra.mxu0 %v4450
          %4516 = vmatmul.f32.gmra.mxu0 %v4460
          %v4517 = vpop.f32.mrf.mxu0
          %v4518 = vadd.f32 0.0, %v4517
          %4519 = vmatmul.f32.gmra.mxu0 %v4463
          %v4520 = vpop.f32.mrf.mxu0
          %v4521 = vadd.f32 0.0, %v4520
          %4522 = vmatmul.f32.gmra.mxu0 %v4466
          %v4523 = vpop.f32.mrf.mxu0
          %v4524 = vadd.f32 0.0, %v4523
          %4525 = vmatmul.f32.gmra.mxu0 %v4469
          %v4526 = vpop.f32.mrf.mxu0
          %v4527 = vadd.f32 0.0, %v4526
          %4528 = vdwg.mxu0
          %v4529 = vadd.f32 %v4062, %v4489
          %v4530 = vadd.f32 %v4119, %v4518
          %v4531 = vadd.f32 %v4064, %v4492
          %v4532 = vadd.f32 %v4121, %v4521
          %v4533 = vadd.f32 %v4067, %v4495
          %v4534 = vadd.f32 %v4124, %v4524
          %v4535 = vadd.f32 %v4069, %v4498
          %v4536 = vadd.f32 %v4126, %v4527
          %v4537 = vld [vmem:[#allocation12] sm:$0x1]
          %v4538 = vld [vmem:[#allocation13] sm:$0x1]
          %v4539 = vadd.s32 %v378, 32
          %v4540 = vadd.s32 %v378, 40
          %v4541 = vadd.s32 %v378, 48
          %v4542 = vadd.s32 %v378, 56
          %v4543 = vadd.s32 %v378, 64
          %v4544 = vadd.s32 %v378, 72
          %v4545 = vadd.s32 %v378, 80
          %v4546 = vadd.s32 %v378, 88
          %v4547 = vadd.s32 %v378, 96
          %v4548 = vadd.s32 %v378, 104
          %v4549 = vadd.s32 %v378, 112
          %v4550 = vadd.s32 %v378, 120
          %v4551 = vadd.s32 %v378, 128
          %v4552 = vadd.s32 %v378, 136
          %v4553 = vadd.s32 %v378, 144
          %v4554 = vadd.s32 %v378, 152
          %v4555 = vadd.s32 %v378, 160
          %v4556 = vadd.s32 %v378, 168
          %v4557 = vadd.s32 %v378, 176
          %v4558 = vadd.s32 %v378, 184
          %v4559 = vadd.s32 %v378, 192
          %v4560 = vadd.s32 %v378, 200
          %v4561 = vadd.s32 %v378, 208
          %v4562 = vadd.s32 %v378, 216
          %v4563 = vadd.s32 %v378, 224
          %v4564 = vadd.s32 %v378, 232
          %v4565 = vadd.s32 %v378, 240
          %v4566 = vadd.s32 %v378, 248
          %vm4567 = vcmp.lt.s32.totalorder %v4539, 0
          %v4568 = vsub.s32 0, %v4539
          %v4569 = vsel %vm4567, %v4568, %v4539
          %v4570 = vshrl.u32 %v4569, 4
          %v4571 = vand.u32 %v4569, 15
          %v4572 = vsub.s32 0, %v4571
          %v4573 = vsel %vm4567, %v4572, %v4571
          %vm4574 = vcmp.lt.s32.totalorder %v4540, 0
          %v4575 = vsub.s32 0, %v4540
          %v4576 = vsel %vm4574, %v4575, %v4540
          %v4577 = vshrl.u32 %v4576, 4
          %v4578 = vand.u32 %v4576, 15
          %v4579 = vsub.s32 0, %v4578
          %v4580 = vsel %vm4574, %v4579, %v4578
          %vm4581 = vcmp.lt.s32.totalorder %v4541, 0
          %v4582 = vsub.s32 0, %v4541
          %v4583 = vsel %vm4581, %v4582, %v4541
          %v4584 = vshrl.u32 %v4583, 4
          %v4585 = vand.u32 %v4583, 15
          %v4586 = vsub.s32 0, %v4585
          %v4587 = vsel %vm4581, %v4586, %v4585
          %vm4588 = vcmp.lt.s32.totalorder %v4542, 0
          %v4589 = vsub.s32 0, %v4542
          %v4590 = vsel %vm4588, %v4589, %v4542
          %v4591 = vshrl.u32 %v4590, 4
          %v4592 = vand.u32 %v4590, 15
          %v4593 = vsub.s32 0, %v4592
          %v4594 = vsel %vm4588, %v4593, %v4592
          %vm4595 = vcmp.lt.s32.totalorder %v4543, 0
          %v4596 = vsub.s32 0, %v4543
          %v4597 = vsel %vm4595, %v4596, %v4543
          %v4598 = vshrl.u32 %v4597, 4
          %v4599 = vand.u32 %v4597, 15
          %v4600 = vsub.s32 0, %v4599
          %v4601 = vsel %vm4595, %v4600, %v4599
          %vm4602 = vcmp.lt.s32.totalorder %v4544, 0
          %v4603 = vsub.s32 0, %v4544
          %v4604 = vsel %vm4602, %v4603, %v4544
          %v4605 = vshrl.u32 %v4604, 4
          %v4606 = vand.u32 %v4604, 15
          %v4607 = vsub.s32 0, %v4606
          %v4608 = vsel %vm4602, %v4607, %v4606
          %vm4609 = vcmp.lt.s32.totalorder %v4545, 0
          %v4610 = vsub.s32 0, %v4545
          %v4611 = vsel %vm4609, %v4610, %v4545
          %v4612 = vshrl.u32 %v4611, 4
          %v4613 = vand.u32 %v4611, 15
          %v4614 = vsub.s32 0, %v4613
          %v4615 = vsel %vm4609, %v4614, %v4613
          %vm4616 = vcmp.lt.s32.totalorder %v4546, 0
          %v4617 = vsub.s32 0, %v4546
          %v4618 = vsel %vm4616, %v4617, %v4546
          %v4619 = vshrl.u32 %v4618, 4
          %v4620 = vand.u32 %v4618, 15
          %v4621 = vsub.s32 0, %v4620
          %v4622 = vsel %vm4616, %v4621, %v4620
          %vm4623 = vcmp.lt.s32.totalorder %v4547, 0
          %v4624 = vsub.s32 0, %v4547
          %v4625 = vsel %vm4623, %v4624, %v4547
          %v4626 = vshrl.u32 %v4625, 4
          %v4627 = vand.u32 %v4625, 15
          %v4628 = vsub.s32 0, %v4627
          %v4629 = vsel %vm4623, %v4628, %v4627
          %vm4630 = vcmp.lt.s32.totalorder %v4548, 0
          %v4631 = vsub.s32 0, %v4548
          %v4632 = vsel %vm4630, %v4631, %v4548
          %v4633 = vshrl.u32 %v4632, 4
          %v4634 = vand.u32 %v4632, 15
          %v4635 = vsub.s32 0, %v4634
          %v4636 = vsel %vm4630, %v4635, %v4634
          %vm4637 = vcmp.lt.s32.totalorder %v4549, 0
          %v4638 = vsub.s32 0, %v4549
          %v4639 = vsel %vm4637, %v4638, %v4549
          %v4640 = vshrl.u32 %v4639, 4
          %v4641 = vand.u32 %v4639, 15
          %v4642 = vsub.s32 0, %v4641
          %v4643 = vsel %vm4637, %v4642, %v4641
          %vm4644 = vcmp.lt.s32.totalorder %v4550, 0
          %v4645 = vsub.s32 0, %v4550
          %v4646 = vsel %vm4644, %v4645, %v4550
          %v4647 = vshrl.u32 %v4646, 4
          %v4648 = vand.u32 %v4646, 15
          %v4649 = vsub.s32 0, %v4648
          %v4650 = vsel %vm4644, %v4649, %v4648
          %vm4651 = vcmp.lt.s32.totalorder %v4551, 0
          %v4652 = vsub.s32 0, %v4551
          %v4653 = vsel %vm4651, %v4652, %v4551
          %v4654 = vshrl.u32 %v4653, 4
          %v4655 = vand.u32 %v4653, 15
          %v4656 = vsub.s32 0, %v4655
          %v4657 = vsel %vm4651, %v4656, %v4655
          %vm4658 = vcmp.lt.s32.totalorder %v4552, 0
          %v4659 = vsub.s32 0, %v4552
          %v4660 = vsel %vm4658, %v4659, %v4552
          %v4661 = vshrl.u32 %v4660, 4
          %v4662 = vand.u32 %v4660, 15
          %v4663 = vsub.s32 0, %v4662
          %v4664 = vsel %vm4658, %v4663, %v4662
          %vm4665 = vcmp.lt.s32.totalorder %v4553, 0
          %v4666 = vsub.s32 0, %v4553
          %v4667 = vsel %vm4665, %v4666, %v4553
          %v4668 = vshrl.u32 %v4667, 4
          %v4669 = vand.u32 %v4667, 15
          %v4670 = vsub.s32 0, %v4669
          %v4671 = vsel %vm4665, %v4670, %v4669
          %vm4672 = vcmp.lt.s32.totalorder %v4554, 0
          %v4673 = vsub.s32 0, %v4554
          %v4674 = vsel %vm4672, %v4673, %v4554
          %v4675 = vshrl.u32 %v4674, 4
          %v4676 = vand.u32 %v4674, 15
          %v4677 = vsub.s32 0, %v4676
          %v4678 = vsel %vm4672, %v4677, %v4676
          %vm4679 = vcmp.lt.s32.totalorder %v4555, 0
          %v4680 = vsub.s32 0, %v4555
          %v4681 = vsel %vm4679, %v4680, %v4555
          %v4682 = vshrl.u32 %v4681, 4
          %v4683 = vand.u32 %v4681, 15
          %v4684 = vsub.s32 0, %v4683
          %v4685 = vsel %vm4679, %v4684, %v4683
          %vm4686 = vcmp.lt.s32.totalorder %v4556, 0
          %v4687 = vsub.s32 0, %v4556
          %v4688 = vsel %vm4686, %v4687, %v4556
          %v4689 = vshrl.u32 %v4688, 4
          %v4690 = vand.u32 %v4688, 15
          %v4691 = vsub.s32 0, %v4690
          %v4692 = vsel %vm4686, %v4691, %v4690
          %vm4693 = vcmp.lt.s32.totalorder %v4557, 0
          %v4694 = vsub.s32 0, %v4557
          %v4695 = vsel %vm4693, %v4694, %v4557
          %v4696 = vshrl.u32 %v4695, 4
          %v4697 = vand.u32 %v4695, 15
          %v4698 = vsub.s32 0, %v4697
          %v4699 = vsel %vm4693, %v4698, %v4697
          %vm4700 = vcmp.lt.s32.totalorder %v4558, 0
          %v4701 = vsub.s32 0, %v4558
          %v4702 = vsel %vm4700, %v4701, %v4558
          %v4703 = vshrl.u32 %v4702, 4
          %v4704 = vand.u32 %v4702, 15
          %v4705 = vsub.s32 0, %v4704
          %v4706 = vsel %vm4700, %v4705, %v4704
          %vm4707 = vcmp.lt.s32.totalorder %v4559, 0
          %v4708 = vsub.s32 0, %v4559
          %v4709 = vsel %vm4707, %v4708, %v4559
          %v4710 = vshrl.u32 %v4709, 4
          %v4711 = vand.u32 %v4709, 15
          %v4712 = vsub.s32 0, %v4711
          %v4713 = vsel %vm4707, %v4712, %v4711
          %vm4714 = vcmp.lt.s32.totalorder %v4560, 0
          %v4715 = vsub.s32 0, %v4560
          %v4716 = vsel %vm4714, %v4715, %v4560
          %v4717 = vshrl.u32 %v4716, 4
          %v4718 = vand.u32 %v4716, 15
          %v4719 = vsub.s32 0, %v4718
          %v4720 = vsel %vm4714, %v4719, %v4718
          %vm4721 = vcmp.lt.s32.totalorder %v4561, 0
          %v4722 = vsub.s32 0, %v4561
          %v4723 = vsel %vm4721, %v4722, %v4561
          %v4724 = vshrl.u32 %v4723, 4
          %v4725 = vand.u32 %v4723, 15
          %v4726 = vsub.s32 0, %v4725
          %v4727 = vsel %vm4721, %v4726, %v4725
          %vm4728 = vcmp.lt.s32.totalorder %v4562, 0
          %v4729 = vsub.s32 0, %v4562
          %v4730 = vsel %vm4728, %v4729, %v4562
          %v4731 = vshrl.u32 %v4730, 4
          %v4732 = vand.u32 %v4730, 15
          %v4733 = vsub.s32 0, %v4732
          %v4734 = vsel %vm4728, %v4733, %v4732
          %vm4735 = vcmp.lt.s32.totalorder %v4563, 0
          %v4736 = vsub.s32 0, %v4563
          %v4737 = vsel %vm4735, %v4736, %v4563
          %v4738 = vshrl.u32 %v4737, 4
          %v4739 = vand.u32 %v4737, 15
          %v4740 = vsub.s32 0, %v4739
          %v4741 = vsel %vm4735, %v4740, %v4739
          %vm4742 = vcmp.lt.s32.totalorder %v4564, 0
          %v4743 = vsub.s32 0, %v4564
          %v4744 = vsel %vm4742, %v4743, %v4564
          %v4745 = vshrl.u32 %v4744, 4
          %v4746 = vand.u32 %v4744, 15
          %v4747 = vsub.s32 0, %v4746
          %v4748 = vsel %vm4742, %v4747, %v4746
          %vm4749 = vcmp.lt.s32.totalorder %v4565, 0
          %v4750 = vsub.s32 0, %v4565
          %v4751 = vsel %vm4749, %v4750, %v4565
          %v4752 = vshrl.u32 %v4751, 4
          %v4753 = vand.u32 %v4751, 15
          %v4754 = vsub.s32 0, %v4753
          %v4755 = vsel %vm4749, %v4754, %v4753
          %vm4756 = vcmp.lt.s32.totalorder %v4566, 0
          %v4757 = vsub.s32 0, %v4566
          %v4758 = vsel %vm4756, %v4757, %v4566
          %v4759 = vshrl.u32 %v4758, 4
          %v4760 = vand.u32 %v4758, 15
          %v4761 = vsub.s32 0, %v4760
          %v4762 = vsel %vm4756, %v4761, %v4760
          %vm4763 = vcmp.ne.s32.totalorder %v4573, 0
          %vm4764 = vcmp.ne.s32.totalorder %v4580, 0
          %vm4765 = vcmp.ne.s32.totalorder %v4587, 0
          %vm4766 = vcmp.ne.s32.totalorder %v4594, 0
          %vm4767 = vcmp.ne.s32.totalorder %v4601, 0
          %vm4768 = vcmp.ne.s32.totalorder %v4608, 0
          %vm4769 = vcmp.ne.s32.totalorder %v4615, 0
          %vm4770 = vcmp.ne.s32.totalorder %v4622, 0
          %vm4771 = vcmp.ne.s32.totalorder %v4629, 0
          %vm4772 = vcmp.ne.s32.totalorder %v4636, 0
          %vm4773 = vcmp.ne.s32.totalorder %v4643, 0
          %vm4774 = vcmp.ne.s32.totalorder %v4650, 0
          %vm4775 = vcmp.ne.s32.totalorder %v4657, 0
          %vm4776 = vcmp.ne.s32.totalorder %v4664, 0
          %vm4777 = vcmp.ne.s32.totalorder %v4671, 0
          %vm4778 = vcmp.ne.s32.totalorder %v4678, 0
          %vm4779 = vcmp.ne.s32.totalorder %v4685, 0
          %vm4780 = vcmp.ne.s32.totalorder %v4692, 0
          %vm4781 = vcmp.ne.s32.totalorder %v4699, 0
          %vm4782 = vcmp.ne.s32.totalorder %v4706, 0
          %vm4783 = vcmp.ne.s32.totalorder %v4713, 0
          %vm4784 = vcmp.ne.s32.totalorder %v4720, 0
          %vm4785 = vcmp.ne.s32.totalorder %v4727, 0
          %vm4786 = vcmp.ne.s32.totalorder %v4734, 0
          %vm4787 = vcmp.ne.s32.totalorder %v4741, 0
          %vm4788 = vcmp.ne.s32.totalorder %v4748, 0
          %vm4789 = vcmp.ne.s32.totalorder %v4755, 0
          %vm4790 = vcmp.ne.s32.totalorder %v4762, 0
          %vm4791 = vcmp.lt.s32.totalorder %v4573, 0
          %vm4792 = vcmp.lt.s32.totalorder %v4580, 0
          %vm4793 = vcmp.lt.s32.totalorder %v4587, 0
          %vm4794 = vcmp.lt.s32.totalorder %v4594, 0
          %vm4795 = vcmp.lt.s32.totalorder %v4601, 0
          %vm4796 = vcmp.lt.s32.totalorder %v4608, 0
          %vm4797 = vcmp.lt.s32.totalorder %v4615, 0
          %vm4798 = vcmp.lt.s32.totalorder %v4622, 0
          %vm4799 = vcmp.lt.s32.totalorder %v4629, 0
          %vm4800 = vcmp.lt.s32.totalorder %v4636, 0
          %vm4801 = vcmp.lt.s32.totalorder %v4643, 0
          %vm4802 = vcmp.lt.s32.totalorder %v4650, 0
          %vm4803 = vcmp.lt.s32.totalorder %v4657, 0
          %vm4804 = vcmp.lt.s32.totalorder %v4664, 0
          %vm4805 = vcmp.lt.s32.totalorder %v4671, 0
          %vm4806 = vcmp.lt.s32.totalorder %v4678, 0
          %vm4807 = vcmp.lt.s32.totalorder %v4685, 0
          %vm4808 = vcmp.lt.s32.totalorder %v4692, 0
          %vm4809 = vcmp.lt.s32.totalorder %v4699, 0
          %vm4810 = vcmp.lt.s32.totalorder %v4706, 0
          %vm4811 = vcmp.lt.s32.totalorder %v4713, 0
          %vm4812 = vcmp.lt.s32.totalorder %v4720, 0
          %vm4813 = vcmp.lt.s32.totalorder %v4727, 0
          %vm4814 = vcmp.lt.s32.totalorder %v4734, 0
          %vm4815 = vcmp.lt.s32.totalorder %v4741, 0
          %vm4816 = vcmp.lt.s32.totalorder %v4748, 0
          %vm4817 = vcmp.lt.s32.totalorder %v4755, 0
          %vm4818 = vcmp.lt.s32.totalorder %v4762, 0
          %vm4819 = vmand %vm4791, %vm4763
          %vm4820 = vmand %vm4792, %vm4764
          %vm4821 = vmand %vm4793, %vm4765
          %vm4822 = vmand %vm4794, %vm4766
          %vm4823 = vmand %vm4795, %vm4767
          %vm4824 = vmand %vm4796, %vm4768
          %vm4825 = vmand %vm4797, %vm4769
          %vm4826 = vmand %vm4798, %vm4770
          %vm4827 = vmand %vm4799, %vm4771
          %vm4828 = vmand %vm4800, %vm4772
          %vm4829 = vmand %vm4801, %vm4773
          %vm4830 = vmand %vm4802, %vm4774
          %vm4831 = vmand %vm4803, %vm4775
          %vm4832 = vmand %vm4804, %vm4776
          %vm4833 = vmand %vm4805, %vm4777
          %vm4834 = vmand %vm4806, %vm4778
          %vm4835 = vmand %vm4807, %vm4779
          %vm4836 = vmand %vm4808, %vm4780
          %vm4837 = vmand %vm4809, %vm4781
          %vm4838 = vmand %vm4810, %vm4782
          %vm4839 = vmand %vm4811, %vm4783
          %vm4840 = vmand %vm4812, %vm4784
          %vm4841 = vmand %vm4813, %vm4785
          %vm4842 = vmand %vm4814, %vm4786
          %vm4843 = vmand %vm4815, %vm4787
          %vm4844 = vmand %vm4816, %vm4788
          %vm4845 = vmand %vm4817, %vm4789
          %vm4846 = vmand %vm4818, %vm4790
          %v4847 = vadd.s32 %v4573, 16
          %v4848 = vadd.s32 %v4580, 16
          %v4849 = vadd.s32 %v4587, 16
          %v4850 = vadd.s32 %v4594, 16
          %v4851 = vadd.s32 %v4601, 16
          %v4852 = vadd.s32 %v4608, 16
          %v4853 = vadd.s32 %v4615, 16
          %v4854 = vadd.s32 %v4622, 16
          %v4855 = vadd.s32 %v4629, 16
          %v4856 = vadd.s32 %v4636, 16
          %v4857 = vadd.s32 %v4643, 16
          %v4858 = vadd.s32 %v4650, 16
          %v4859 = vadd.s32 %v4657, 16
          %v4860 = vadd.s32 %v4664, 16
          %v4861 = vadd.s32 %v4671, 16
          %v4862 = vadd.s32 %v4678, 16
          %v4863 = vadd.s32 %v4685, 16
          %v4864 = vadd.s32 %v4692, 16
          %v4865 = vadd.s32 %v4699, 16
          %v4866 = vadd.s32 %v4706, 16
          %v4867 = vadd.s32 %v4713, 16
          %v4868 = vadd.s32 %v4720, 16
          %v4869 = vadd.s32 %v4727, 16
          %v4870 = vadd.s32 %v4734, 16
          %v4871 = vadd.s32 %v4741, 16
          %v4872 = vadd.s32 %v4748, 16
          %v4873 = vadd.s32 %v4755, 16
          %v4874 = vadd.s32 %v4762, 16
          %v4875 = vsel %vm4819, %v4847, %v4573
          %v4876 = vsel %vm4820, %v4848, %v4580
          %v4877 = vsel %vm4821, %v4849, %v4587
          %v4878 = vsel %vm4822, %v4850, %v4594
          %v4879 = vsel %vm4823, %v4851, %v4601
          %v4880 = vsel %vm4824, %v4852, %v4608
          %v4881 = vsel %vm4825, %v4853, %v4615
          %v4882 = vsel %vm4826, %v4854, %v4622
          %v4883 = vsel %vm4827, %v4855, %v4629
          %v4884 = vsel %vm4828, %v4856, %v4636
          %v4885 = vsel %vm4829, %v4857, %v4643
          %v4886 = vsel %vm4830, %v4858, %v4650
          %v4887 = vsel %vm4831, %v4859, %v4657
          %v4888 = vsel %vm4832, %v4860, %v4664
          %v4889 = vsel %vm4833, %v4861, %v4671
          %v4890 = vsel %vm4834, %v4862, %v4678
          %v4891 = vsel %vm4835, %v4863, %v4685
          %v4892 = vsel %vm4836, %v4864, %v4692
          %v4893 = vsel %vm4837, %v4865, %v4699
          %v4894 = vsel %vm4838, %v4866, %v4706
          %v4895 = vsel %vm4839, %v4867, %v4713
          %v4896 = vsel %vm4840, %v4868, %v4720
          %v4897 = vsel %vm4841, %v4869, %v4727
          %v4898 = vsel %vm4842, %v4870, %v4734
          %v4899 = vsel %vm4843, %v4871, %v4741
          %v4900 = vsel %vm4844, %v4872, %v4748
          %v4901 = vsel %vm4845, %v4873, %v4755
          %v4902 = vsel %vm4846, %v4874, %v4762
          %vm4903 = vcmp.eq.s32.totalorder %v428, %v383
          %vm4904 = vcmp.eq.s32.totalorder %v429, %v383
          %vm4905 = vcmp.eq.s32.totalorder %v430, %v383
          %vm4906 = vcmp.eq.s32.totalorder %v431, %v383
          %vm4907 = vcmp.eq.s32.totalorder %v4875, %v383
          %vm4908 = vcmp.eq.s32.totalorder %v4876, %v383
          %vm4909 = vcmp.eq.s32.totalorder %v4877, %v383
          %vm4910 = vcmp.eq.s32.totalorder %v4878, %v383
          %vm4911 = vcmp.eq.s32.totalorder %v4879, %v383
          %vm4912 = vcmp.eq.s32.totalorder %v4880, %v383
          %vm4913 = vcmp.eq.s32.totalorder %v4881, %v383
          %vm4914 = vcmp.eq.s32.totalorder %v4882, %v383
          %vm4915 = vcmp.eq.s32.totalorder %v4883, %v383
          %vm4916 = vcmp.eq.s32.totalorder %v4884, %v383
          %vm4917 = vcmp.eq.s32.totalorder %v4885, %v383
          %vm4918 = vcmp.eq.s32.totalorder %v4886, %v383
          %vm4919 = vcmp.eq.s32.totalorder %v4887, %v383
          %vm4920 = vcmp.eq.s32.totalorder %v4888, %v383
          %vm4921 = vcmp.eq.s32.totalorder %v4889, %v383
          %vm4922 = vcmp.eq.s32.totalorder %v4890, %v383
          %vm4923 = vcmp.eq.s32.totalorder %v4891, %v383
          %vm4924 = vcmp.eq.s32.totalorder %v4892, %v383
          %vm4925 = vcmp.eq.s32.totalorder %v4893, %v383
          %vm4926 = vcmp.eq.s32.totalorder %v4894, %v383
          %vm4927 = vcmp.eq.s32.totalorder %v4895, %v383
          %vm4928 = vcmp.eq.s32.totalorder %v4896, %v383
          %vm4929 = vcmp.eq.s32.totalorder %v4897, %v383
          %vm4930 = vcmp.eq.s32.totalorder %v4898, %v383
          %vm4931 = vcmp.eq.s32.totalorder %v4899, %v383
          %vm4932 = vcmp.eq.s32.totalorder %v4900, %v383
          %vm4933 = vcmp.eq.s32.totalorder %v4901, %v383
          %vm4934 = vcmp.eq.s32.totalorder %v4902, %v383
          %v4935 = vsel %vm4903, 1, 0
          %v4936 = vsel %vm4904, 1, 0
          %v4937 = vsel %vm4905, 1, 0
          %v4938 = vsel %vm4906, 1, 0
          %v4939 = vsel %vm4907, 1, 0
          %v4940 = vsel %vm4908, 1, 0
          %v4941 = vsel %vm4909, 1, 0
          %v4942 = vsel %vm4910, 1, 0
          %v4943 = vsel %vm4911, 1, 0
          %v4944 = vsel %vm4912, 1, 0
          %v4945 = vsel %vm4913, 1, 0
          %v4946 = vsel %vm4914, 1, 0
          %v4947 = vsel %vm4915, 1, 0
          %v4948 = vsel %vm4916, 1, 0
          %v4949 = vsel %vm4917, 1, 0
          %v4950 = vsel %vm4918, 1, 0
          %v4951 = vsel %vm4919, 1, 0
          %v4952 = vsel %vm4920, 1, 0
          %v4953 = vsel %vm4921, 1, 0
          %v4954 = vsel %vm4922, 1, 0
          %v4955 = vsel %vm4923, 1, 0
          %v4956 = vsel %vm4924, 1, 0
          %v4957 = vsel %vm4925, 1, 0
          %v4958 = vsel %vm4926, 1, 0
          %v4959 = vsel %vm4927, 1, 0
          %v4960 = vsel %vm4928, 1, 0
          %v4961 = vsel %vm4929, 1, 0
          %v4962 = vsel %vm4930, 1, 0
          %v4963 = vsel %vm4931, 1, 0
          %v4964 = vsel %vm4932, 1, 0
          %v4965 = vsel %vm4933, 1, 0
          %v4966 = vsel %vm4934, 1, 0
          %v4967 = vcvt.s32.f32 %v4935
          %v4968 = vcvt.s32.f32 %v4936
          %v4969 = vcvt.s32.f32 %v4937
          %v4970 = vcvt.s32.f32 %v4938
          %v4971 = vcvt.s32.f32 %v4939
          %v4972 = vcvt.s32.f32 %v4940
          %v4973 = vcvt.s32.f32 %v4941
          %v4974 = vcvt.s32.f32 %v4942
          %v4975 = vcvt.s32.f32 %v4943
          %v4976 = vcvt.s32.f32 %v4944
          %v4977 = vcvt.s32.f32 %v4945
          %v4978 = vcvt.s32.f32 %v4946
          %v4979 = vcvt.s32.f32 %v4947
          %v4980 = vcvt.s32.f32 %v4948
          %v4981 = vcvt.s32.f32 %v4949
          %v4982 = vcvt.s32.f32 %v4950
          %v4983 = vcvt.s32.f32 %v4951
          %v4984 = vcvt.s32.f32 %v4952
          %v4985 = vcvt.s32.f32 %v4953
          %v4986 = vcvt.s32.f32 %v4954
          %v4987 = vcvt.s32.f32 %v4955
          %v4988 = vcvt.s32.f32 %v4956
          %v4989 = vcvt.s32.f32 %v4957
          %v4990 = vcvt.s32.f32 %v4958
          %v4991 = vcvt.s32.f32 %v4959
          %v4992 = vcvt.s32.f32 %v4960
          %v4993 = vcvt.s32.f32 %v4961
          %v4994 = vcvt.s32.f32 %v4962
          %v4995 = vcvt.s32.f32 %v4963
          %v4996 = vcvt.s32.f32 %v4964
          %v4997 = vcvt.s32.f32 %v4965
          %v4998 = vcvt.s32.f32 %v4966
          %v5000 = vsel %vm3643, 1.0, 0
          %5002 = vmatpush.msra.mxu0 0.0
          %5003 = vmatpush.msra.mxu0 0.0
          %5004 = vmatpush.msra.mxu0 0.0
          %5005 = vmatpush.msra.mxu0 0.0
          %5006 = vmatpush.msra.mxu0 0.0
          %5007 = vmatpush.msra.mxu0 0.0
          %5008 = vmatpush.msra.mxu0 0.0
          %5009 = vmatpush.msra.mxu0 0.0
          %5010 = vmatpush.msra.mxu0 0.0
          %5011 = vmatpush.msra.mxu0 0.0
          %5012 = vmatpush.msra.mxu0 0.0
          %5013 = vmatpush.msra.mxu0 0.0
          %5014 = vmatpush.msra.mxu0 %v4535
          %5015 = vmatpush.msra.mxu0 %v4533
          %5016 = vmatpush.msra.mxu0 %v4531
          %5017 = vmatpush.msra.mxu0 %v4529
          %5018 = vmatmul.f32.gmra.mxu0 %v5000
          %v5019 = vpop.f32.mrf.mxu0
          %v5020 = vadd.f32 0.0, %v5019
          %5021 = vdwg.mxu0
          %5022 = vmatpush.msra.mxu0 0.0
          %5023 = vmatpush.msra.mxu0 0.0
          %5024 = vmatpush.msra.mxu0 0.0
          %5025 = vmatpush.msra.mxu0 0.0
          %5026 = vmatpush.msra.mxu0 0.0
          %5027 = vmatpush.msra.mxu0 0.0
          %5028 = vmatpush.msra.mxu0 0.0
          %5029 = vmatpush.msra.mxu0 0.0
          %5030 = vmatpush.msra.mxu0 0.0
          %5031 = vmatpush.msra.mxu0 0.0
          %5032 = vmatpush.msra.mxu0 0.0
          %5033 = vmatpush.msra.mxu0 0.0
          %5034 = vmatpush.msra.mxu0 %v4536
          %5035 = vmatpush.msra.mxu0 %v4534
          %5036 = vmatpush.msra.mxu0 %v4532
          %5037 = vmatpush.msra.mxu0 %v4530
          %5038 = vmatmul.f32.gmra.mxu0 %v5000
          %v5039 = vpop.f32.mrf.mxu0
          %v5040 = vadd.f32 0.0, %v5039
          %5041 = vdwg.mxu0
          %v5042 = vmul.f32 %v4529, %v4529
          %v5043 = vmul.f32 %v4530, %v4530
          %v5044 = vmul.f32 %v4531, %v4531
          %v5045 = vmul.f32 %v4532, %v4532
          %v5046 = vmul.f32 %v4533, %v4533
          %v5047 = vmul.f32 %v4534, %v4534
          %v5048 = vmul.f32 %v4535, %v4535
          %v5049 = vmul.f32 %v4536, %v4536
          %5050 = vmatpush.msra.mxu0 0.0
          %5051 = vmatpush.msra.mxu0 0.0
          %5052 = vmatpush.msra.mxu0 0.0
          %5053 = vmatpush.msra.mxu0 0.0
          %5054 = vmatpush.msra.mxu0 0.0
          %5055 = vmatpush.msra.mxu0 0.0
          %5056 = vmatpush.msra.mxu0 0.0
          %5057 = vmatpush.msra.mxu0 0.0
          %5058 = vmatpush.msra.mxu0 0.0
          %5059 = vmatpush.msra.mxu0 0.0
          %5060 = vmatpush.msra.mxu0 0.0
          %5061 = vmatpush.msra.mxu0 0.0
          %5062 = vmatpush.msra.mxu0 %v5048
          %5063 = vmatpush.msra.mxu0 %v5046
          %5064 = vmatpush.msra.mxu0 %v5044
          %5065 = vmatpush.msra.mxu0 %v5042
          %5066 = vmatmul.f32.gmra.mxu0 %v5000
          %v5067 = vpop.f32.mrf.mxu0
          %v5068 = vadd.f32 0.0, %v5067
          %5069 = vdwg.mxu0
          %5070 = vmatpush.msra.mxu0 0.0
          %5071 = vmatpush.msra.mxu0 0.0
          %5072 = vmatpush.msra.mxu0 0.0
          %5073 = vmatpush.msra.mxu0 0.0
          %5074 = vmatpush.msra.mxu0 0.0
          %5075 = vmatpush.msra.mxu0 0.0
          %5076 = vmatpush.msra.mxu0 0.0
          %5077 = vmatpush.msra.mxu0 0.0
          %5078 = vmatpush.msra.mxu0 0.0
          %5079 = vmatpush.msra.mxu0 0.0
          %5080 = vmatpush.msra.mxu0 0.0
          %5081 = vmatpush.msra.mxu0 0.0
          %5082 = vmatpush.msra.mxu0 %v5049
          %5083 = vmatpush.msra.mxu0 %v5047
          %5084 = vmatpush.msra.mxu0 %v5045
          %5085 = vmatpush.msra.mxu0 %v5043
          %5086 = vmatmul.f32.gmra.mxu0 %v5000
          %v5087 = vpop.f32.mrf.mxu0
          %v5088 = vadd.f32 0.0, %v5087
          %5089 = vdwg.mxu0
          %5090 = vmatpush.msra.mxu0 %v4982
          %5091 = vmatpush.msra.mxu0 %v4981
          %5092 = vmatpush.msra.mxu0 %v4980
          %5093 = vmatpush.msra.mxu0 %v4979
          %5094 = vmatpush.msra.mxu0 %v4978
          %5095 = vmatpush.msra.mxu0 %v4977
          %5096 = vmatpush.msra.mxu0 %v4976
          %5097 = vmatpush.msra.mxu0 %v4975
          %5098 = vmatpush.msra.mxu0 %v4974
          %5099 = vmatpush.msra.mxu0 %v4973
          %5100 = vmatpush.msra.mxu0 %v4972
          %5101 = vmatpush.msra.mxu0 %v4971
          %5102 = vmatpush.msra.mxu0 %v4970
          %5103 = vmatpush.msra.mxu0 %v4969
          %5104 = vmatpush.msra.mxu0 %v4968
          %5105 = vmatpush.msra.mxu0 %v4967
          %5106 = vmatmul.f32.gmra.mxu0 %v5020
          %v5107 = vpop.f32.mrf.mxu0
          %v5108 = vadd.f32 0.0, %v5107
          %5109 = vdwg.mxu0
          %5110 = vmatpush.msra.mxu0 %v4998
          %5111 = vmatpush.msra.mxu0 %v4997
          %5112 = vmatpush.msra.mxu0 %v4996
          %5113 = vmatpush.msra.mxu0 %v4995
          %5114 = vmatpush.msra.mxu0 %v4994
          %5115 = vmatpush.msra.mxu0 %v4993
          %5116 = vmatpush.msra.mxu0 %v4992
          %5117 = vmatpush.msra.mxu0 %v4991
          %5118 = vmatpush.msra.mxu0 %v4990
          %5119 = vmatpush.msra.mxu0 %v4989
          %5120 = vmatpush.msra.mxu0 %v4988
          %5121 = vmatpush.msra.mxu0 %v4987
          %5122 = vmatpush.msra.mxu0 %v4986
          %5123 = vmatpush.msra.mxu0 %v4985
          %5124 = vmatpush.msra.mxu0 %v4984
          %5125 = vmatpush.msra.mxu0 %v4983
          %5126 = vmatmul.f32.gmra.mxu0 %v5040
          %v5127 = vpop.f32.mrf.mxu0
          %v5128 = vadd.f32 %v5108, %v5127
          %5129 = vdwg.mxu0
          %5130 = vmatpush.msra.mxu0 %v4982
          %5131 = vmatpush.msra.mxu0 %v4981
          %5132 = vmatpush.msra.mxu0 %v4980
          %5133 = vmatpush.msra.mxu0 %v4979
          %5134 = vmatpush.msra.mxu0 %v4978
          %5135 = vmatpush.msra.mxu0 %v4977
          %5136 = vmatpush.msra.mxu0 %v4976
          %5137 = vmatpush.msra.mxu0 %v4975
          %5138 = vmatpush.msra.mxu0 %v4974
          %5139 = vmatpush.msra.mxu0 %v4973
          %5140 = vmatpush.msra.mxu0 %v4972
          %5141 = vmatpush.msra.mxu0 %v4971
          %5142 = vmatpush.msra.mxu0 %v4970
          %5143 = vmatpush.msra.mxu0 %v4969
          %5144 = vmatpush.msra.mxu0 %v4968
          %5145 = vmatpush.msra.mxu0 %v4967
          %5146 = vmatmul.f32.gmra.mxu0 %v5068
          %v5147 = vpop.f32.mrf.mxu0
          %v5148 = vadd.f32 0.0, %v5147
          %5149 = vdwg.mxu0
          %5150 = vmatpush.msra.mxu0 %v4998
          %5151 = vmatpush.msra.mxu0 %v4997
          %5152 = vmatpush.msra.mxu0 %v4996
          %5153 = vmatpush.msra.mxu0 %v4995
          %5154 = vmatpush.msra.mxu0 %v4994
          %5155 = vmatpush.msra.mxu0 %v4993
          %5156 = vmatpush.msra.mxu0 %v4992
          %5157 = vmatpush.msra.mxu0 %v4991
          %5158 = vmatpush.msra.mxu0 %v4990
          %5159 = vmatpush.msra.mxu0 %v4989
          %5160 = vmatpush.msra.mxu0 %v4988
          %5161 = vmatpush.msra.mxu0 %v4987
          %5162 = vmatpush.msra.mxu0 %v4986
          %5163 = vmatpush.msra.mxu0 %v4985
          %5164 = vmatpush.msra.mxu0 %v4984
          %5165 = vmatpush.msra.mxu0 %v4983
          %5166 = vmatmul.f32.gmra.mxu0 %v5088
          %v5167 = vpop.f32.mrf.mxu0
          %v5168 = vadd.f32 %v5148, %v5167
          %5169 = vdwg.mxu0
          %v5170 = vrcp.pop 512.0
          %v5171 = vmul.f32 512.0, %v5170
          %v5172 = vsub.f32 1.0, %v5171
          %v5173 = vmul.f32 %v5170, %v5172
          %v5174 = vadd.f32 %v5170, %v5173
          %vm5175 = vweird.f32 %v5170
          %v5176 = vsel %vm5175, %v5170, %v5174
          %v5177 = vmul.f32 %v5128, %v5176
          %v5178 = vmul.f32 %v5168, %v5176
          %v5179 = vmul.f32 %v5177, %v5177
          %v5180 = vsub.f32 %v5178, %v5179
          %v5181 = vadd.f32 %v5180, 1e-05
          %v5182 = vrsqrt.pop %v5181
          %v5183 = vmul.f32 %v5182, %v5181
          %v5184 = vmul.f32 %v5183, %v5182
          %v5185 = vmul.f32 0.5, %v5184
          %v5186 = vsub.f32 1.5, %v5185
          %v5187 = vmul.f32 %v5182, %v5186
          %vm5188 = vweird.f32 %v5181
          %vm5189 = vweird.f32 %v5182
          %vm5190 = vmor %vm5188, %vm5189
          %v5191 = vsel %vm5190, %v5182, %v5187
          %v5192 = vmul.f32 %v4537, %v5191
          %v5193 = vmul.f32 %v5177, %v5192
          %v5194 = vsub.f32 %v4538, %v5193
          %v5195 = vadd.s32 %v383, 128
          %vm5196 = vcmp.lt.s32.totalorder %v383, 0
          %v5197 = vsub.s32 0, %v383
          %v5198 = vsel %vm5196, %v5197, %v383
          %v5199 = vshrl.u32 %v5198, 4
          %v5200 = vand.u32 %v5198, 15
          %v5201 = vsub.s32 0, %v5200
          %v5202 = vsel %vm5196, %v5201, %v5200
          %vm5203 = vcmp.lt.s32.totalorder %v5195, 0
          %v5204 = vsub.s32 0, %v5195
          %v5205 = vsel %vm5203, %v5204, %v5195
          %v5206 = vshrl.u32 %v5205, 4
          %v5207 = vand.u32 %v5205, 15
          %v5208 = vsub.s32 0, %v5207
          %v5209 = vsel %vm5203, %v5208, %v5207
          %vm5210 = vcmp.ne.s32.totalorder %v5202, 0
          %vm5211 = vcmp.ne.s32.totalorder %v5209, 0
          %vm5212 = vcmp.lt.s32.totalorder %v5202, 0
          %vm5213 = vcmp.lt.s32.totalorder %v5209, 0
          %vm5214 = vmand %vm5212, %vm5210
          %vm5215 = vmand %vm5213, %vm5211
          %v5216 = vadd.s32 %v5202, 16
          %v5217 = vadd.s32 %v5209, 16
          %v5218 = vsel %vm5214, %v5216, %v5202
          %v5219 = vsel %vm5215, %v5217, %v5209
          %vm5220 = vcmp.eq.s32.totalorder %v5218, %v378
          %vm5221 = vcmp.eq.s32.totalorder %v5219, %v378
          %vm5222 = vcmp.eq.s32.totalorder %v5218, %v379
          %vm5223 = vcmp.eq.s32.totalorder %v5219, %v379
          %vm5224 = vcmp.ge.s32.totalorder %v383, 0
          %vm5225 = vcmp.ge.s32.totalorder %v5195, 0
          %vm5226 = vmand %vm5220, %vm5224
          %vm5227 = vmand %vm5221, %vm5225
          %vm5228 = vmand %vm5222, %vm5224
          %vm5229 = vmand %vm5223, %vm5225
          %vm5230 = vcmp.lt.s32.totalorder %v383, 256
          %vm5231 = vcmp.lt.s32.totalorder %v5195, 256
          %vm5232 = vmand %vm5226, %vm5230
          %vm5233 = vmand %vm5227, %vm5231
          %vm5234 = vmand %vm5228, %vm5230
          %vm5235 = vmand %vm5229, %vm5231
          %v5236 = vsel %vm5232, 1, 0
          %v5237 = vsel %vm5233, 1, 0
          %v5238 = vsel %vm5234, 1, 0
          %v5239 = vsel %vm5235, 1, 0
          %v5240 = vcvt.s32.f32 %v5236
          %v5241 = vcvt.s32.f32 %v5237
          %v5242 = vcvt.s32.f32 %v5238
          %v5243 = vcvt.s32.f32 %v5239
          %v5245 = vperm.slane %v5194, 0
          %vm5247 = vcmask 1040384
          %v5248 = vsel %vm5247, %v5192, %v5245
          %vm5249 = vcmask 130048
          %v5251 = vsel %vm5249, %v5248, 0
          %5253 = vmatpush.msra.mxu0 0.0
          %5254 = vmatpush.msra.mxu0 0.0
          %5255 = vmatpush.msra.mxu0 0.0
          %5256 = vmatpush.msra.mxu0 0.0
          %5257 = vmatpush.msra.mxu0 0.0
          %5258 = vmatpush.msra.mxu0 0.0
          %5259 = vmatpush.msra.mxu0 0.0
          %5260 = vmatpush.msra.mxu0 0.0
          %5261 = vmatpush.msra.mxu0 0.0
          %5262 = vmatpush.msra.mxu0 0.0
          %5263 = vmatpush.msra.mxu0 0.0
          %5264 = vmatpush.msra.mxu0 0.0
          %5265 = vmatpush.msra.mxu0 0.0
          %5266 = vmatpush.msra.mxu0 0.0
          %5267 = vmatpush.msra.mxu0 %v5242
          %5268 = vmatpush.msra.mxu0 %v5240
          %5269 = vmatmul.f32.gmra.mxu0 %v5251
          %v5270 = vpop.f32.mrf.mxu0
          %v5271 = vadd.f32 0.0, %v5270
          %5272 = vdwg.mxu0
          %5273 = vmatpush.msra.mxu0 0.0
          %5274 = vmatpush.msra.mxu0 0.0
          %5275 = vmatpush.msra.mxu0 0.0
          %5276 = vmatpush.msra.mxu0 0.0
          %5277 = vmatpush.msra.mxu0 0.0
          %5278 = vmatpush.msra.mxu0 0.0
          %5279 = vmatpush.msra.mxu0 0.0
          %5280 = vmatpush.msra.mxu0 0.0
          %5281 = vmatpush.msra.mxu0 0.0
          %5282 = vmatpush.msra.mxu0 0.0
          %5283 = vmatpush.msra.mxu0 0.0
          %5284 = vmatpush.msra.mxu0 0.0
          %5285 = vmatpush.msra.mxu0 0.0
          %5286 = vmatpush.msra.mxu0 0.0
          %5287 = vmatpush.msra.mxu0 %v5243
          %5288 = vmatpush.msra.mxu0 %v5241
          %5289 = vmatmul.f32.gmra.mxu0 %v5251
          %v5290 = vpop.f32.mrf.mxu0
          %v5291 = vadd.f32 0.0, %v5290
          %5292 = vdwg.mxu0
          %v5293 = vperm.slane %v5271, 0
          %v5294 = vperm.slane %v5291, 0
          %v5295 = vmul.f32 %v4529, %v5293
          %v5296 = vmul.f32 %v4530, %v5294
          %v5297 = vmul.f32 %v4531, %v5293
          %v5298 = vmul.f32 %v4532, %v5294
          %v5299 = vmul.f32 %v4533, %v5293
          %v5300 = vmul.f32 %v4534, %v5294
          %v5301 = vmul.f32 %v4535, %v5293
          %v5302 = vmul.f32 %v4536, %v5294
          %v5303 = vperm.slane %v5271, 1
          %v5304 = vperm.slane %v5291, 1
          %v5305 = vadd.f32 %v5295, %v5303
          %v5306 = vadd.f32 %v5296, %v5304
          %v5307 = vadd.f32 %v5297, %v5303
          %v5308 = vadd.f32 %v5298, %v5304
          %v5309 = vadd.f32 %v5299, %v5303
          %v5310 = vadd.f32 %v5300, %v5304
          %v5311 = vadd.f32 %v5301, %v5303
          %v5312 = vadd.f32 %v5302, %v5304
          %v5313 = vld [vmem:[#allocation6] sm:$0xff]
          %v5314 = vld [vmem:[#allocation6 + $0x8] sm:$0xff]
          %v5315 = vld [vmem:[#allocation6 + $0x10] sm:$0xff]
          %v5316 = vld [vmem:[#allocation6 + $0x18] sm:$0xff]
          %v5317 = vld [vmem:[#allocation6 + $0x20] sm:$0xff]
          %v5318 = vld [vmem:[#allocation6 + $0x28] sm:$0xff]
          %v5319 = vld [vmem:[#allocation6 + $0x30] sm:$0xff]
          %v5320 = vld [vmem:[#allocation6 + $0x38] sm:$0xff]
          %v5321 = vadd.f32 %v5305, %v5313
          %v5322 = vadd.f32 %v5306, %v5314
          %v5323 = vadd.f32 %v5307, %v5315
          %v5324 = vadd.f32 %v5308, %v5316
          %v5325 = vadd.f32 %v5309, %v5317
          %v5326 = vadd.f32 %v5310, %v5318
          %v5327 = vadd.f32 %v5311, %v5319
          %v5328 = vadd.f32 %v5312, %v5320
          %v5329 = vmax.f32 %v5321, 0.0
          %v5330 = vmax.f32 %v5322, 0.0
          %v5331 = vmax.f32 %v5323, 0.0
          %v5332 = vmax.f32 %v5324, 0.0
          %v5333 = vmax.f32 %v5325, 0.0
          %v5334 = vmax.f32 %v5326, 0.0
          %v5335 = vmax.f32 %v5327, 0.0
          %v5336 = vmax.f32 %v5328, 0.0
          %5337 = vst [vmem:[#allocation15] sm:$0xff] %v5329
          %5338 = vst [vmem:[#allocation15 + $0x8] sm:$0xff] %v5330
          %5339 = vst [vmem:[#allocation15 + $0x10] sm:$0xff] %v5331
          %5340 = vst [vmem:[#allocation15 + $0x18] sm:$0xff] %v5332
          %5341 = vst [vmem:[#allocation15 + $0x20] sm:$0xff] %v5333
          %5342 = vst [vmem:[#allocation15 + $0x28] sm:$0xff] %v5334
          %5343 = vst [vmem:[#allocation15 + $0x30] sm:$0xff] %v5335
          %5344 = vst [vmem:[#allocation15 + $0x38] sm:$0xff] %v5336
        $region84: #{tpu_custom_call.1} parent=47 // pred_fallthru
          _
        // Predicated region
        $region85: #{tpu_custom_call.1} parent=47 // pred_check
          %p5345 = pneg %p188
        $region86: #{tpu_custom_call.1} parent=47 // pred_check_branch
          %5347 = sbr.rel (%p5345) target = $region88
        $region87: #{tpu_custom_call.1} parent=47 // pred_region
          %5349 = vsyncadd [#allocation5], 0
          %s5350 = sshll.u32 [#allocation15], 4
          %s5351 = int_to_ptr.vmem [resolvable:$true] %s5350
          %s5352 = sshll.u32 %s7, 4
          %s5353 = int_to_ptr.hbm [resolvable:$true] %s5352
          %5358 = dma.vmem_to_hbm [thread:$0]  %s5351, 1024, %s5353, [#allocation5], 256, 256, 16
        $region88: #{tpu_custom_call.1} parent=47 // pred_fallthru
          _
        // Predicated region
        $region89: #{tpu_custom_call.1} parent=47 // pred_check
          %p5359 = pneg %p188
        $region90: #{tpu_custom_call.1} parent=47 // pred_check_branch
          %5361 = sbr.rel (%p5359) target = $region92
        $region91: #{tpu_custom_call.1} parent=47 // pred_region
          %5363 = dma.done [#allocation5], 1024
        $region92: #{tpu_custom_call.1} parent=47 // pred_fallthru
          _
      $region48: #{tpu_custom_call.1} parent=5 // pred_fallthru
        _
      %p5364 = scmp.le.s32.totalorder 2, %s18
      // Predicated region
      $region93: #{tpu_custom_call.1} parent=5 // pred_check
        %p5365 = pneg %p5364
      $region94: #{tpu_custom_call.1} parent=5 // pred_check_branch
        %5367 = sbr.rel (%p5365) target = $region96
      $region95: #{tpu_custom_call.1} parent=5 // pred_region
        %s5368 = ssub.s32 %s18, 2
      $region96: #{tpu_custom_call.1} parent=5 // pred_fallthru
        _
    $region6: #{tpu_custom_call.1} parent=1 // loop_footer
      %s22 = sadd.s32 1, %s18
    $region7: #{tpu_custom_call.1} parent=1 // loop_footer_branch
      %17 = sbr.rel target = $region3
    $region8: #{tpu_custom_call.1} parent=1 // loop_exit
      _
    %5369 = vsyncpa [#allocation4], 1
    %s5370 = scalar_lea.sflag [#allocation4], 1
    %5371 = vsyncpa %s5370, 1
    %5372 = vsyncpa [#allocation7], 1
    %5373 = vsyncpa [#allocation11], 1
    %5374 = vsyncpa [#allocation14], 1
    %5375 = vsyncpa [#allocation5], 1
    %s5376 = scalar_lea.sflag [#allocation5], 1
    %5377 = vsyncpa %s5376, 1

</llo_original>
